<compile_context>
chip_gen: v7x
topology: tpu7x:2x2x1
jax: 0.10.0
libtpu: 0.0.40
codegen_flags: <defaults>
</compile_context>

<pallas_src>
import functools

import jax
import jax.numpy as jnp
from jax import lax
from jax.experimental import pallas as pl
from jax.experimental.pallas import tpu as pltpu


# ----------------------------------------------------------------------------------
# Conv1d + BatchNorm1d (running stats, folded) + ReLU
# ----------------------------------------------------------------------------------
def _conv_bn_relu_kernel(x_ref, w_ref, scale_ref, shift_ref, out_ref, *, ksize: int):
    # x_ref:   (1, T + K - 1, C_in)   one zero-padded batch element (channels on lanes)
    # w_ref:   (K, C_in, C_out)
    # scale/shift: (1, C_out)         conv bias + BatchNorm folded: y = conv*scale + shift
    # out_ref: (1, T, C_out)
    T = out_ref.shape[1]
    acc = jnp.dot(x_ref[0, 0:T, :], w_ref[0], preferred_element_type=jnp.float32)
    for k in range(1, ksize):
        acc = acc + jnp.dot(x_ref[0, k:k + T, :], w_ref[k],
                            preferred_element_type=jnp.float32)
    y = acc * scale_ref[...] + shift_ref[...]
    out_ref[0] = jnp.maximum(y, 0.0).astype(out_ref.dtype)


def conv_bn_relu(x_btc, w_kio, scale, shift):
    B, T, Cin = x_btc.shape
    K, _, Cout = w_kio.shape
    pad = (K - 1) // 2
    x_pad = jnp.pad(x_btc, ((0, 0), (pad, pad), (0, 0)))
    return pl.pallas_call(
        functools.partial(_conv_bn_relu_kernel, ksize=K),
        out_shape=jax.ShapeDtypeStruct((B, T, Cout), x_btc.dtype),
        grid=(B,),
        in_specs=[
            pl.BlockSpec((1, T + K - 1, Cin), lambda b: (b, 0, 0)),
            pl.BlockSpec((K, Cin, Cout), lambda b: (0, 0, 0)),       # resident weights
            pl.BlockSpec((1, Cout), lambda b: (0, 0)),
            pl.BlockSpec((1, Cout), lambda b: (0, 0)),
        ],
        out_specs=pl.BlockSpec((1, T, Cout), lambda b: (b, 0, 0)),
        compiler_params=pltpu.CompilerParams(dimension_semantics=("parallel",)),
    )(x_pad, w_kio, scale.reshape(1, Cout), shift.reshape(1, Cout))


# ----------------------------------------------------------------------------------
# Bidirectional LSTM with per-sequence lengths (packed semantics)
# ----------------------------------------------------------------------------------
def _bilstm_kernel(xf_ref, xb_ref, len_ref,
                   wih_f_ref, whh_f_ref, b_f_ref,
                   wih_b_ref, whh_b_ref, b_b_ref,
                   out_f_ref, out_b_ref,
                   h_f, c_f, h_b, c_b, *, hidden: int):
    t = pl.program_id(0)
    n_t = pl.num_programs(0)
    H = hidden

    @pl.when(t == 0)
    def _():
        h_f[...] = jnp.zeros_like(h_f)
        c_f[...] = jnp.zeros_like(c_f)
        h_b[...] = jnp.zeros_like(h_b)
        c_b[...] = jnp.zeros_like(c_b)

    lengths = len_ref[...]                                # (B, 1) int32

    def cell(x, h, c, wih, whh, b):
        gates = (jnp.dot(x, wih, preferred_element_type=jnp.float32)
                 + jnp.dot(h, whh, preferred_element_type=jnp.float32) + b)
        i = jax.nn.sigmoid(gates[:, 0 * H:1 * H])
        f = jax.nn.sigmoid(gates[:, 1 * H:2 * H])
        g = jnp.tanh(gates[:, 2 * H:3 * H])
        o = jax.nn.sigmoid(gates[:, 3 * H:4 * H])
        c_new = f * c + i * g
        h_new = o * jnp.tanh(c_new)
        return h_new, c_new

    # ---- forward direction: consumes time step t -------------------------------
    hf_new, cf_new = cell(xf_ref[0], h_f[...], c_f[...],
                          wih_f_ref[...], whh_f_ref[...], b_f_ref[...])
    h_f[...] = hf_new
    c_f[...] = cf_new
    mask_f = (t < lengths).astype(jnp.float32)            # (B, 1), broadcast over H
    out_f_ref[0] = hf_new * mask_f                        # pad_packed: 0 past length

    # ---- backward direction: consumes time step T-1-t --------------------------
    tb = n_t - 1 - t
    hb_cand, cb_cand = cell(xb_ref[0], h_b[...], c_b[...],
                            wih_b_ref[...], whh_b_ref[...], b_b_ref[...])
    mask_b = (tb < lengths).astype(jnp.float32)           # packed: state starts at len-1
    hb_new = hb_cand * mask_b + h_b[...] * (1.0 - mask_b)
    cb_new = cb_cand * mask_b + c_b[...] * (1.0 - mask_b)
    h_b[...] = hb_new
    c_b[...] = cb_new
    out_b_ref[0] = hb_new * mask_b


def bilstm(x_btc, lengths, wih_f, whh_f, b_f, wih_b, whh_b, b_b):
    B, T, C = x_btc.shape
    H = whh_f.shape[0]
    x_tm = jnp.transpose(x_btc, (1, 0, 2))                # (T, B, C) time-major
    len2 = lengths.astype(jnp.int32).reshape(B, 1)

    out_f, out_b = pl.pallas_call(
        functools.partial(_bilstm_kernel, hidden=H),
        out_shape=(jax.ShapeDtypeStruct((T, B, H), x_btc.dtype),
                   jax.ShapeDtypeStruct((T, B, H), x_btc.dtype)),
        grid=(T,),
        in_specs=[
            pl.BlockSpec((1, B, C), lambda t: (t, 0, 0)),            # x, forward order
            pl.BlockSpec((1, B, C), lambda t: (T - 1 - t, 0, 0)),    # x, reverse order
            pl.BlockSpec((B, 1), lambda t: (0, 0)),                  # lengths (resident)
            pl.BlockSpec((C, 4 * H), lambda t: (0, 0)),              # weights (resident)
            pl.BlockSpec((H, 4 * H), lambda t: (0, 0)),
            pl.BlockSpec((1, 4 * H), lambda t: (0, 0)),
            pl.BlockSpec((C, 4 * H), lambda t: (0, 0)),
            pl.BlockSpec((H, 4 * H), lambda t: (0, 0)),
            pl.BlockSpec((1, 4 * H), lambda t: (0, 0)),
        ],
        out_specs=(
            pl.BlockSpec((1, B, H), lambda t: (t, 0, 0)),
            pl.BlockSpec((1, B, H), lambda t: (T - 1 - t, 0, 0)),
        ),
        scratch_shapes=[
            pltpu.VMEM((B, H), jnp.float32),   # h forward
            pltpu.VMEM((B, H), jnp.float32),   # c forward
            pltpu.VMEM((B, H), jnp.float32),   # h backward
            pltpu.VMEM((B, H), jnp.float32),   # c backward
        ],
        compiler_params=pltpu.CompilerParams(
            dimension_semantics=("arbitrary",)),    # sequential recurrence via scratch
    )(x_tm, x_tm, len2, wih_f, whh_f, b_f, wih_b, whh_b, b_b)

    out = jnp.concatenate([out_f, out_b], axis=-1)        # (T, B, 2H)
    return jnp.transpose(out, (1, 0, 2))                  # (B, T, 2H)


# ----------------------------------------------------------------------------------
# Full encoder forward
# ----------------------------------------------------------------------------------
@jax.jit
def encoder_forward(x, input_lengths, params):
    """x: (B, C, T) as in the PyTorch module. Returns (B, T, C)."""
    h = jnp.transpose(x, (0, 2, 1))                       # (B, T, C): channels on lanes
    for (w, scale, shift) in params["convs"]:
        h = conv_bn_relu(h, w, scale, shift)
        # TODO(synk): F.dropout(p=0.5, training=self.training) and training-mode
        # BatchNorm batch statistics are not implemented (eval/inference mode only).
    p = params["lstm"]
    return bilstm(h, input_lengths,
                  p["wih_f"], p["whh_f"], p["b_f"],
                  p["wih_b"], p["whh_b"], p["b_b"])


# ----------------------------------------------------------------------------------
# Pure-JAX reference (same math, lax.scan LSTM) for a self-check
# ----------------------------------------------------------------------------------
def _reference_encoder(x, input_lengths, params):
    h = jnp.transpose(x, (0, 2, 1)).astype(jnp.float32)
    for (w, scale, shift) in params["convs"]:
        K = w.shape[0]
        T = h.shape[1]
        pad = (K - 1) // 2
        xp = jnp.pad(h, ((0, 0), (pad, pad), (0, 0)))
        acc = jnp.zeros((h.shape[0], T, w.shape[2]), jnp.float32)
        for k in range(K):
            acc = acc + jnp.einsum("btc,cd->btd", xp[:, k:k + T, :], w[k])
        h = jnp.maximum(acc * scale[None, None, :] + shift[None, None, :], 0.0)

    p = params["lstm"]
    B, T, C = h.shape
    H = p["whh_f"].shape[0]
    x_tm = jnp.transpose(h, (1, 0, 2))
    t_idx = jnp.arange(T)
    lengths = input_lengths.astype(jnp.int32)

    def make_step(wih, whh, b, reverse):
        def step(carry, inp):
            hprev, cprev = carry
            x_t, t = inp
            gates = jnp.dot(x_t, wih) + jnp.dot(hprev, whh) + b
            i = jax.nn.sigmoid(gates[:, 0:H])
            f = jax.nn.sigmoid(gates[:, H:2 * H])
            g = jnp.tanh(gates[:, 2 * H:3 * H])
            o = jax.nn.sigmoid(gates[:, 3 * H:4 * H])
            c_new = f * cprev + i * g
            h_new = o * jnp.tanh(c_new)
            m = (t < lengths).astype(jnp.float32)[:, None]
            if reverse:
                h_out = h_new * m + hprev * (1.0 - m)
                c_out = c_new * m + cprev * (1.0 - m)
                y = h_out * m
            else:
                h_out, c_out = h_new, c_new
                y = h_new * m
            return (h_out, c_out), y
        return step

    init = (jnp.zeros((B, H), jnp.float32), jnp.zeros((B, H), jnp.float32))
    _, ys_f = lax.scan(make_step(p["wih_f"], p["whh_f"], p["b_f"], False),
                       init, (x_tm, t_idx))
    _, ys_b = lax.scan(make_step(p["wih_b"], p["whh_b"], p["b_b"], True),
                       init, (x_tm[::-1], t_idx[::-1]))
    ys_b = ys_b[::-1]
    out = jnp.concatenate([ys_f, ys_b], axis=-1)
    return jnp.transpose(out, (1, 0, 2))


if __name__ == "__main__":
    key = jax.random.PRNGKey(0)
    keys = iter(jax.random.split(key, 40))

    # Small but lane-dense shapes: embedding_dim=256 (2x128 lanes), hidden=128/direction.
    B, C, T = 2, 256, 32
    K, N_CONV = 5, 3
    H = C // 2
    BN_EPS = 1e-5

    convs = []
    for _ in range(N_CONV):
        w = jax.random.normal(next(keys), (K, C, C), jnp.float32) / jnp.sqrt(K * C)
        conv_bias = 0.1 * jax.random.normal(next(keys), (C,), jnp.float32)
        gamma = 1.0 + 0.1 * jax.random.normal(next(keys), (C,), jnp.float32)
        beta = 0.1 * jax.random.normal(next(keys), (C,), jnp.float32)
        run_mean = 0.1 * jax.random.normal(next(keys), (C,), jnp.float32)
        run_var = 1.0 + 0.1 * jax.random.uniform(next(keys), (C,), jnp.float32)
        scale = gamma / jnp.sqrt(run_var + BN_EPS)
        shift = (conv_bias - run_mean) * scale + beta      # conv bias + BN folded
        convs.append((w, scale, shift))

    def lstm_w(k, shape):
        return 0.05 * jax.random.normal(k, shape, jnp.float32)

    lstm = {
        "wih_f": lstm_w(next(keys), (C, 4 * H)),
        "whh_f": lstm_w(next(keys), (H, 4 * H)),
        "b_f": 0.1 * jax.random.normal(next(keys), (1, 4 * H), jnp.float32),
        "wih_b": lstm_w(next(keys), (C, 4 * H)),
        "whh_b": lstm_w(next(keys), (H, 4 * H)),
        "b_b": 0.1 * jax.random.normal(next(keys), (1, 4 * H), jnp.float32),
    }
    params = {"convs": convs, "lstm": lstm}

    x = jax.random.normal(next(keys), (B, C, T), jnp.float32)
    input_lengths = jnp.array([32, 23], dtype=jnp.int32)

    out = encoder_forward(x, input_lengths, params)
    out = jax.block_until_ready(out)

    ref = _reference_encoder(x, input_lengths, params)
    assert out.shape == (B, T, 2 * H)
    assert bool(jnp.all(jnp.isfinite(out)))
    assert jnp.allclose(out, ref, atol=3e-2, rtol=3e-2)
    # padded positions must be exactly zero (pad_packed_sequence semantics)
    assert bool(jnp.all(out[1, 23:, :] == 0.0))

    print("KERNEL_OK")
</pallas_src>

<mosaic_0001>
module attributes {stable_mosaic.version = 11 : i64} {
  func.func @_conv_bn_relu_kernel(%arg0: i32, %arg1: memref<1x36x256xf32, #tpu.memory_space<vmem>>, %arg2: memref<5x256x256xf32, #tpu.memory_space<vmem>>, %arg3: memref<1x256xf32, #tpu.memory_space<vmem>>, %arg4: memref<1x256xf32, #tpu.memory_space<vmem>>, %arg5: memref<1x32x256xf32, #tpu.memory_space<vmem>>) attributes {dimension_semantics = [#tpu.dimension_semantics<parallel>], iteration_bounds = array<i64: 2>, scalar_prefetch = 0 : i64, scratch_operands = 0 : i64, tpu.core_type = #tpu.core_type<tc>, window_params = [{transform_indices = @transform_0, window_bounds = array<i64: 1, 36, 256>}, {pipeline_mode = #tpu.pipeline_mode<synchronous>, transform_indices = @transform_1, window_bounds = array<i64: 5, 256, 256>}, {pipeline_mode = #tpu.pipeline_mode<synchronous>, transform_indices = @transform_2, window_bounds = array<i64: 1, 256>}, {pipeline_mode = #tpu.pipeline_mode<synchronous>, transform_indices = @transform_3, window_bounds = array<i64: 1, 256>}, {transform_indices = @transform_4, window_bounds = array<i64: 1, 32, 256>}]} {
    %c0 = arith.constant 0 : index
    %c0_0 = arith.constant 0 : index
    %c0_1 = arith.constant 0 : index
    %0 = vector.load %arg1[%c0, %c0_0, %c0_1] : memref<1x36x256xf32, #tpu.memory_space<vmem>>, vector<1x32x256xf32>
    %1 = vector.shape_cast %0 : vector<1x32x256xf32> to vector<32x256xf32>
    %c0_2 = arith.constant 0 : index
    %c0_3 = arith.constant 0 : index
    %c0_4 = arith.constant 0 : index
    %2 = vector.load %arg2[%c0_2, %c0_3, %c0_4] : memref<5x256x256xf32, #tpu.memory_space<vmem>>, vector<1x256x256xf32>
    %3 = vector.shape_cast %2 : vector<1x256x256xf32> to vector<256x256xf32>
    %cst = arith.constant dense<0.000000e+00> : vector<32x256xf32>
    %4 = tpu.matmul %1, %3, %cst {dimension_numbers = #tpu.dot_dimension_numbers<[1], [0], [0], [1], [0, 0, 1, 1], [], []>} : vector<32x256xf32>, vector<256x256xf32>, vector<32x256xf32> -> vector<32x256xf32>
    %c0_5 = arith.constant 0 : index
    %c1 = arith.constant 1 : index
    %c0_6 = arith.constant 0 : index
    %5 = vector.load %arg1[%c0_5, %c1, %c0_6] : memref<1x36x256xf32, #tpu.memory_space<vmem>>, vector<1x32x256xf32>
    %6 = vector.shape_cast %5 : vector<1x32x256xf32> to vector<32x256xf32>
    %c1_7 = arith.constant 1 : index
    %c0_8 = arith.constant 0 : index
    %c0_9 = arith.constant 0 : index
    %7 = vector.load %arg2[%c1_7, %c0_8, %c0_9] : memref<5x256x256xf32, #tpu.memory_space<vmem>>, vector<1x256x256xf32>
    %8 = vector.shape_cast %7 : vector<1x256x256xf32> to vector<256x256xf32>
    %cst_10 = arith.constant dense<0.000000e+00> : vector<32x256xf32>
    %9 = tpu.matmul %6, %8, %cst_10 {dimension_numbers = #tpu.dot_dimension_numbers<[1], [0], [0], [1], [0, 0, 1, 1], [], []>} : vector<32x256xf32>, vector<256x256xf32>, vector<32x256xf32> -> vector<32x256xf32>
    %10 = arith.addf %4, %9 : vector<32x256xf32>
    %c0_11 = arith.constant 0 : index
    %c2 = arith.constant 2 : index
    %c0_12 = arith.constant 0 : index
    %11 = vector.load %arg1[%c0_11, %c2, %c0_12] : memref<1x36x256xf32, #tpu.memory_space<vmem>>, vector<1x32x256xf32>
    %12 = vector.shape_cast %11 : vector<1x32x256xf32> to vector<32x256xf32>
    %c2_13 = arith.constant 2 : index
    %c0_14 = arith.constant 0 : index
    %c0_15 = arith.constant 0 : index
    %13 = vector.load %arg2[%c2_13, %c0_14, %c0_15] : memref<5x256x256xf32, #tpu.memory_space<vmem>>, vector<1x256x256xf32>
    %14 = vector.shape_cast %13 : vector<1x256x256xf32> to vector<256x256xf32>
    %cst_16 = arith.constant dense<0.000000e+00> : vector<32x256xf32>
    %15 = tpu.matmul %12, %14, %cst_16 {dimension_numbers = #tpu.dot_dimension_numbers<[1], [0], [0], [1], [0, 0, 1, 1], [], []>} : vector<32x256xf32>, vector<256x256xf32>, vector<32x256xf32> -> vector<32x256xf32>
    %16 = arith.addf %10, %15 : vector<32x256xf32>
    %c0_17 = arith.constant 0 : index
    %c3 = arith.constant 3 : index
    %c0_18 = arith.constant 0 : index
    %17 = vector.load %arg1[%c0_17, %c3, %c0_18] : memref<1x36x256xf32, #tpu.memory_space<vmem>>, vector<1x32x256xf32>
    %18 = vector.shape_cast %17 : vector<1x32x256xf32> to vector<32x256xf32>
    %c3_19 = arith.constant 3 : index
    %c0_20 = arith.constant 0 : index
    %c0_21 = arith.constant 0 : index
    %19 = vector.load %arg2[%c3_19, %c0_20, %c0_21] : memref<5x256x256xf32, #tpu.memory_space<vmem>>, vector<1x256x256xf32>
    %20 = vector.shape_cast %19 : vector<1x256x256xf32> to vector<256x256xf32>
    %cst_22 = arith.constant dense<0.000000e+00> : vector<32x256xf32>
    %21 = tpu.matmul %18, %20, %cst_22 {dimension_numbers = #tpu.dot_dimension_numbers<[1], [0], [0], [1], [0, 0, 1, 1], [], []>} : vector<32x256xf32>, vector<256x256xf32>, vector<32x256xf32> -> vector<32x256xf32>
    %22 = arith.addf %16, %21 : vector<32x256xf32>
    %c0_23 = arith.constant 0 : index
    %c4 = arith.constant 4 : index
    %c0_24 = arith.constant 0 : index
    %23 = vector.load %arg1[%c0_23, %c4, %c0_24] : memref<1x36x256xf32, #tpu.memory_space<vmem>>, vector<1x32x256xf32>
    %24 = vector.shape_cast %23 : vector<1x32x256xf32> to vector<32x256xf32>
    %c4_25 = arith.constant 4 : index
    %c0_26 = arith.constant 0 : index
    %c0_27 = arith.constant 0 : index
    %25 = vector.load %arg2[%c4_25, %c0_26, %c0_27] : memref<5x256x256xf32, #tpu.memory_space<vmem>>, vector<1x256x256xf32>
    %26 = vector.shape_cast %25 : vector<1x256x256xf32> to vector<256x256xf32>
    %cst_28 = arith.constant dense<0.000000e+00> : vector<32x256xf32>
    %27 = tpu.matmul %24, %26, %cst_28 {dimension_numbers = #tpu.dot_dimension_numbers<[1], [0], [0], [1], [0, 0, 1, 1], [], []>} : vector<32x256xf32>, vector<256x256xf32>, vector<32x256xf32> -> vector<32x256xf32>
    %28 = arith.addf %22, %27 : vector<32x256xf32>
    %c0_29 = arith.constant 0 : index
    %c0_30 = arith.constant 0 : index
    %29 = vector.load %arg3[%c0_29, %c0_30] : memref<1x256xf32, #tpu.memory_space<vmem>>, vector<1x256xf32>
    %30 = vector.broadcast %29 : vector<1x256xf32> to vector<32x256xf32>
    %31 = arith.mulf %28, %30 : vector<32x256xf32>
    %c0_31 = arith.constant 0 : index
    %c0_32 = arith.constant 0 : index
    %32 = vector.load %arg4[%c0_31, %c0_32] : memref<1x256xf32, #tpu.memory_space<vmem>>, vector<1x256xf32>
    %33 = vector.broadcast %32 : vector<1x256xf32> to vector<32x256xf32>
    %34 = arith.addf %31, %33 : vector<32x256xf32>
    %cst_33 = arith.constant 0.000000e+00 : f32
    %35 = vector.broadcast %cst_33 : f32 to vector<32x256xf32>
    %36 = arith.maximumf %34, %35 : vector<32x256xf32>
    %c0_34 = arith.constant 0 : index
    %c0_35 = arith.constant 0 : index
    %c0_36 = arith.constant 0 : index
    %37 = vector.load %arg5[%c0_34, %c0_35, %c0_36] : memref<1x32x256xf32, #tpu.memory_space<vmem>>, vector<1x32x256xf32>
    %38 = vector.shape_cast %37 : vector<1x32x256xf32> to vector<32x256xf32>
    %39 = vector.shape_cast %36 : vector<32x256xf32> to vector<1x32x256xf32>
    tpu.vector_store %arg5[%c0_34, %c0_35, %c0_36], %39 {strides = array<i32>} : memref<1x32x256xf32, #tpu.memory_space<vmem>>, vector<1x32x256xf32>,
    return
  }
  func.func @transform_0(%arg0: i32) -> (i32, i32, i32) {
    %c0_i32 = arith.constant 0 : i32
    %c0_i32_0 = arith.constant 0 : i32
    %c0_i32_1 = arith.constant 0 : i32
    return %arg0, %c0_i32, %c0_i32_0 : i32, i32, i32
  }
  func.func @transform_1(%arg0: i32) -> (i32, i32, i32) {
    %c0_i32 = arith.constant 0 : i32
    %c0_i32_0 = arith.constant 0 : i32
    %c0_i32_1 = arith.constant 0 : i32
    %c0_i32_2 = arith.constant 0 : i32
    return %c0_i32, %c0_i32_0, %c0_i32_1 : i32, i32, i32
  }
  func.func @transform_2(%arg0: i32) -> (i32, i32) {
    %c0_i32 = arith.constant 0 : i32
    %c0_i32_0 = arith.constant 0 : i32
    %c0_i32_1 = arith.constant 0 : i32
    return %c0_i32, %c0_i32_0 : i32, i32
  }
  func.func @transform_3(%arg0: i32) -> (i32, i32) {
    %c0_i32 = arith.constant 0 : i32
    %c0_i32_0 = arith.constant 0 : i32
    %c0_i32_1 = arith.constant 0 : i32
    return %c0_i32, %c0_i32_0 : i32, i32
  }
  func.func @transform_4(%arg0: i32) -> (i32, i32, i32) {
    %c0_i32 = arith.constant 0 : i32
    %c0_i32_0 = arith.constant 0 : i32
    %c0_i32_1 = arith.constant 0 : i32
    return %arg0, %c0_i32, %c0_i32_0 : i32, i32, i32
  }
}

module attributes {stable_mosaic.version = 11 : i64} {
  func.func @_conv_bn_relu_kernel(%arg0: i32, %arg1: memref<1x36x256xf32, #tpu.memory_space<vmem>>, %arg2: memref<5x256x256xf32, #tpu.memory_space<vmem>>, %arg3: memref<1x256xf32, #tpu.memory_space<vmem>>, %arg4: memref<1x256xf32, #tpu.memory_space<vmem>>, %arg5: memref<1x32x256xf32, #tpu.memory_space<vmem>>) attributes {dimension_semantics = [#tpu.dimension_semantics<parallel>], iteration_bounds = array<i64: 2>, scalar_prefetch = 0 : i64, scratch_operands = 0 : i64, tpu.core_type = #tpu.core_type<tc>, window_params = [{transform_indices = @transform_0, window_bounds = array<i64: 1, 36, 256>}, {pipeline_mode = #tpu.pipeline_mode<synchronous>, transform_indices = @transform_1, window_bounds = array<i64: 5, 256, 256>}, {pipeline_mode = #tpu.pipeline_mode<synchronous>, transform_indices = @transform_2, window_bounds = array<i64: 1, 256>}, {pipeline_mode = #tpu.pipeline_mode<synchronous>, transform_indices = @transform_3, window_bounds = array<i64: 1, 256>}, {transform_indices = @transform_4, window_bounds = array<i64: 1, 32, 256>}]} {
    %c0 = arith.constant 0 : index
    %c0_0 = arith.constant 0 : index
    %c0_1 = arith.constant 0 : index
    %0 = vector.load %arg1[%c0, %c0_0, %c0_1] : memref<1x36x256xf32, #tpu.memory_space<vmem>>, vector<1x32x256xf32>
    %1 = vector.shape_cast %0 : vector<1x32x256xf32> to vector<32x256xf32>
    %c0_2 = arith.constant 0 : index
    %c0_3 = arith.constant 0 : index
    %c0_4 = arith.constant 0 : index
    %2 = vector.load %arg2[%c0_2, %c0_3, %c0_4] : memref<5x256x256xf32, #tpu.memory_space<vmem>>, vector<1x256x256xf32>
    %3 = vector.shape_cast %2 : vector<1x256x256xf32> to vector<256x256xf32>
    %cst = arith.constant dense<0.000000e+00> : vector<32x256xf32>
    %4 = tpu.matmul %1, %3, %cst {dimension_numbers = #tpu.dot_dimension_numbers<[1], [0], [0], [1], [0, 0, 1, 1], [], []>} : vector<32x256xf32>, vector<256x256xf32>, vector<32x256xf32> -> vector<32x256xf32>
    %c0_5 = arith.constant 0 : index
    %c1 = arith.constant 1 : index
    %c0_6 = arith.constant 0 : index
    %5 = vector.load %arg1[%c0_5, %c1, %c0_6] : memref<1x36x256xf32, #tpu.memory_space<vmem>>, vector<1x32x256xf32>
    %6 = vector.shape_cast %5 : vector<1x32x256xf32> to vector<32x256xf32>
    %c1_7 = arith.constant 1 : index
    %c0_8 = arith.constant 0 : index
    %c0_9 = arith.constant 0 : index
    %7 = vector.load %arg2[%c1_7, %c0_8, %c0_9] : memref<5x256x256xf32, #tpu.memory_space<vmem>>, vector<1x256x256xf32>
    %8 = vector.shape_cast %7 : vector<1x256x256xf32> to vector<256x256xf32>
    %cst_10 = arith.constant dense<0.000000e+00> : vector<32x256xf32>
    %9 = tpu.matmul %6, %8, %cst_10 {dimension_numbers = #tpu.dot_dimension_numbers<[1], [0], [0], [1], [0, 0, 1, 1], [], []>} : vector<32x256xf32>, vector<256x256xf32>, vector<32x256xf32> -> vector<32x256xf32>
    %10 = arith.addf %4, %9 : vector<32x256xf32>
    %c0_11 = arith.constant 0 : index
    %c2 = arith.constant 2 : index
    %c0_12 = arith.constant 0 : index
    %11 = vector.load %arg1[%c0_11, %c2, %c0_12] : memref<1x36x256xf32, #tpu.memory_space<vmem>>, vector<1x32x256xf32>
    %12 = vector.shape_cast %11 : vector<1x32x256xf32> to vector<32x256xf32>
    %c2_13 = arith.constant 2 : index
    %c0_14 = arith.constant 0 : index
    %c0_15 = arith.constant 0 : index
    %13 = vector.load %arg2[%c2_13, %c0_14, %c0_15] : memref<5x256x256xf32, #tpu.memory_space<vmem>>, vector<1x256x256xf32>
    %14 = vector.shape_cast %13 : vector<1x256x256xf32> to vector<256x256xf32>
    %cst_16 = arith.constant dense<0.000000e+00> : vector<32x256xf32>
    %15 = tpu.matmul %12, %14, %cst_16 {dimension_numbers = #tpu.dot_dimension_numbers<[1], [0], [0], [1], [0, 0, 1, 1], [], []>} : vector<32x256xf32>, vector<256x256xf32>, vector<32x256xf32> -> vector<32x256xf32>
    %16 = arith.addf %10, %15 : vector<32x256xf32>
    %c0_17 = arith.constant 0 : index
    %c3 = arith.constant 3 : index
    %c0_18 = arith.constant 0 : index
    %17 = vector.load %arg1[%c0_17, %c3, %c0_18] : memref<1x36x256xf32, #tpu.memory_space<vmem>>, vector<1x32x256xf32>
    %18 = vector.shape_cast %17 : vector<1x32x256xf32> to vector<32x256xf32>
    %c3_19 = arith.constant 3 : index
    %c0_20 = arith.constant 0 : index
    %c0_21 = arith.constant 0 : index
    %19 = vector.load %arg2[%c3_19, %c0_20, %c0_21] : memref<5x256x256xf32, #tpu.memory_space<vmem>>, vector<1x256x256xf32>
    %20 = vector.shape_cast %19 : vector<1x256x256xf32> to vector<256x256xf32>
    %cst_22 = arith.constant dense<0.000000e+00> : vector<32x256xf32>
    %21 = tpu.matmul %18, %20, %cst_22 {dimension_numbers = #tpu.dot_dimension_numbers<[1], [0], [0], [1], [0, 0, 1, 1], [], []>} : vector<32x256xf32>, vector<256x256xf32>, vector<32x256xf32> -> vector<32x256xf32>
    %22 = arith.addf %16, %21 : vector<32x256xf32>
    %c0_23 = arith.constant 0 : index
    %c4 = arith.constant 4 : index
    %c0_24 = arith.constant 0 : index
    %23 = vector.load %arg1[%c0_23, %c4, %c0_24] : memref<1x36x256xf32, #tpu.memory_space<vmem>>, vector<1x32x256xf32>
    %24 = vector.shape_cast %23 : vector<1x32x256xf32> to vector<32x256xf32>
    %c4_25 = arith.constant 4 : index
    %c0_26 = arith.constant 0 : index
    %c0_27 = arith.constant 0 : index
    %25 = vector.load %arg2[%c4_25, %c0_26, %c0_27] : memref<5x256x256xf32, #tpu.memory_space<vmem>>, vector<1x256x256xf32>
    %26 = vector.shape_cast %25 : vector<1x256x256xf32> to vector<256x256xf32>
    %cst_28 = arith.constant dense<0.000000e+00> : vector<32x256xf32>
    %27 = tpu.matmul %24, %26, %cst_28 {dimension_numbers = #tpu.dot_dimension_numbers<[1], [0], [0], [1], [0, 0, 1, 1], [], []>} : vector<32x256xf32>, vector<256x256xf32>, vector<32x256xf32> -> vector<32x256xf32>
    %28 = arith.addf %22, %27 : vector<32x256xf32>
    %c0_29 = arith.constant 0 : index
    %c0_30 = arith.constant 0 : index
    %29 = vector.load %arg3[%c0_29, %c0_30] : memref<1x256xf32, #tpu.memory_space<vmem>>, vector<1x256xf32>
    %30 = vector.broadcast %29 : vector<1x256xf32> to vector<32x256xf32>
    %31 = arith.mulf %28, %30 : vector<32x256xf32>
    %c0_31 = arith.constant 0 : index
    %c0_32 = arith.constant 0 : index
    %32 = vector.load %arg4[%c0_31, %c0_32] : memref<1x256xf32, #tpu.memory_space<vmem>>, vector<1x256xf32>
    %33 = vector.broadcast %32 : vector<1x256xf32> to vector<32x256xf32>
    %34 = arith.addf %31, %33 : vector<32x256xf32>
    %cst_33 = arith.constant 0.000000e+00 : f32
    %35 = vector.broadcast %cst_33 : f32 to vector<32x256xf32>
    %36 = arith.maximumf %34, %35 : vector<32x256xf32>
    %c0_34 = arith.constant 0 : index
    %c0_35 = arith.constant 0 : index
    %c0_36 = arith.constant 0 : index
    %37 = vector.load %arg5[%c0_34, %c0_35, %c0_36] : memref<1x32x256xf32, #tpu.memory_space<vmem>>, vector<1x32x256xf32>
    %38 = vector.shape_cast %37 : vector<1x32x256xf32> to vector<32x256xf32>
    %39 = vector.shape_cast %36 : vector<32x256xf32> to vector<1x32x256xf32>
    tpu.vector_store %arg5[%c0_34, %c0_35, %c0_36], %39 {strides = array<i32>} : memref<1x32x256xf32, #tpu.memory_space<vmem>>, vector<1x32x256xf32>,
    return
  }
  func.func @transform_0(%arg0: i32) -> (i32, i32, i32) {
    %c0_i32 = arith.constant 0 : i32
    %c0_i32_0 = arith.constant 0 : i32
    %c0_i32_1 = arith.constant 0 : i32
    return %arg0, %c0_i32, %c0_i32_0 : i32, i32, i32
  }
  func.func @transform_1(%arg0: i32) -> (i32, i32, i32) {
    %c0_i32 = arith.constant 0 : i32
    %c0_i32_0 = arith.constant 0 : i32
    %c0_i32_1 = arith.constant 0 : i32
    %c0_i32_2 = arith.constant 0 : i32
    return %c0_i32, %c0_i32_0, %c0_i32_1 : i32, i32, i32
  }
  func.func @transform_2(%arg0: i32) -> (i32, i32) {
    %c0_i32 = arith.constant 0 : i32
    %c0_i32_0 = arith.constant 0 : i32
    %c0_i32_1 = arith.constant 0 : i32
    return %c0_i32, %c0_i32_0 : i32, i32
  }
  func.func @transform_3(%arg0: i32) -> (i32, i32) {
    %c0_i32 = arith.constant 0 : i32
    %c0_i32_0 = arith.constant 0 : i32
    %c0_i32_1 = arith.constant 0 : i32
    return %c0_i32, %c0_i32_0 : i32, i32
  }
  func.func @transform_4(%arg0: i32) -> (i32, i32, i32) {
    %c0_i32 = arith.constant 0 : i32
    %c0_i32_0 = arith.constant 0 : i32
    %c0_i32_1 = arith.constant 0 : i32
    return %arg0, %c0_i32, %c0_i32_0 : i32, i32, i32
  }
}

module attributes {stable_mosaic.version = 11 : i64} {
  func.func @_bilstm_kernel(%arg0: i32, %arg1: memref<1x2x256xf32, #tpu.memory_space<vmem>>, %arg2: memref<1x2x256xf32, #tpu.memory_space<vmem>>, %arg3: memref<2x1xi32, #tpu.memory_space<vmem>>, %arg4: memref<256x512xf32, #tpu.memory_space<vmem>>, %arg5: memref<128x512xf32, #tpu.memory_space<vmem>>, %arg6: memref<1x512xf32, #tpu.memory_space<vmem>>, %arg7: memref<256x512xf32, #tpu.memory_space<vmem>>, %arg8: memref<128x512xf32, #tpu.memory_space<vmem>>, %arg9: memref<1x512xf32, #tpu.memory_space<vmem>>, %arg10: memref<1x2x128xf32, #tpu.memory_space<vmem>>, %arg11: memref<1x2x128xf32, #tpu.memory_space<vmem>>, %arg12: memref<2x128xf32, #tpu.memory_space<vmem>>, %arg13: memref<2x128xf32, #tpu.memory_space<vmem>>, %arg14: memref<2x128xf32, #tpu.memory_space<vmem>>, %arg15: memref<2x128xf32, #tpu.memory_space<vmem>>) attributes {dimension_semantics = [#tpu.dimension_semantics<arbitrary>], iteration_bounds = array<i64: 32>, scalar_prefetch = 0 : i64, scratch_operands = 4 : i64, tpu.core_type = #tpu.core_type<tc>, window_params = [{transform_indices = @transform_0, window_bounds = array<i64: 1, 2, 256>}, {transform_indices = @transform_1, window_bounds = array<i64: 1, 2, 256>}, {pipeline_mode = #tpu.pipeline_mode<synchronous>, transform_indices = @transform_2, window_bounds = array<i64: 2, 1>}, {pipeline_mode = #tpu.pipeline_mode<synchronous>, transform_indices = @transform_3, window_bounds = array<i64: 256, 512>}, {pipeline_mode = #tpu.pipeline_mode<synchronous>, transform_indices = @transform_4, window_bounds = array<i64: 128, 512>}, {pipeline_mode = #tpu.pipeline_mode<synchronous>, transform_indices = @transform_5, window_bounds = array<i64: 1, 512>}, {pipeline_mode = #tpu.pipeline_mode<synchronous>, transform_indices = @transform_6, window_bounds = array<i64: 256, 512>}, {pipeline_mode = #tpu.pipeline_mode<synchronous>, transform_indices = @transform_7, window_bounds = array<i64: 128, 512>}, {pipeline_mode = #tpu.pipeline_mode<synchronous>, transform_indices = @transform_8, window_bounds = array<i64: 1, 512>}, {transform_indices = @transform_9, window_bounds = array<i64: 1, 2, 128>}, {transform_indices = @transform_10, window_bounds = array<i64: 1, 2, 128>}]} {
    %c0_i32 = arith.constant 0 : i32
    %0 = arith.cmpi eq, %arg0, %c0_i32 : i32
    %1 = arith.extui %0 : i1 to i32
    %c0_i32_0 = arith.constant 0 : i32
    %2 = arith.cmpi ne, %1, %c0_i32_0 : i32
    scf.if %2 {
      %cst_57 = arith.constant 0.000000e+00 : f32
      %117 = vector.broadcast %cst_57 : f32 to vector<2x128xf32>
      %c0_58 = arith.constant 0 : index
      %c0_59 = arith.constant 0 : index
      %118 = vector.load %arg12[%c0_58, %c0_59] : memref<2x128xf32, #tpu.memory_space<vmem>>, vector<2x128xf32>
      tpu.vector_store %arg12[%c0_58, %c0_59], %117 {strides = array<i32>} : memref<2x128xf32, #tpu.memory_space<vmem>>, vector<2x128xf32>,
      %cst_60 = arith.constant 0.000000e+00 : f32
      %119 = vector.broadcast %cst_60 : f32 to vector<2x128xf32>
      %c0_61 = arith.constant 0 : index
      %c0_62 = arith.constant 0 : index
      %120 = vector.load %arg13[%c0_61, %c0_62] : memref<2x128xf32, #tpu.memory_space<vmem>>, vector<2x128xf32>
      tpu.vector_store %arg13[%c0_61, %c0_62], %119 {strides = array<i32>} : memref<2x128xf32, #tpu.memory_space<vmem>>, vector<2x128xf32>,
      %cst_63 = arith.constant 0.000000e+00 : f32
      %121 = vector.broadcast %cst_63 : f32 to vector<2x128xf32>
      %c0_64 = arith.constant 0 : index
      %c0_65 = arith.constant 0 : index
      %122 = vector.load %arg14[%c0_64, %c0_65] : memref<2x128xf32, #tpu.memory_space<vmem>>, vector<2x128xf32>
      tpu.vector_store %arg14[%c0_64, %c0_65], %121 {strides = array<i32>} : memref<2x128xf32, #tpu.memory_space<vmem>>, vector<2x128xf32>,
      %cst_66 = arith.constant 0.000000e+00 : f32
      %123 = vector.broadcast %cst_66 : f32 to vector<2x128xf32>
      %c0_67 = arith.constant 0 : index
      %c0_68 = arith.constant 0 : index
      %124 = vector.load %arg15[%c0_67, %c0_68] : memref<2x128xf32, #tpu.memory_space<vmem>>, vector<2x128xf32>
      tpu.vector_store %arg15[%c0_67, %c0_68], %123 {strides = array<i32>} : memref<2x128xf32, #tpu.memory_space<vmem>>, vector<2x128xf32>,
    } else {
    }
    %c0 = arith.constant 0 : index
    %c0_1 = arith.constant 0 : index
    %3 = vector.load %arg3[%c0, %c0_1] : memref<2x1xi32, #tpu.memory_space<vmem>>, vector<2x1xi32>
    %c0_2 = arith.constant 0 : index
    %c0_3 = arith.constant 0 : index
    %c0_4 = arith.constant 0 : index
    %4 = vector.load %arg1[%c0_2, %c0_3, %c0_4] : memref<1x2x256xf32, #tpu.memory_space<vmem>>, vector<1x2x256xf32>
    %5 = vector.shape_cast %4 : vector<1x2x256xf32> to vector<2x256xf32>
    %c0_5 = arith.constant 0 : index
    %c0_6 = arith.constant 0 : index
    %6 = vector.load %arg12[%c0_5, %c0_6] : memref<2x128xf32, #tpu.memory_space<vmem>>, vector<2x128xf32>
    %c0_7 = arith.constant 0 : index
    %c0_8 = arith.constant 0 : index
    %7 = vector.load %arg13[%c0_7, %c0_8] : memref<2x128xf32, #tpu.memory_space<vmem>>, vector<2x128xf32>
    %c0_9 = arith.constant 0 : index
    %c0_10 = arith.constant 0 : index
    %8 = vector.load %arg4[%c0_9, %c0_10] : memref<256x512xf32, #tpu.memory_space<vmem>>, vector<256x512xf32>
    %c0_11 = arith.constant 0 : index
    %c0_12 = arith.constant 0 : index
    %9 = vector.load %arg5[%c0_11, %c0_12] : memref<128x512xf32, #tpu.memory_space<vmem>>, vector<128x512xf32>
    %c0_13 = arith.constant 0 : index
    %c0_14 = arith.constant 0 : index
    %10 = vector.load %arg6[%c0_13, %c0_14] : memref<1x512xf32, #tpu.memory_space<vmem>>, vector<1x512xf32>
    %cst = arith.constant dense<0.000000e+00> : vector<2x512xf32>
    %11 = tpu.matmul %5, %8, %cst {dimension_numbers = #tpu.dot_dimension_numbers<[1], [0], [0], [1], [0, 0, 1, 1], [], []>} : vector<2x256xf32>, vector<256x512xf32>, vector<2x512xf32> -> vector<2x512xf32>
    %cst_15 = arith.constant dense<0.000000e+00> : vector<2x512xf32>
    %12 = tpu.matmul %6, %9, %cst_15 {dimension_numbers = #tpu.dot_dimension_numbers<[1], [0], [0], [1], [0, 0, 1, 1], [], []>} : vector<2x128xf32>, vector<128x512xf32>, vector<2x512xf32> -> vector<2x512xf32>
    %13 = arith.addf %11, %12 : vector<2x512xf32>
    %14 = vector.broadcast %10 : vector<1x512xf32> to vector<2x512xf32>
    %15 = arith.addf %13, %14 : vector<2x512xf32>
    %16 = vector.extract_strided_slice %15 {offsets = [0, 0], sizes = [2, 128], strides = [1, 1]} : vector<2x512xf32> to vector<2x128xf32>
    %17 = arith.negf %16 : vector<2x128xf32>
    %18 = math.exp %17 : vector<2x128xf32>
    %cst_16 = arith.constant 1.000000e+00 : f32
    %19 = vector.broadcast %cst_16 : f32 to vector<2x128xf32>
    %20 = arith.addf %19, %18 : vector<2x128xf32>
    %21 = arith.divf %19, %20 : vector<2x128xf32>
    %22 = vector.extract_strided_slice %15 {offsets = [0, 128], sizes = [2, 128], strides = [1, 1]} : vector<2x512xf32> to vector<2x128xf32>
    %23 = arith.negf %22 : vector<2x128xf32>
    %24 = math.exp %23 : vector<2x128xf32>
    %cst_17 = arith.constant 1.000000e+00 : f32
    %25 = vector.broadcast %cst_17 : f32 to vector<2x128xf32>
    %26 = arith.addf %25, %24 : vector<2x128xf32>
    %27 = arith.divf %25, %26 : vector<2x128xf32>
    %28 = vector.extract_strided_slice %15 {offsets = [0, 256], sizes = [2, 128], strides = [1, 1]} : vector<2x512xf32> to vector<2x128xf32>
    %29 = math.tanh %28 : vector<2x128xf32>
    %30 = vector.extract_strided_slice %15 {offsets = [0, 384], sizes = [2, 128], strides = [1, 1]} : vector<2x512xf32> to vector<2x128xf32>
    %31 = arith.negf %30 : vector<2x128xf32>
    %32 = math.exp %31 : vector<2x128xf32>
    %cst_18 = arith.constant 1.000000e+00 : f32
    %33 = vector.broadcast %cst_18 : f32 to vector<2x128xf32>
    %34 = arith.addf %33, %32 : vector<2x128xf32>
    %35 = arith.divf %33, %34 : vector<2x128xf32>
    %36 = arith.mulf %27, %7 : vector<2x128xf32>
    %37 = arith.mulf %21, %29 : vector<2x128xf32>
    %38 = arith.addf %36, %37 : vector<2x128xf32>
    %39 = math.tanh %38 : vector<2x128xf32>
    %40 = arith.mulf %35, %39 : vector<2x128xf32>
    %c0_19 = arith.constant 0 : index
    %c0_20 = arith.constant 0 : index
    %41 = vector.load %arg12[%c0_19, %c0_20] : memref<2x128xf32, #tpu.memory_space<vmem>>, vector<2x128xf32>
    tpu.vector_store %arg12[%c0_19, %c0_20], %40 {strides = array<i32>} : memref<2x128xf32, #tpu.memory_space<vmem>>, vector<2x128xf32>,
    %c0_21 = arith.constant 0 : index
    %c0_22 = arith.constant 0 : index
    %42 = vector.load %arg13[%c0_21, %c0_22] : memref<2x128xf32, #tpu.memory_space<vmem>>, vector<2x128xf32>
    tpu.vector_store %arg13[%c0_21, %c0_22], %38 {strides = array<i32>} : memref<2x128xf32, #tpu.memory_space<vmem>>, vector<2x128xf32>,
    %43 = vector.broadcast %arg0 : i32 to vector<2x1xi32>
    %44 = arith.cmpi slt, %43, %3 : vector<2x1xi32>
    %45 = arith.extui %44 : vector<2x1xi1> to vector<2x1xi32>
    %46 = arith.sitofp %45 : vector<2x1xi32> to vector<2x1xf32>
    %47 = vector.broadcast %46 : vector<2x1xf32> to vector<2x128xf32>
    %48 = arith.mulf %40, %47 : vector<2x128xf32>
    %c0_23 = arith.constant 0 : index
    %c0_24 = arith.constant 0 : index
    %c0_25 = arith.constant 0 : index
    %49 = vector.load %arg10[%c0_23, %c0_24, %c0_25] : memref<1x2x128xf32, #tpu.memory_space<vmem>>, vector<1x2x128xf32>
    %50 = vector.shape_cast %49 : vector<1x2x128xf32> to vector<2x128xf32>
    %51 = vector.shape_cast %48 : vector<2x128xf32> to vector<1x2x128xf32>
    tpu.vector_store %arg10[%c0_23, %c0_24, %c0_25], %51 {strides = array<i32>} : memref<1x2x128xf32, #tpu.memory_space<vmem>>, vector<1x2x128xf32>,
    %c31_i32 = arith.constant 31 : i32
    %52 = arith.subi %c31_i32, %arg0 : i32
    %c0_26 = arith.constant 0 : index
    %c0_27 = arith.constant 0 : index
    %c0_28 = arith.constant 0 : index
    %53 = vector.load %arg2[%c0_26, %c0_27, %c0_28] : memref<1x2x256xf32, #tpu.memory_space<vmem>>, vector<1x2x256xf32>
    %54 = vector.shape_cast %53 : vector<1x2x256xf32> to vector<2x256xf32>
    %c0_29 = arith.constant 0 : index
    %c0_30 = arith.constant 0 : index
    %55 = vector.load %arg14[%c0_29, %c0_30] : memref<2x128xf32, #tpu.memory_space<vmem>>, vector<2x128xf32>
    %c0_31 = arith.constant 0 : index
    %c0_32 = arith.constant 0 : index
    %56 = vector.load %arg15[%c0_31, %c0_32] : memref<2x128xf32, #tpu.memory_space<vmem>>, vector<2x128xf32>
    %c0_33 = arith.constant 0 : index
    %c0_34 = arith.constant 0 : index
    %57 = vector.load %arg7[%c0_33, %c0_34] : memref<256x512xf32, #tpu.memory_space<vmem>>, vector<256x512xf32>
    %c0_35 = arith.constant 0 : index
    %c0_36 = arith.constant 0 : index
    %58 = vector.load %arg8[%c0_35, %c0_36] : memref<128x512xf32, #tpu.memory_space<vmem>>, vector<128x512xf32>
    %c0_37 = arith.constant 0 : index
    %c0_38 = arith.constant 0 : index
    %59 = vector.load %arg9[%c0_37, %c0_38] : memref<1x512xf32, #tpu.memory_space<vmem>>, vector<1x512xf32>
    %cst_39 = arith.constant dense<0.000000e+00> : vector<2x512xf32>
    %60 = tpu.matmul %54, %57, %cst_39 {dimension_numbers = #tpu.dot_dimension_numbers<[1], [0], [0], [1], [0, 0, 1, 1], [], []>} : vector<2x256xf32>, vector<256x512xf32>, vector<2x512xf32> -> vector<2x512xf32>
    %cst_40 = arith.constant dense<0.000000e+00> : vector<2x512xf32>
    %61 = tpu.matmul %55, %58, %cst_40 {dimension_numbers = #tpu.dot_dimension_numbers<[1], [0], [0], [1], [0, 0, 1, 1], [], []>} : vector<2x128xf32>, vector<128x512xf32>, vector<2x512xf32> -> vector<2x512xf32>
    %62 = arith.addf %60, %61 : vector<2x512xf32>
    %63 = vector.broadcast %59 : vector<1x512xf32> to vector<2x512xf32>
    %64 = arith.addf %62, %63 : vector<2x512xf32>
    %65 = vector.extract_strided_slice %64 {offsets = [0, 0], sizes = [2, 128], strides = [1, 1]} : vector<2x512xf32> to vector<2x128xf32>
    %66 = arith.negf %65 : vector<2x128xf32>
    %67 = math.exp %66 : vector<2x128xf32>
    %cst_41 = arith.constant 1.000000e+00 : f32
    %68 = vector.broadcast %cst_41 : f32 to vector<2x128xf32>
    %69 = arith.addf %68, %67 : vector<2x128xf32>
    %70 = arith.divf %68, %69 : vector<2x128xf32>
    %71 = vector.extract_strided_slice %64 {offsets = [0, 128], sizes = [2, 128], strides = [1, 1]} : vector<2x512xf32> to vector<2x128xf32>
    %72 = arith.negf %71 : vector<2x128xf32>
    %73 = math.exp %72 : vector<2x128xf32>
    %cst_42 = arith.constant 1.000000e+00 : f32
    %74 = vector.broadcast %cst_42 : f32 to vector<2x128xf32>
    %75 = arith.addf %74, %73 : vector<2x128xf32>
    %76 = arith.divf %74, %75 : vector<2x128xf32>
    %77 = vector.extract_strided_slice %64 {offsets = [0, 256], sizes = [2, 128], strides = [1, 1]} : vector<2x512xf32> to vector<2x128xf32>
    %78 = math.tanh %77 : vector<2x128xf32>
    %79 = vector.extract_strided_slice %64 {offsets = [0, 384], sizes = [2, 128], strides = [1, 1]} : vector<2x512xf32> to vector<2x128xf32>
    %80 = arith.negf %79 : vector<2x128xf32>
    %81 = math.exp %80 : vector<2x128xf32>
    %cst_43 = arith.constant 1.000000e+00 : f32
    %82 = vector.broadcast %cst_43 : f32 to vector<2x128xf32>
    %83 = arith.addf %82, %81 : vector<2x128xf32>
    %84 = arith.divf %82, %83 : vector<2x128xf32>
    %85 = arith.mulf %76, %56 : vector<2x128xf32>
    %86 = arith.mulf %70, %78 : vector<2x128xf32>
    %87 = arith.addf %85, %86 : vector<2x128xf32>
    %88 = math.tanh %87 : vector<2x128xf32>
    %89 = arith.mulf %84, %88 : vector<2x128xf32>
    %90 = vector.broadcast %52 : i32 to vector<2x1xi32>
    %91 = arith.cmpi slt, %90, %3 : vector<2x1xi32>
    %92 = arith.extui %91 : vector<2x1xi1> to vector<2x1xi32>
    %93 = arith.sitofp %92 : vector<2x1xi32> to vector<2x1xf32>
    %94 = vector.broadcast %93 : vector<2x1xf32> to vector<2x128xf32>
    %95 = arith.mulf %89, %94 : vector<2x128xf32>
    %c0_44 = arith.constant 0 : index
    %c0_45 = arith.constant 0 : index
    %96 = vector.load %arg14[%c0_44, %c0_45] : memref<2x128xf32, #tpu.memory_space<vmem>>, vector<2x128xf32>
    %cst_46 = arith.constant 1.000000e+00 : f32
    %97 = vector.broadcast %cst_46 : f32 to vector<2x1xf32>
    %98 = arith.subf %97, %93 : vector<2x1xf32>
    %99 = vector.broadcast %98 : vector<2x1xf32> to vector<2x128xf32>
    %100 = arith.mulf %96, %99 : vector<2x128xf32>
    %101 = arith.addf %95, %100 : vector<2x128xf32>
    %102 = vector.broadcast %93 : vector<2x1xf32> to vector<2x128xf32>
    %103 = arith.mulf %87, %102 : vector<2x128xf32>
    %c0_47 = arith.constant 0 : index
    %c0_48 = arith.constant 0 : index
    %104 = vector.load %arg15[%c0_47, %c0_48] : memref<2x128xf32, #tpu.memory_space<vmem>>, vector<2x128xf32>
    %cst_49 = arith.constant 1.000000e+00 : f32
    %105 = vector.broadcast %cst_49 : f32 to vector<2x1xf32>
    %106 = arith.subf %105, %93 : vector<2x1xf32>
    %107 = vector.broadcast %106 : vector<2x1xf32> to vector<2x128xf32>
    %108 = arith.mulf %104, %107 : vector<2x128xf32>
    %109 = arith.addf %103, %108 : vector<2x128xf32>
    %c0_50 = arith.constant 0 : index
    %c0_51 = arith.constant 0 : index
    %110 = vector.load %arg14[%c0_50, %c0_51] : memref<2x128xf32, #tpu.memory_space<vmem>>, vector<2x128xf32>
    tpu.vector_store %arg14[%c0_50, %c0_51], %101 {strides = array<i32>} : memref<2x128xf32, #tpu.memory_space<vmem>>, vector<2x128xf32>,
    %c0_52 = arith.constant 0 : index
    %c0_53 = arith.constant 0 : index
    %111 = vector.load %arg15[%c0_52, %c0_53] : memref<2x128xf32, #tpu.memory_space<vmem>>, vector<2x128xf32>
    tpu.vector_store %arg15[%c0_52, %c0_53], %109 {strides = array<i32>} : memref<2x128xf32, #tpu.memory_space<vmem>>, vector<2x128xf32>,
    %112 = vector.broadcast %93 : vector<2x1xf32> to vector<2x128xf32>
    %113 = arith.mulf %101, %112 : vector<2x128xf32>
    %c0_54 = arith.constant 0 : index
    %c0_55 = arith.constant 0 : index
    %c0_56 = arith.constant 0 : index
    %114 = vector.load %arg11[%c0_54, %c0_55, %c0_56] : memref<1x2x128xf32, #tpu.memory_space<vmem>>, vector<1x2x128xf32>
    %115 = vector.shape_cast %114 : vector<1x2x128xf32> to vector<2x128xf32>
    %116 = vector.shape_cast %113 : vector<2x128xf32> to vector<1x2x128xf32>
    tpu.vector_store %arg11[%c0_54, %c0_55, %c0_56], %116 {strides = array<i32>} : memref<1x2x128xf32, #tpu.memory_space<vmem>>, vector<1x2x128xf32>,
    return
  }
  func.func @transform_0(%arg0: i32) -> (i32, i32, i32) {
    %c0_i32 = arith.constant 0 : i32
    %c0_i32_0 = arith.constant 0 : i32
    %c0_i32_1 = arith.constant 0 : i32
    return %arg0, %c0_i32, %c0_i32_0 : i32, i32, i32
  }
  func.func @transform_1(%arg0: i32) -> (i32, i32, i32) {
    %c31_i32 = arith.constant 31 : i32
    %0 = arith.subi %c31_i32, %arg0 : i32
    %c0_i32 = arith.constant 0 : i32
    %c0_i32_0 = arith.constant 0 : i32
    %c0_i32_1 = arith.constant 0 : i32
    return %0, %c0_i32, %c0_i32_0 : i32, i32, i32
  }
  func.func @transform_2(%arg0: i32) -> (i32, i32) {
    %c0_i32 = arith.constant 0 : i32
    %c0_i32_0 = arith.constant 0 : i32
    %c0_i32_1 = arith.constant 0 : i32
    return %c0_i32, %c0_i32_0 : i32, i32
  }
  func.func @transform_3(%arg0: i32) -> (i32, i32) {
    %c0_i32 = arith.constant 0 : i32
    %c0_i32_0 = arith.constant 0 : i32
    %c0_i32_1 = arith.constant 0 : i32
    return %c0_i32, %c0_i32_0 : i32, i32
  }
  func.func @transform_4(%arg0: i32) -> (i32, i32) {
    %c0_i32 = arith.constant 0 : i32
    %c0_i32_0 = arith.constant 0 : i32
    %c0_i32_1 = arith.constant 0 : i32
    return %c0_i32, %c0_i32_0 : i32, i32
  }
  func.func @transform_5(%arg0: i32) -> (i32, i32) {
    %c0_i32 = arith.constant 0 : i32
    %c0_i32_0 = arith.constant 0 : i32
    %c0_i32_1 = arith.constant 0 : i32
    return %c0_i32, %c0_i32_0 : i32, i32
  }
  func.func @transform_6(%arg0: i32) -> (i32, i32) {
    %c0_i32 = arith.constant 0 : i32
    %c0_i32_0 = arith.constant 0 : i32
    %c0_i32_1 = arith.constant 0 : i32
    return %c0_i32, %c0_i32_0 : i32, i32
  }
  func.func @transform_7(%arg0: i32) -> (i32, i32) {
    %c0_i32 = arith.constant 0 : i32
    %c0_i32_0 = arith.constant 0 : i32
    %c0_i32_1 = arith.constant 0 : i32
    return %c0_i32, %c0_i32_0 : i32, i32
  }
  func.func @transform_8(%arg0: i32) -> (i32, i32) {
    %c0_i32 = arith.constant 0 : i32
    %c0_i32_0 = arith.constant 0 : i32
    %c0_i32_1 = arith.constant 0 : i32
    return %c0_i32, %c0_i32_0 : i32, i32
  }
  func.func @transform_9(%arg0: i32) -> (i32, i32, i32) {
    %c0_i32 = arith.constant 0 : i32
    %c0_i32_0 = arith.constant 0 : i32
    %c0_i32_1 = arith.constant 0 : i32
    return %arg0, %c0_i32, %c0_i32_0 : i32, i32, i32
  }
  func.func @transform_10(%arg0: i32) -> (i32, i32, i32) {
    %c31_i32 = arith.constant 31 : i32
    %0 = arith.subi %c31_i32, %arg0 : i32
    %c0_i32 = arith.constant 0 : i32
    %c0_i32_0 = arith.constant 0 : i32
    %c0_i32_1 = arith.constant 0 : i32
    return %0, %c0_i32, %c0_i32_0 : i32, i32, i32
  }
}

</mosaic_0001>

<llo_original>
// kernel: encoder_forward.4
$region0: #{encoder_forward.4}
  #allocation0 [shape = 'u32[]', space=smem, size = 0x4, offset = 0x4, fixed_abs, tag = 'smem constant byte address 0x4 - core index']
  #allocation1 [shape = 'u32[144,128]{1,0:T(1,128)}', space=vmem, size = 0x12000, scoped, tag = 'internal scratch']
  %s0 = inlined_call_operand.vmem [shape: f32[2,36,256], index: 0, kind: input, shape index: {}]
  %s1 = inlined_call_operand.hbm [shape: f32[5,256,256], index: 1, kind: input, shape index: {}]
  %s2 = inlined_call_operand.hbm [shape: f32[1,256], index: 2, kind: input, shape index: {}]
  %s3 = inlined_call_operand.hbm [shape: f32[1,256], index: 3, kind: input, shape index: {}]
  %s4 = inlined_call_operand.vmem [shape: f32[2,32,256], index: 4, kind: output, shape index: {}]
  %s5 = sld [smem:[#allocation0]]
  $region61: #{encoder_forward.4} parent=0
    _
  %s7 = ssub.s32 1, %s5
  %s8 = scalar_select 0, %s7, %s5
  $region1: #{encoder_forward.4} parent=0
    #allocation2 [shape = 'u8[1310720]{0}', space=vmem, size = 0x140000, scoped, tag = 'input window, operand 1, single buffered']
    #allocation3 [shape = 's32[2]{0}', space=sflag, size = 0x8, scoped, tag = 'scoped memory for encoder_forward.4']
    #allocation4 [shape = 'u8[1024]{0}', space=vmem, size = 0x400, scoped, tag = 'input window, operand 2, single buffered']
    #allocation5 [shape = 's32[1]{0}', space=sflag, size = 0x4, scoped, tag = 'scoped memory for encoder_forward.4']
    #allocation6 [shape = 'u8[1024]{0}', space=vmem, size = 0x400, scoped, tag = 'input window, operand 3, single buffered']
    %9 = vsyncpa [#allocation3], 0
    %10 = vsyncpa [#allocation5], 0
    loop: start=0, step=1, limit=4
    $region2: #{encoder_forward.4} parent=1 // loop_pre_header
      _
    $region3: #{encoder_forward.4} parent=1 // loop_header
      %s12 = sphi 0, %s16
      %p13 = scmp.ge.s32.totalorder %s12, 4
      %s22 = sphi 0, %s24
      %s25 = sphi 0, %s22
      %s26 = sphi 0, %s25
      %s42 = sphi 0, %s26
      %s46 = sphi 0, %s46
      %s48 = sphi 0, %s46
      %s49 = sphi 0, %s48
      %s63 = sphi 0, %s49
      %s67 = sphi 0, %s67
      %s69 = sphi 0, %s67
      %s70 = sphi 0, %s69
      %s84 = sphi 0, %s70
      %s88 = sphi 0, %s88
      %s90 = sphi 0, %s88
      %s91 = sphi 0, %s90
      %s105 = sphi 0, %s91
      %s111 = sphi 0, %s113
      %s114 = sphi 0, %s111
      %s115 = sphi 0, %s114
      %s131 = sphi 0, %s115
    $region4: #{encoder_forward.4} parent=1 // loop_header_branch
      %15 = sbr.rel (%p13) target = $region8
    $region5: #{encoder_forward.4} parent=1 // loop_body
      %s17 = ssub.s32 %s12, 1
      %s18 = ssub.s32 %s12, 2
      %s19 = sadd.s32 %s12, 1
      %s20 = ssub.s32 %s12, %s19
      %p21 = scmp.eq.s32.totalorder %s20, 0
      %s23 = sadd.s32 %s22, 1
      %s24 = scalar_select %p21, %s22, %s23
      %p27 = pneg %p21
      %p28 = scmp.eq.s32.totalorder %s12, 1
      %p29 = por %p27, %p28
      %p30 = scmp.ne.s32.totalorder %s22, %s25
      %p31 = scmp.eq.s32.totalorder %s12, 0
      %p32 = por %p30, %p31
      %p33 = scmp.ne.s32.totalorder %s22, %s25
      %p34 = scmp.eq.s32.totalorder %s17, 1
      %p35 = por %p33, %p34
      %p36 = scmp.ne.s32.totalorder %s25, %s26
      %p37 = scmp.eq.s32.totalorder %s17, 0
      %p38 = por %p36, %p37
      %p39 = scmp.ne.s32.totalorder %s25, %s26
      %p40 = scmp.eq.s32.totalorder %s18, 1
      %p41 = por %p39, %p40
      %p43 = scmp.ne.s32.totalorder %s26, %s42
      %p44 = scmp.eq.s32.totalorder %s18, 0
      %p45 = por %p43, %p44
      %s47 = sadd.s32 %s46, 1
      %p50 = scmp.eq.s32.totalorder %s12, 1
      %p51 = scmp.ne.s32.totalorder %s46, %s48
      %p52 = scmp.eq.s32.totalorder %s12, 0
      %p53 = por %p51, %p52
      %p54 = scmp.ne.s32.totalorder %s46, %s48
      %p55 = scmp.eq.s32.totalorder %s17, 1
      %p56 = por %p54, %p55
      %p57 = scmp.ne.s32.totalorder %s48, %s49
      %p58 = scmp.eq.s32.totalorder %s17, 0
      %p59 = por %p57, %p58
      %p60 = scmp.ne.s32.totalorder %s48, %s49
      %p61 = scmp.eq.s32.totalorder %s18, 1
      %p62 = por %p60, %p61
      %p64 = scmp.ne.s32.totalorder %s49, %s63
      %p65 = scmp.eq.s32.totalorder %s18, 0
      %p66 = por %p64, %p65
      %s68 = sadd.s32 %s67, 1
      %p71 = scmp.eq.s32.totalorder %s12, 1
      %p72 = scmp.ne.s32.totalorder %s67, %s69
      %p73 = scmp.eq.s32.totalorder %s12, 0
      %p74 = por %p72, %p73
      %p75 = scmp.ne.s32.totalorder %s67, %s69
      %p76 = scmp.eq.s32.totalorder %s17, 1
      %p77 = por %p75, %p76
      %p78 = scmp.ne.s32.totalorder %s69, %s70
      %p79 = scmp.eq.s32.totalorder %s17, 0
      %p80 = por %p78, %p79
      %p81 = scmp.ne.s32.totalorder %s69, %s70
      %p82 = scmp.eq.s32.totalorder %s18, 1
      %p83 = por %p81, %p82
      %p85 = scmp.ne.s32.totalorder %s70, %s84
      %p86 = scmp.eq.s32.totalorder %s18, 0
      %p87 = por %p85, %p86
      %s89 = sadd.s32 %s88, 1
      %p92 = scmp.eq.s32.totalorder %s12, 1
      %p93 = scmp.ne.s32.totalorder %s88, %s90
      %p94 = scmp.eq.s32.totalorder %s12, 0
      %p95 = por %p93, %p94
      %p96 = scmp.ne.s32.totalorder %s88, %s90
      %p97 = scmp.eq.s32.totalorder %s17, 1
      %p98 = por %p96, %p97
      %p99 = scmp.ne.s32.totalorder %s90, %s91
      %p100 = scmp.eq.s32.totalorder %s17, 0
      %p101 = por %p99, %p100
      %p102 = scmp.ne.s32.totalorder %s90, %s91
      %p103 = scmp.eq.s32.totalorder %s18, 1
      %p104 = por %p102, %p103
      %p106 = scmp.ne.s32.totalorder %s91, %s105
      %p107 = scmp.eq.s32.totalorder %s18, 0
      %p108 = por %p106, %p107
      %s109 = ssub.s32 %s12, %s19
      %p110 = scmp.eq.s32.totalorder %s109, 0
      %s112 = sadd.s32 %s111, 1
      %s113 = scalar_select %p110, %s111, %s112
      %p116 = pneg %p110
      %p117 = scmp.eq.s32.totalorder %s12, 1
      %p118 = por %p116, %p117
      %p119 = scmp.ne.s32.totalorder %s111, %s114
      %p120 = scmp.eq.s32.totalorder %s12, 0
      %p121 = por %p119, %p120
      %p122 = scmp.ne.s32.totalorder %s111, %s114
      %p123 = scmp.eq.s32.totalorder %s17, 1
      %p124 = por %p122, %p123
      %p125 = scmp.ne.s32.totalorder %s114, %s115
      %p126 = scmp.eq.s32.totalorder %s17, 0
      %p127 = por %p125, %p126
      %p128 = scmp.ne.s32.totalorder %s114, %s115
      %p129 = scmp.eq.s32.totalorder %s18, 1
      %p130 = por %p128, %p129
      %p132 = scmp.ne.s32.totalorder %s115, %s131
      %p133 = scmp.eq.s32.totalorder %s18, 0
      %p134 = por %p132, %p133
      %p135 = scmp.le.s32.totalorder 1, %s12
      %p136 = scmp.lt.s32.totalorder %s12, 3
      %p137 = pnand %p135, %p136
      %p138 = pneg %p137
      // Predicated region
      $region9: #{encoder_forward.4} parent=5 // pred_check
        _
      $region10: #{encoder_forward.4} parent=5 // pred_check_branch
        %140 = sbr.rel (%p137) target = $region12
      $region11: #{encoder_forward.4} parent=5 // pred_region
        %s141 = ssub.s32 %s12, 1
        // Predicated region
        $region13: #{encoder_forward.4} parent=11 // pred_check
          %p142 = pneg %p59
        $region14: #{encoder_forward.4} parent=11 // pred_check_branch
          %144 = sbr.rel (%p142) target = $region16
        $region15: #{encoder_forward.4} parent=11 // pred_region
          %s146 = ssub.s32 40960, 40960
          %147 = vsyncadd [#allocation3], %s146
          %s148 = sshll.u32 [#allocation2], 4
          %s149 = int_to_ptr.vmem [resolvable:$true] %s148
          %154 = dma.hbm_to_vmem [thread:$0]  %s1, 40960, %s149, [#allocation3], 256, 256, 16
        $region16: #{encoder_forward.4} parent=11 // pred_fallthru
          _
        // Predicated region
        $region17: #{encoder_forward.4} parent=11 // pred_check
          %p155 = pneg %p80
        $region18: #{encoder_forward.4} parent=11 // pred_check_branch
          %157 = sbr.rel (%p155) target = $region20
        $region19: #{encoder_forward.4} parent=11 // pred_region
          %s159 = ssub.s32 32, 32
          %160 = vsyncadd [#allocation5], %s159
          %s162 = sshll.u32 [#allocation4], 4
          %s163 = int_to_ptr.vmem [resolvable:$true] %s162
          %165 = dma.hbm_to_vmem [thread:$0]  %s2, 32, %s163, [#allocation5]
        $region20: #{encoder_forward.4} parent=11 // pred_fallthru
          _
        // Predicated region
        $region21: #{encoder_forward.4} parent=11 // pred_check
          %p166 = pneg %p101
        $region22: #{encoder_forward.4} parent=11 // pred_check_branch
          %168 = sbr.rel (%p166) target = $region24
        $region23: #{encoder_forward.4} parent=11 // pred_region
          %s170 = ssub.s32 32, 32
          %171 = vsyncadd [#allocation5], %s170
          %s173 = sshll.u32 [#allocation6], 4
          %s174 = int_to_ptr.vmem [resolvable:$true] %s173
          %176 = dma.hbm_to_vmem [thread:$0]  %s3, 32, %s174, [#allocation5]
        $region24: #{encoder_forward.4} parent=11 // pred_fallthru
          _
      $region12: #{encoder_forward.4} parent=5 // pred_fallthru
        _
      %p177 = scmp.lt.s32.totalorder %s12, 2
      // Predicated region
      $region25: #{encoder_forward.4} parent=5 // pred_check
        %p178 = pneg %p177
      $region26: #{encoder_forward.4} parent=5 // pred_check_branch
        %180 = sbr.rel (%p178) target = $region28
      $region27: #{encoder_forward.4} parent=5 // pred_region
        // Predicated region
        $region29: #{encoder_forward.4} parent=27 // pred_check
          %p181 = pneg %p32
        $region30: #{encoder_forward.4} parent=27 // pred_check_branch
          %183 = sbr.rel (%p181) target = $region32
        $region31: #{encoder_forward.4} parent=27 // pred_region
          %p184 = scmp.lt.s32.totalorder %s12, 1
          %s185 = scalar_select %p184, %s12, 1
          %s186 = smul.addr %s185, 10
          %s187 = smul.addr %s186, 8
          %s188 = scalar_lea.vmem %s0, %s187
        $region32: #{encoder_forward.4} parent=27 // pred_fallthru
          _
      $region28: #{encoder_forward.4} parent=5 // pred_fallthru
        _
      %p189 = scmp.le.s32.totalorder 1, %s12
      %p190 = scmp.lt.s32.totalorder %s12, 3
      %p191 = pnand %p189, %p190
      %p192 = pneg %p191
      // Predicated region
      $region33: #{encoder_forward.4} parent=5 // pred_check
        _
      $region34: #{encoder_forward.4} parent=5 // pred_check_branch
        %194 = sbr.rel (%p191) target = $region36
      $region35: #{encoder_forward.4} parent=5 // pred_region
        %s195 = ssub.s32 %s12, 1
        // Predicated region
        $region37: #{encoder_forward.4} parent=35 // pred_check
          %p196 = pneg %p59
        $region38: #{encoder_forward.4} parent=35 // pred_check_branch
          %198 = sbr.rel (%p196) target = $region40
        $region39: #{encoder_forward.4} parent=35 // pred_region
          %199 = dma.done [#allocation3], 40960
        $region40: #{encoder_forward.4} parent=35 // pred_fallthru
          _
        // Predicated region
        $region41: #{encoder_forward.4} parent=35 // pred_check
          %p200 = pneg %p80
        $region42: #{encoder_forward.4} parent=35 // pred_check_branch
          %202 = sbr.rel (%p200) target = $region44
        $region43: #{encoder_forward.4} parent=35 // pred_region
          %203 = dma.done [#allocation5], 32
        $region44: #{encoder_forward.4} parent=35 // pred_fallthru
          _
        // Predicated region
        $region45: #{encoder_forward.4} parent=35 // pred_check
          %p204 = pneg %p101
        $region46: #{encoder_forward.4} parent=35 // pred_check_branch
          %206 = sbr.rel (%p204) target = $region48
        $region47: #{encoder_forward.4} parent=35 // pred_region
          %207 = dma.done [#allocation5], 32
        $region48: #{encoder_forward.4} parent=35 // pred_fallthru
          _
        %p208 = scmp.lt.s32.totalorder %s17, 1
        %s209 = scalar_select %p208, %s17, 1
        %s210 = smul.addr %s209, 10
        %s211 = smul.addr %s210, 8
        %s212 = scalar_lea.vmem %s0, %s211
        %p213 = pneg %p38
        %p214 = pneg %p35
        %p215 = pneg %p59
        %p216 = pneg %p56
        %p217 = pneg %p80
        %p218 = pneg %p77
        %p219 = pneg %p101
        %p220 = pneg %p98
        %p221 = pneg %p127
        %p222 = pneg %p124
        %p223 = scmp.lt.s32.totalorder %s17, 1
        %s224 = scalar_select %p223, %s17, 1
        %s225 = smul.addr %s224, 8
        %s226 = smul.addr %s225, 8
        %s227 = scalar_lea.vmem %s4, %s226
        %p228 = scmp.lt.s32.totalorder %s17, 1
        %s229 = scalar_select %p228, %s17, 1
        %s230 = smul.addr %s229, 10
        %s231 = smul.addr %s230, 8
        %s232 = scalar_lea.vmem %s0, %s231
        %p233 = scmp.lt.s32.totalorder %s17, 1
        %s234 = scalar_select %p233, %s17, 1
        %s235 = smul.addr %s234, 8
        %s236 = smul.addr %s235, 8
        %s237 = scalar_lea.vmem %s4, %s236
        %v238 = vld [vmem:[%s232] sm:$0xff]
        %v239 = vld [vmem:[%s232 + $0x8] sm:$0xff]
        %v240 = vld [vmem:[%s232 + $0x10] sm:$0xff]
        %v241 = vld [vmem:[%s232 + $0x18] sm:$0xff]
        %v242 = vld [vmem:[%s232 + $0x20] sm:$0xff]
        %v243 = vld [vmem:[%s232 + $0x28] sm:$0xff]
        %v244 = vld [vmem:[%s232 + $0x30] sm:$0xff]
        %v245 = vld [vmem:[%s232 + $0x38] sm:$0xff]
        %v246 = vld [vmem:[#allocation2] sm:$0xff]
        %v247 = vld [vmem:[#allocation2 + $0x8] sm:$0xff]
        %v248 = vld [vmem:[#allocation2 + $0x10] sm:$0xff]
        %v249 = vld [vmem:[#allocation2 + $0x18] sm:$0xff]
        %v250 = vld [vmem:[#allocation2 + $0x20] sm:$0xff]
        %v251 = vld [vmem:[#allocation2 + $0x28] sm:$0xff]
        %v252 = vld [vmem:[#allocation2 + $0x30] sm:$0xff]
        %v253 = vld [vmem:[#allocation2 + $0x38] sm:$0xff]
        %v254 = vld [vmem:[#allocation2 + $0x40] sm:$0xff]
        %v255 = vld [vmem:[#allocation2 + $0x48] sm:$0xff]
        %v256 = vld [vmem:[#allocation2 + $0x50] sm:$0xff]
        %v257 = vld [vmem:[#allocation2 + $0x58] sm:$0xff]
        %v258 = vld [vmem:[#allocation2 + $0x60] sm:$0xff]
        %v259 = vld [vmem:[#allocation2 + $0x68] sm:$0xff]
        %v260 = vld [vmem:[#allocation2 + $0x70] sm:$0xff]
        %v261 = vld [vmem:[#allocation2 + $0x78] sm:$0xff]
        %v262 = vld [vmem:[#allocation2 + $0x80] sm:$0xff]
        %v263 = vld [vmem:[#allocation2 + $0x88] sm:$0xff]
        %v264 = vld [vmem:[#allocation2 + $0x90] sm:$0xff]
        %v265 = vld [vmem:[#allocation2 + $0x98] sm:$0xff]
        %v266 = vld [vmem:[#allocation2 + $0xa0] sm:$0xff]
        %v267 = vld [vmem:[#allocation2 + $0xa8] sm:$0xff]
        %v268 = vld [vmem:[#allocation2 + $0xb0] sm:$0xff]
        %v269 = vld [vmem:[#allocation2 + $0xb8] sm:$0xff]
        %v270 = vld [vmem:[#allocation2 + $0xc0] sm:$0xff]
        %v271 = vld [vmem:[#allocation2 + $0xc8] sm:$0xff]
        %v272 = vld [vmem:[#allocation2 + $0xd0] sm:$0xff]
        %v273 = vld [vmem:[#allocation2 + $0xd8] sm:$0xff]
        %v274 = vld [vmem:[#allocation2 + $0xe0] sm:$0xff]
        %v275 = vld [vmem:[#allocation2 + $0xe8] sm:$0xff]
        %v276 = vld [vmem:[#allocation2 + $0xf0] sm:$0xff]
        %v277 = vld [vmem:[#allocation2 + $0xf8] sm:$0xff]
        %v278 = vld [vmem:[#allocation2 + $0x100] sm:$0xff]
        %v279 = vld [vmem:[#allocation2 + $0x108] sm:$0xff]
        %v280 = vld [vmem:[#allocation2 + $0x110] sm:$0xff]
        %v281 = vld [vmem:[#allocation2 + $0x118] sm:$0xff]
        %v282 = vld [vmem:[#allocation2 + $0x120] sm:$0xff]
        %v283 = vld [vmem:[#allocation2 + $0x128] sm:$0xff]
        %v284 = vld [vmem:[#allocation2 + $0x130] sm:$0xff]
        %v285 = vld [vmem:[#allocation2 + $0x138] sm:$0xff]
        %v286 = vld [vmem:[#allocation2 + $0x140] sm:$0xff]
        %v287 = vld [vmem:[#allocation2 + $0x148] sm:$0xff]
        %v288 = vld [vmem:[#allocation2 + $0x150] sm:$0xff]
        %v289 = vld [vmem:[#allocation2 + $0x158] sm:$0xff]
        %v290 = vld [vmem:[#allocation2 + $0x160] sm:$0xff]
        %v291 = vld [vmem:[#allocation2 + $0x168] sm:$0xff]
        %v292 = vld [vmem:[#allocation2 + $0x170] sm:$0xff]
        %v293 = vld [vmem:[#allocation2 + $0x178] sm:$0xff]
        %v294 = vld [vmem:[#allocation2 + $0x180] sm:$0xff]
        %v295 = vld [vmem:[#allocation2 + $0x188] sm:$0xff]
        %v296 = vld [vmem:[#allocation2 + $0x190] sm:$0xff]
        %v297 = vld [vmem:[#allocation2 + $0x198] sm:$0xff]
        %v298 = vld [vmem:[#allocation2 + $0x1a0] sm:$0xff]
        %v299 = vld [vmem:[#allocation2 + $0x1a8] sm:$0xff]
        %v300 = vld [vmem:[#allocation2 + $0x1b0] sm:$0xff]
        %v301 = vld [vmem:[#allocation2 + $0x1b8] sm:$0xff]
        %v302 = vld [vmem:[#allocation2 + $0x1c0] sm:$0xff]
        %v303 = vld [vmem:[#allocation2 + $0x1c8] sm:$0xff]
        %v304 = vld [vmem:[#allocation2 + $0x1d0] sm:$0xff]
        %v305 = vld [vmem:[#allocation2 + $0x1d8] sm:$0xff]
        %v306 = vld [vmem:[#allocation2 + $0x1e0] sm:$0xff]
        %v307 = vld [vmem:[#allocation2 + $0x1e8] sm:$0xff]
        %v308 = vld [vmem:[#allocation2 + $0x1f0] sm:$0xff]
        %v309 = vld [vmem:[#allocation2 + $0x1f8] sm:$0xff]
        %v310 = vld [vmem:[%s232] sm:$0xfe]
        %v311 = vld [vmem:[%s232 + $0x8] sm:$0xfe]
        %v312 = vld [vmem:[%s232 + $0x40] sm:$0x1]
        %v313 = vld [vmem:[%s232 + $0x48] sm:$0x1]
        %s314 = scalar_lea.vmem [#allocation2], 512
        %v315 = vld [vmem:[%s314] sm:$0xff]
        %v316 = vld [vmem:[%s314 + $0x8] sm:$0xff]
        %v317 = vld [vmem:[%s314 + $0x10] sm:$0xff]
        %v318 = vld [vmem:[%s314 + $0x18] sm:$0xff]
        %v319 = vld [vmem:[%s314 + $0x20] sm:$0xff]
        %v320 = vld [vmem:[%s314 + $0x28] sm:$0xff]
        %v321 = vld [vmem:[%s314 + $0x30] sm:$0xff]
        %v322 = vld [vmem:[%s314 + $0x38] sm:$0xff]
        %v323 = vld [vmem:[%s314 + $0x40] sm:$0xff]
        %v324 = vld [vmem:[%s314 + $0x48] sm:$0xff]
        %v325 = vld [vmem:[%s314 + $0x50] sm:$0xff]
        %v326 = vld [vmem:[%s314 + $0x58] sm:$0xff]
        %v327 = vld [vmem:[%s314 + $0x60] sm:$0xff]
        %v328 = vld [vmem:[%s314 + $0x68] sm:$0xff]
        %v329 = vld [vmem:[%s314 + $0x70] sm:$0xff]
        %v330 = vld [vmem:[%s314 + $0x78] sm:$0xff]
        %v331 = vld [vmem:[%s314 + $0x80] sm:$0xff]
        %v332 = vld [vmem:[%s314 + $0x88] sm:$0xff]
        %v333 = vld [vmem:[%s314 + $0x90] sm:$0xff]
        %v334 = vld [vmem:[%s314 + $0x98] sm:$0xff]
        %v335 = vld [vmem:[%s314 + $0xa0] sm:$0xff]
        %v336 = vld [vmem:[%s314 + $0xa8] sm:$0xff]
        %v337 = vld [vmem:[%s314 + $0xb0] sm:$0xff]
        %v338 = vld [vmem:[%s314 + $0xb8] sm:$0xff]
        %v339 = vld [vmem:[%s314 + $0xc0] sm:$0xff]
        %v340 = vld [vmem:[%s314 + $0xc8] sm:$0xff]
        %v341 = vld [vmem:[%s314 + $0xd0] sm:$0xff]
        %v342 = vld [vmem:[%s314 + $0xd8] sm:$0xff]
        %v343 = vld [vmem:[%s314 + $0xe0] sm:$0xff]
        %v344 = vld [vmem:[%s314 + $0xe8] sm:$0xff]
        %v345 = vld [vmem:[%s314 + $0xf0] sm:$0xff]
        %v346 = vld [vmem:[%s314 + $0xf8] sm:$0xff]
        %v347 = vld [vmem:[%s314 + $0x100] sm:$0xff]
        %v348 = vld [vmem:[%s314 + $0x108] sm:$0xff]
        %v349 = vld [vmem:[%s314 + $0x110] sm:$0xff]
        %v350 = vld [vmem:[%s314 + $0x118] sm:$0xff]
        %v351 = vld [vmem:[%s314 + $0x120] sm:$0xff]
        %v352 = vld [vmem:[%s314 + $0x128] sm:$0xff]
        %v353 = vld [vmem:[%s314 + $0x130] sm:$0xff]
        %v354 = vld [vmem:[%s314 + $0x138] sm:$0xff]
        %v355 = vld [vmem:[%s314 + $0x140] sm:$0xff]
        %v356 = vld [vmem:[%s314 + $0x148] sm:$0xff]
        %v357 = vld [vmem:[%s314 + $0x150] sm:$0xff]
        %v358 = vld [vmem:[%s314 + $0x158] sm:$0xff]
        %v359 = vld [vmem:[%s314 + $0x160] sm:$0xff]
        %v360 = vld [vmem:[%s314 + $0x168] sm:$0xff]
        %v361 = vld [vmem:[%s314 + $0x170] sm:$0xff]
        %v362 = vld [vmem:[%s314 + $0x178] sm:$0xff]
        %v363 = vld [vmem:[%s314 + $0x180] sm:$0xff]
        %v364 = vld [vmem:[%s314 + $0x188] sm:$0xff]
        %v365 = vld [vmem:[%s314 + $0x190] sm:$0xff]
        %v366 = vld [vmem:[%s314 + $0x198] sm:$0xff]
        %v367 = vld [vmem:[%s314 + $0x1a0] sm:$0xff]
        %v368 = vld [vmem:[%s314 + $0x1a8] sm:$0xff]
        %v369 = vld [vmem:[%s314 + $0x1b0] sm:$0xff]
        %v370 = vld [vmem:[%s314 + $0x1b8] sm:$0xff]
        %v371 = vld [vmem:[%s314 + $0x1c0] sm:$0xff]
        %v372 = vld [vmem:[%s314 + $0x1c8] sm:$0xff]
        %v373 = vld [vmem:[%s314 + $0x1d0] sm:$0xff]
        %v374 = vld [vmem:[%s314 + $0x1d8] sm:$0xff]
        %v375 = vld [vmem:[%s314 + $0x1e0] sm:$0xff]
        %v376 = vld [vmem:[%s314 + $0x1e8] sm:$0xff]
        %v377 = vld [vmem:[%s314 + $0x1f0] sm:$0xff]
        %v378 = vld [vmem:[%s314 + $0x1f8] sm:$0xff]
        %vm389 = vcmask 1046528
        %v390 = vrot.slane %v310, 1
        %v391 = vrot.slane %v240, 1
        %v392 = vsel %vm389, %v390, %v391
        %v393 = vrot.slane %v311, 1
        %v394 = vrot.slane %v241, 1
        %v395 = vsel %vm389, %v393, %v394
        %v396 = vrot.slane %v242, 1
        %v397 = vsel %vm389, %v391, %v396
        %v398 = vrot.slane %v243, 1
        %v399 = vsel %vm389, %v394, %v398
        %v400 = vrot.slane %v244, 1
        %v401 = vsel %vm389, %v396, %v400
        %v402 = vrot.slane %v245, 1
        %v403 = vsel %vm389, %v398, %v402
        %v404 = vrot.slane %v312, 1
        %v405 = vsel %vm389, %v400, %v404
        %v406 = vrot.slane %v313, 1
        %v407 = vsel %vm389, %v402, %v406
        %416 = vmatprep.subr.mxu0 %v316
        %417 = vmatpush1.msra.mxu0 %v315
        %418 = vmatprep.subr.mxu0 %v318
        %419 = vmatpush1.msra.mxu0 %v317
        %420 = vmatprep.subr.mxu0 %v320
        %421 = vmatpush1.msra.mxu0 %v319
        %422 = vmatprep.subr.mxu0 %v322
        %423 = vmatpush1.msra.mxu0 %v321
        %424 = vmatprep.subr.mxu0 %v324
        %425 = vmatpush1.msra.mxu0 %v323
        %426 = vmatprep.subr.mxu0 %v326
        %427 = vmatpush1.msra.mxu0 %v325
        %428 = vmatprep.subr.mxu0 %v328
        %429 = vmatpush1.msra.mxu0 %v327
        %430 = vmatprep.subr.mxu0 %v330
        %431 = vmatpush1.msra.mxu0 %v329
        %432 = vmatprep.subr.mxu0 %v332
        %433 = vmatpush1.msra.mxu0 %v331
        %434 = vmatprep.subr.mxu0 %v334
        %435 = vmatpush1.msra.mxu0 %v333
        %436 = vmatprep.subr.mxu0 %v336
        %437 = vmatpush1.msra.mxu0 %v335
        %438 = vmatprep.subr.mxu0 %v338
        %439 = vmatpush1.msra.mxu0 %v337
        %440 = vmatprep.subr.mxu0 %v340
        %441 = vmatpush1.msra.mxu0 %v339
        %442 = vmatprep.subr.mxu0 %v342
        %443 = vmatpush1.msra.mxu0 %v341
        %444 = vmatprep.subr.mxu0 %v344
        %445 = vmatpush1.msra.mxu0 %v343
        %446 = vmatprep.subr.mxu0 %v346
        %447 = vmatpush1.msra.mxu0 %v345
        %448 = vmatprep.subr.mxu0 %v348
        %449 = vmatpush1.msra.mxu0 %v347
        %450 = vmatprep.subr.mxu0 %v350
        %451 = vmatpush1.msra.mxu0 %v349
        %452 = vmatprep.subr.mxu0 %v352
        %453 = vmatpush1.msra.mxu0 %v351
        %454 = vmatprep.subr.mxu0 %v354
        %455 = vmatpush1.msra.mxu0 %v353
        %456 = vmatprep.subr.mxu0 %v356
        %457 = vmatpush1.msra.mxu0 %v355
        %458 = vmatprep.subr.mxu0 %v358
        %459 = vmatpush1.msra.mxu0 %v357
        %460 = vmatprep.subr.mxu0 %v360
        %461 = vmatpush1.msra.mxu0 %v359
        %462 = vmatprep.subr.mxu0 %v362
        %463 = vmatpush1.msra.mxu0 %v361
        %464 = vmatprep.subr.mxu0 %v364
        %465 = vmatpush1.msra.mxu0 %v363
        %466 = vmatprep.subr.mxu0 %v366
        %467 = vmatpush1.msra.mxu0 %v365
        %468 = vmatprep.subr.mxu0 %v368
        %469 = vmatpush1.msra.mxu0 %v367
        %470 = vmatprep.subr.mxu0 %v370
        %471 = vmatpush1.msra.mxu0 %v369
        %472 = vmatprep.subr.mxu0 %v372
        %473 = vmatpush1.msra.mxu0 %v371
        %474 = vmatprep.subr.mxu0 %v374
        %475 = vmatpush1.msra.mxu0 %v373
        %476 = vmatprep.subr.mxu0 %v376
        %477 = vmatpush1.msra.mxu0 %v375
        %478 = vmatprep.subr.mxu0 %v378
        %479 = vmatpush1.msra.mxu0 %v377
        %480 = vmatprep.mubr.f32.mxu0 %v395
        %481 = vmatmul.mubr.f32.gmra.mrb[0].mxu0 %v392
        %v482 = vpop.f32.mrb[0].mxu0
        %v483 = vadd.f32 0.0, %v482
        %v484 = vpop.f32.mrb[0].mxu0
        %v485 = vadd.f32 0.0, %v484
        %486 = vmatprep.mubr.f32.mxu0 %v399
        %487 = vmatmul.mubr.f32.gmra.mrb[0].mxu0 %v397
        %v488 = vpop.f32.mrb[0].mxu0
        %v489 = vadd.f32 0.0, %v488
        %v490 = vpop.f32.mrb[0].mxu0
        %v491 = vadd.f32 0.0, %v490
        %492 = vmatprep.mubr.f32.mxu0 %v403
        %493 = vmatmul.mubr.f32.gmra.mrb[0].mxu0 %v401
        %v494 = vpop.f32.mrb[0].mxu0
        %v495 = vadd.f32 0.0, %v494
        %v496 = vpop.f32.mrb[0].mxu0
        %v497 = vadd.f32 0.0, %v496
        %498 = vmatprep.mubr.f32.mxu0 %v407
        %499 = vmatmul.mubr.f32.gmra.mrb[0].mxu0 %v405
        %v500 = vpop.f32.mrb[0].mxu0
        %v501 = vadd.f32 0.0, %v500
        %v502 = vpop.f32.mrb[0].mxu0
        %v503 = vadd.f32 0.0, %v502
        %504 = vdwg.mxu0
        %505 = vmatprep.subr.mxu0 %v247
        %506 = vmatpush1.msra.mxu0 %v246
        %507 = vmatprep.subr.mxu0 %v249
        %508 = vmatpush1.msra.mxu0 %v248
        %509 = vmatprep.subr.mxu0 %v251
        %510 = vmatpush1.msra.mxu0 %v250
        %511 = vmatprep.subr.mxu0 %v253
        %512 = vmatpush1.msra.mxu0 %v252
        %513 = vmatprep.subr.mxu0 %v255
        %514 = vmatpush1.msra.mxu0 %v254
        %515 = vmatprep.subr.mxu0 %v257
        %516 = vmatpush1.msra.mxu0 %v256
        %517 = vmatprep.subr.mxu0 %v259
        %518 = vmatpush1.msra.mxu0 %v258
        %519 = vmatprep.subr.mxu0 %v261
        %520 = vmatpush1.msra.mxu0 %v260
        %521 = vmatprep.subr.mxu0 %v263
        %522 = vmatpush1.msra.mxu0 %v262
        %523 = vmatprep.subr.mxu0 %v265
        %524 = vmatpush1.msra.mxu0 %v264
        %525 = vmatprep.subr.mxu0 %v267
        %526 = vmatpush1.msra.mxu0 %v266
        %527 = vmatprep.subr.mxu0 %v269
        %528 = vmatpush1.msra.mxu0 %v268
        %529 = vmatprep.subr.mxu0 %v271
        %530 = vmatpush1.msra.mxu0 %v270
        %531 = vmatprep.subr.mxu0 %v273
        %532 = vmatpush1.msra.mxu0 %v272
        %533 = vmatprep.subr.mxu0 %v275
        %534 = vmatpush1.msra.mxu0 %v274
        %535 = vmatprep.subr.mxu0 %v277
        %536 = vmatpush1.msra.mxu0 %v276
        %537 = vmatprep.subr.mxu0 %v279
        %538 = vmatpush1.msra.mxu0 %v278
        %539 = vmatprep.subr.mxu0 %v281
        %540 = vmatpush1.msra.mxu0 %v280
        %541 = vmatprep.subr.mxu0 %v283
        %542 = vmatpush1.msra.mxu0 %v282
        %543 = vmatprep.subr.mxu0 %v285
        %544 = vmatpush1.msra.mxu0 %v284
        %545 = vmatprep.subr.mxu0 %v287
        %546 = vmatpush1.msra.mxu0 %v286
        %547 = vmatprep.subr.mxu0 %v289
        %548 = vmatpush1.msra.mxu0 %v288
        %549 = vmatprep.subr.mxu0 %v291
        %550 = vmatpush1.msra.mxu0 %v290
        %551 = vmatprep.subr.mxu0 %v293
        %552 = vmatpush1.msra.mxu0 %v292
        %553 = vmatprep.subr.mxu0 %v295
        %554 = vmatpush1.msra.mxu0 %v294
        %555 = vmatprep.subr.mxu0 %v297
        %556 = vmatpush1.msra.mxu0 %v296
        %557 = vmatprep.subr.mxu0 %v299
        %558 = vmatpush1.msra.mxu0 %v298
        %559 = vmatprep.subr.mxu0 %v301
        %560 = vmatpush1.msra.mxu0 %v300
        %561 = vmatprep.subr.mxu0 %v303
        %562 = vmatpush1.msra.mxu0 %v302
        %563 = vmatprep.subr.mxu0 %v305
        %564 = vmatpush1.msra.mxu0 %v304
        %565 = vmatprep.subr.mxu0 %v307
        %566 = vmatpush1.msra.mxu0 %v306
        %567 = vmatprep.subr.mxu0 %v309
        %568 = vmatpush1.msra.mxu0 %v308
        %569 = vmatprep.mubr.f32.mxu0 %v239
        %570 = vmatmul.mubr.f32.gmra.mrb[0].mxu0 %v238
        %v571 = vpop.f32.mrb[0].mxu0
        %v572 = vadd.f32 %v483, %v571
        %v573 = vpop.f32.mrb[0].mxu0
        %v574 = vadd.f32 %v485, %v573
        %575 = vmatprep.mubr.f32.mxu0 %v241
        %576 = vmatmul.mubr.f32.gmra.mrb[0].mxu0 %v240
        %v577 = vpop.f32.mrb[0].mxu0
        %v578 = vadd.f32 %v489, %v577
        %v579 = vpop.f32.mrb[0].mxu0
        %v580 = vadd.f32 %v491, %v579
        %581 = vmatprep.mubr.f32.mxu0 %v243
        %582 = vmatmul.mubr.f32.gmra.mrb[0].mxu0 %v242
        %v583 = vpop.f32.mrb[0].mxu0
        %v584 = vadd.f32 %v495, %v583
        %v585 = vpop.f32.mrb[0].mxu0
        %v586 = vadd.f32 %v497, %v585
        %587 = vmatprep.mubr.f32.mxu0 %v245
        %588 = vmatmul.mubr.f32.gmra.mrb[0].mxu0 %v244
        %v589 = vpop.f32.mrb[0].mxu0
        %v590 = vadd.f32 %v501, %v589
        %v591 = vpop.f32.mrb[0].mxu0
        %v592 = vadd.f32 %v503, %v591
        %593 = vdwg.mxu0
        %v594 = vld [vmem:[%s232] sm:$0xfc]
        %v595 = vld [vmem:[%s232 + $0x8] sm:$0xfc]
        %v596 = vld [vmem:[%s232 + $0x40] sm:$0x3]
        %v597 = vld [vmem:[%s232 + $0x48] sm:$0x3]
        %s598 = scalar_lea.vmem [#allocation2], 1024
        %v599 = vld [vmem:[%s598] sm:$0xff]
        %v600 = vld [vmem:[%s598 + $0x8] sm:$0xff]
        %v601 = vld [vmem:[%s598 + $0x10] sm:$0xff]
        %v602 = vld [vmem:[%s598 + $0x18] sm:$0xff]
        %v603 = vld [vmem:[%s598 + $0x20] sm:$0xff]
        %v604 = vld [vmem:[%s598 + $0x28] sm:$0xff]
        %v605 = vld [vmem:[%s598 + $0x30] sm:$0xff]
        %v606 = vld [vmem:[%s598 + $0x38] sm:$0xff]
        %v607 = vld [vmem:[%s598 + $0x40] sm:$0xff]
        %v608 = vld [vmem:[%s598 + $0x48] sm:$0xff]
        %v609 = vld [vmem:[%s598 + $0x50] sm:$0xff]
        %v610 = vld [vmem:[%s598 + $0x58] sm:$0xff]
        %v611 = vld [vmem:[%s598 + $0x60] sm:$0xff]
        %v612 = vld [vmem:[%s598 + $0x68] sm:$0xff]
        %v613 = vld [vmem:[%s598 + $0x70] sm:$0xff]
        %v614 = vld [vmem:[%s598 + $0x78] sm:$0xff]
        %v615 = vld [vmem:[%s598 + $0x80] sm:$0xff]
        %v616 = vld [vmem:[%s598 + $0x88] sm:$0xff]
        %v617 = vld [vmem:[%s598 + $0x90] sm:$0xff]
        %v618 = vld [vmem:[%s598 + $0x98] sm:$0xff]
        %v619 = vld [vmem:[%s598 + $0xa0] sm:$0xff]
        %v620 = vld [vmem:[%s598 + $0xa8] sm:$0xff]
        %v621 = vld [vmem:[%s598 + $0xb0] sm:$0xff]
        %v622 = vld [vmem:[%s598 + $0xb8] sm:$0xff]
        %v623 = vld [vmem:[%s598 + $0xc0] sm:$0xff]
        %v624 = vld [vmem:[%s598 + $0xc8] sm:$0xff]
        %v625 = vld [vmem:[%s598 + $0xd0] sm:$0xff]
        %v626 = vld [vmem:[%s598 + $0xd8] sm:$0xff]
        %v627 = vld [vmem:[%s598 + $0xe0] sm:$0xff]
        %v628 = vld [vmem:[%s598 + $0xe8] sm:$0xff]
        %v629 = vld [vmem:[%s598 + $0xf0] sm:$0xff]
        %v630 = vld [vmem:[%s598 + $0xf8] sm:$0xff]
        %v631 = vld [vmem:[%s598 + $0x100] sm:$0xff]
        %v632 = vld [vmem:[%s598 + $0x108] sm:$0xff]
        %v633 = vld [vmem:[%s598 + $0x110] sm:$0xff]
        %v634 = vld [vmem:[%s598 + $0x118] sm:$0xff]
        %v635 = vld [vmem:[%s598 + $0x120] sm:$0xff]
        %v636 = vld [vmem:[%s598 + $0x128] sm:$0xff]
        %v637 = vld [vmem:[%s598 + $0x130] sm:$0xff]
        %v638 = vld [vmem:[%s598 + $0x138] sm:$0xff]
        %v639 = vld [vmem:[%s598 + $0x140] sm:$0xff]
        %v640 = vld [vmem:[%s598 + $0x148] sm:$0xff]
        %v641 = vld [vmem:[%s598 + $0x150] sm:$0xff]
        %v642 = vld [vmem:[%s598 + $0x158] sm:$0xff]
        %v643 = vld [vmem:[%s598 + $0x160] sm:$0xff]
        %v644 = vld [vmem:[%s598 + $0x168] sm:$0xff]
        %v645 = vld [vmem:[%s598 + $0x170] sm:$0xff]
        %v646 = vld [vmem:[%s598 + $0x178] sm:$0xff]
        %v647 = vld [vmem:[%s598 + $0x180] sm:$0xff]
        %v648 = vld [vmem:[%s598 + $0x188] sm:$0xff]
        %v649 = vld [vmem:[%s598 + $0x190] sm:$0xff]
        %v650 = vld [vmem:[%s598 + $0x198] sm:$0xff]
        %v651 = vld [vmem:[%s598 + $0x1a0] sm:$0xff]
        %v652 = vld [vmem:[%s598 + $0x1a8] sm:$0xff]
        %v653 = vld [vmem:[%s598 + $0x1b0] sm:$0xff]
        %v654 = vld [vmem:[%s598 + $0x1b8] sm:$0xff]
        %v655 = vld [vmem:[%s598 + $0x1c0] sm:$0xff]
        %v656 = vld [vmem:[%s598 + $0x1c8] sm:$0xff]
        %v657 = vld [vmem:[%s598 + $0x1d0] sm:$0xff]
        %v658 = vld [vmem:[%s598 + $0x1d8] sm:$0xff]
        %v659 = vld [vmem:[%s598 + $0x1e0] sm:$0xff]
        %v660 = vld [vmem:[%s598 + $0x1e8] sm:$0xff]
        %v661 = vld [vmem:[%s598 + $0x1f0] sm:$0xff]
        %v662 = vld [vmem:[%s598 + $0x1f8] sm:$0xff]
        %vm667 = vcmask 1045504
        %v668 = vrot.slane %v594, 2
        %v669 = vrot.slane %v240, 2
        %v670 = vsel %vm667, %v668, %v669
        %v671 = vrot.slane %v595, 2
        %v672 = vrot.slane %v241, 2
        %v673 = vsel %vm667, %v671, %v672
        %v674 = vrot.slane %v242, 2
        %v675 = vsel %vm667, %v669, %v674
        %v676 = vrot.slane %v243, 2
        %v677 = vsel %vm667, %v672, %v676
        %v678 = vrot.slane %v244, 2
        %v679 = vsel %vm667, %v674, %v678
        %v680 = vrot.slane %v245, 2
        %v681 = vsel %vm667, %v676, %v680
        %v682 = vrot.slane %v596, 2
        %v683 = vsel %vm667, %v678, %v682
        %v684 = vrot.slane %v597, 2
        %v685 = vsel %vm667, %v680, %v684
        %694 = vmatprep.subr.mxu0 %v600
        %695 = vmatpush1.msra.mxu0 %v599
        %696 = vmatprep.subr.mxu0 %v602
        %697 = vmatpush1.msra.mxu0 %v601
        %698 = vmatprep.subr.mxu0 %v604
        %699 = vmatpush1.msra.mxu0 %v603
        %700 = vmatprep.subr.mxu0 %v606
        %701 = vmatpush1.msra.mxu0 %v605
        %702 = vmatprep.subr.mxu0 %v608
        %703 = vmatpush1.msra.mxu0 %v607
        %704 = vmatprep.subr.mxu0 %v610
        %705 = vmatpush1.msra.mxu0 %v609
        %706 = vmatprep.subr.mxu0 %v612
        %707 = vmatpush1.msra.mxu0 %v611
        %708 = vmatprep.subr.mxu0 %v614
        %709 = vmatpush1.msra.mxu0 %v613
        %710 = vmatprep.subr.mxu0 %v616
        %711 = vmatpush1.msra.mxu0 %v615
        %712 = vmatprep.subr.mxu0 %v618
        %713 = vmatpush1.msra.mxu0 %v617
        %714 = vmatprep.subr.mxu0 %v620
        %715 = vmatpush1.msra.mxu0 %v619
        %716 = vmatprep.subr.mxu0 %v622
        %717 = vmatpush1.msra.mxu0 %v621
        %718 = vmatprep.subr.mxu0 %v624
        %719 = vmatpush1.msra.mxu0 %v623
        %720 = vmatprep.subr.mxu0 %v626
        %721 = vmatpush1.msra.mxu0 %v625
        %722 = vmatprep.subr.mxu0 %v628
        %723 = vmatpush1.msra.mxu0 %v627
        %724 = vmatprep.subr.mxu0 %v630
        %725 = vmatpush1.msra.mxu0 %v629
        %726 = vmatprep.subr.mxu0 %v632
        %727 = vmatpush1.msra.mxu0 %v631
        %728 = vmatprep.subr.mxu0 %v634
        %729 = vmatpush1.msra.mxu0 %v633
        %730 = vmatprep.subr.mxu0 %v636
        %731 = vmatpush1.msra.mxu0 %v635
        %732 = vmatprep.subr.mxu0 %v638
        %733 = vmatpush1.msra.mxu0 %v637
        %734 = vmatprep.subr.mxu0 %v640
        %735 = vmatpush1.msra.mxu0 %v639
        %736 = vmatprep.subr.mxu0 %v642
        %737 = vmatpush1.msra.mxu0 %v641
        %738 = vmatprep.subr.mxu0 %v644
        %739 = vmatpush1.msra.mxu0 %v643
        %740 = vmatprep.subr.mxu0 %v646
        %741 = vmatpush1.msra.mxu0 %v645
        %742 = vmatprep.subr.mxu0 %v648
        %743 = vmatpush1.msra.mxu0 %v647
        %744 = vmatprep.subr.mxu0 %v650
        %745 = vmatpush1.msra.mxu0 %v649
        %746 = vmatprep.subr.mxu0 %v652
        %747 = vmatpush1.msra.mxu0 %v651
        %748 = vmatprep.subr.mxu0 %v654
        %749 = vmatpush1.msra.mxu0 %v653
        %750 = vmatprep.subr.mxu0 %v656
        %751 = vmatpush1.msra.mxu0 %v655
        %752 = vmatprep.subr.mxu0 %v658
        %753 = vmatpush1.msra.mxu0 %v657
        %754 = vmatprep.subr.mxu0 %v660
        %755 = vmatpush1.msra.mxu0 %v659
        %756 = vmatprep.subr.mxu0 %v662
        %757 = vmatpush1.msra.mxu0 %v661
        %758 = vmatprep.mubr.f32.mxu0 %v673
        %759 = vmatmul.mubr.f32.gmra.mrb[0].mxu0 %v670
        %v760 = vpop.f32.mrb[0].mxu0
        %v761 = vadd.f32 0.0, %v760
        %v762 = vpop.f32.mrb[0].mxu0
        %v763 = vadd.f32 0.0, %v762
        %764 = vmatprep.mubr.f32.mxu0 %v677
        %765 = vmatmul.mubr.f32.gmra.mrb[0].mxu0 %v675
        %v766 = vpop.f32.mrb[0].mxu0
        %v767 = vadd.f32 0.0, %v766
        %v768 = vpop.f32.mrb[0].mxu0
        %v769 = vadd.f32 0.0, %v768
        %770 = vmatprep.mubr.f32.mxu0 %v681
        %771 = vmatmul.mubr.f32.gmra.mrb[0].mxu0 %v679
        %v772 = vpop.f32.mrb[0].mxu0
        %v773 = vadd.f32 0.0, %v772
        %v774 = vpop.f32.mrb[0].mxu0
        %v775 = vadd.f32 0.0, %v774
        %776 = vmatprep.mubr.f32.mxu0 %v685
        %777 = vmatmul.mubr.f32.gmra.mrb[0].mxu0 %v683
        %v778 = vpop.f32.mrb[0].mxu0
        %v779 = vadd.f32 0.0, %v778
        %v780 = vpop.f32.mrb[0].mxu0
        %v781 = vadd.f32 0.0, %v780
        %782 = vdwg.mxu0
        %v783 = vadd.f32 %v572, %v761
        %v784 = vadd.f32 %v574, %v763
        %v785 = vadd.f32 %v578, %v767
        %v786 = vadd.f32 %v580, %v769
        %v787 = vadd.f32 %v584, %v773
        %v788 = vadd.f32 %v586, %v775
        %v789 = vadd.f32 %v590, %v779
        %v790 = vadd.f32 %v592, %v781
        %v791 = vld [vmem:[%s232] sm:$0xf8]
        %v792 = vld [vmem:[%s232 + $0x8] sm:$0xf8]
        %v793 = vld [vmem:[%s232 + $0x40] sm:$0x7]
        %v794 = vld [vmem:[%s232 + $0x48] sm:$0x7]
        %s795 = scalar_lea.vmem [#allocation2], 1536
        %v796 = vld [vmem:[%s795] sm:$0xff]
        %v797 = vld [vmem:[%s795 + $0x8] sm:$0xff]
        %v798 = vld [vmem:[%s795 + $0x10] sm:$0xff]
        %v799 = vld [vmem:[%s795 + $0x18] sm:$0xff]
        %v800 = vld [vmem:[%s795 + $0x20] sm:$0xff]
        %v801 = vld [vmem:[%s795 + $0x28] sm:$0xff]
        %v802 = vld [vmem:[%s795 + $0x30] sm:$0xff]
        %v803 = vld [vmem:[%s795 + $0x38] sm:$0xff]
        %v804 = vld [vmem:[%s795 + $0x40] sm:$0xff]
        %v805 = vld [vmem:[%s795 + $0x48] sm:$0xff]
        %v806 = vld [vmem:[%s795 + $0x50] sm:$0xff]
        %v807 = vld [vmem:[%s795 + $0x58] sm:$0xff]
        %v808 = vld [vmem:[%s795 + $0x60] sm:$0xff]
        %v809 = vld [vmem:[%s795 + $0x68] sm:$0xff]
        %v810 = vld [vmem:[%s795 + $0x70] sm:$0xff]
        %v811 = vld [vmem:[%s795 + $0x78] sm:$0xff]
        %v812 = vld [vmem:[%s795 + $0x80] sm:$0xff]
        %v813 = vld [vmem:[%s795 + $0x88] sm:$0xff]
        %v814 = vld [vmem:[%s795 + $0x90] sm:$0xff]
        %v815 = vld [vmem:[%s795 + $0x98] sm:$0xff]
        %v816 = vld [vmem:[%s795 + $0xa0] sm:$0xff]
        %v817 = vld [vmem:[%s795 + $0xa8] sm:$0xff]
        %v818 = vld [vmem:[%s795 + $0xb0] sm:$0xff]
        %v819 = vld [vmem:[%s795 + $0xb8] sm:$0xff]
        %v820 = vld [vmem:[%s795 + $0xc0] sm:$0xff]
        %v821 = vld [vmem:[%s795 + $0xc8] sm:$0xff]
        %v822 = vld [vmem:[%s795 + $0xd0] sm:$0xff]
        %v823 = vld [vmem:[%s795 + $0xd8] sm:$0xff]
        %v824 = vld [vmem:[%s795 + $0xe0] sm:$0xff]
        %v825 = vld [vmem:[%s795 + $0xe8] sm:$0xff]
        %v826 = vld [vmem:[%s795 + $0xf0] sm:$0xff]
        %v827 = vld [vmem:[%s795 + $0xf8] sm:$0xff]
        %v828 = vld [vmem:[%s795 + $0x100] sm:$0xff]
        %v829 = vld [vmem:[%s795 + $0x108] sm:$0xff]
        %v830 = vld [vmem:[%s795 + $0x110] sm:$0xff]
        %v831 = vld [vmem:[%s795 + $0x118] sm:$0xff]
        %v832 = vld [vmem:[%s795 + $0x120] sm:$0xff]
        %v833 = vld [vmem:[%s795 + $0x128] sm:$0xff]
        %v834 = vld [vmem:[%s795 + $0x130] sm:$0xff]
        %v835 = vld [vmem:[%s795 + $0x138] sm:$0xff]
        %v836 = vld [vmem:[%s795 + $0x140] sm:$0xff]
        %v837 = vld [vmem:[%s795 + $0x148] sm:$0xff]
        %v838 = vld [vmem:[%s795 + $0x150] sm:$0xff]
        %v839 = vld [vmem:[%s795 + $0x158] sm:$0xff]
        %v840 = vld [vmem:[%s795 + $0x160] sm:$0xff]
        %v841 = vld [vmem:[%s795 + $0x168] sm:$0xff]
        %v842 = vld [vmem:[%s795 + $0x170] sm:$0xff]
        %v843 = vld [vmem:[%s795 + $0x178] sm:$0xff]
        %v844 = vld [vmem:[%s795 + $0x180] sm:$0xff]
        %v845 = vld [vmem:[%s795 + $0x188] sm:$0xff]
        %v846 = vld [vmem:[%s795 + $0x190] sm:$0xff]
        %v847 = vld [vmem:[%s795 + $0x198] sm:$0xff]
        %v848 = vld [vmem:[%s795 + $0x1a0] sm:$0xff]
        %v849 = vld [vmem:[%s795 + $0x1a8] sm:$0xff]
        %v850 = vld [vmem:[%s795 + $0x1b0] sm:$0xff]
        %v851 = vld [vmem:[%s795 + $0x1b8] sm:$0xff]
        %v852 = vld [vmem:[%s795 + $0x1c0] sm:$0xff]
        %v853 = vld [vmem:[%s795 + $0x1c8] sm:$0xff]
        %v854 = vld [vmem:[%s795 + $0x1d0] sm:$0xff]
        %v855 = vld [vmem:[%s795 + $0x1d8] sm:$0xff]
        %v856 = vld [vmem:[%s795 + $0x1e0] sm:$0xff]
        %v857 = vld [vmem:[%s795 + $0x1e8] sm:$0xff]
        %v858 = vld [vmem:[%s795 + $0x1f0] sm:$0xff]
        %v859 = vld [vmem:[%s795 + $0x1f8] sm:$0xff]
        %vm864 = vcmask 1044480
        %v865 = vrot.slane %v791, 3
        %v866 = vrot.slane %v240, 3
        %v867 = vsel %vm864, %v865, %v866
        %v868 = vrot.slane %v792, 3
        %v869 = vrot.slane %v241, 3
        %v870 = vsel %vm864, %v868, %v869
        %v871 = vrot.slane %v242, 3
        %v872 = vsel %vm864, %v866, %v871
        %v873 = vrot.slane %v243, 3
        %v874 = vsel %vm864, %v869, %v873
        %v875 = vrot.slane %v244, 3
        %v876 = vsel %vm864, %v871, %v875
        %v877 = vrot.slane %v245, 3
        %v878 = vsel %vm864, %v873, %v877
        %v879 = vrot.slane %v793, 3
        %v880 = vsel %vm864, %v875, %v879
        %v881 = vrot.slane %v794, 3
        %v882 = vsel %vm864, %v877, %v881
        %891 = vmatprep.subr.mxu0 %v797
        %892 = vmatpush1.msra.mxu0 %v796
        %893 = vmatprep.subr.mxu0 %v799
        %894 = vmatpush1.msra.mxu0 %v798
        %895 = vmatprep.subr.mxu0 %v801
        %896 = vmatpush1.msra.mxu0 %v800
        %897 = vmatprep.subr.mxu0 %v803
        %898 = vmatpush1.msra.mxu0 %v802
        %899 = vmatprep.subr.mxu0 %v805
        %900 = vmatpush1.msra.mxu0 %v804
        %901 = vmatprep.subr.mxu0 %v807
        %902 = vmatpush1.msra.mxu0 %v806
        %903 = vmatprep.subr.mxu0 %v809
        %904 = vmatpush1.msra.mxu0 %v808
        %905 = vmatprep.subr.mxu0 %v811
        %906 = vmatpush1.msra.mxu0 %v810
        %907 = vmatprep.subr.mxu0 %v813
        %908 = vmatpush1.msra.mxu0 %v812
        %909 = vmatprep.subr.mxu0 %v815
        %910 = vmatpush1.msra.mxu0 %v814
        %911 = vmatprep.subr.mxu0 %v817
        %912 = vmatpush1.msra.mxu0 %v816
        %913 = vmatprep.subr.mxu0 %v819
        %914 = vmatpush1.msra.mxu0 %v818
        %915 = vmatprep.subr.mxu0 %v821
        %916 = vmatpush1.msra.mxu0 %v820
        %917 = vmatprep.subr.mxu0 %v823
        %918 = vmatpush1.msra.mxu0 %v822
        %919 = vmatprep.subr.mxu0 %v825
        %920 = vmatpush1.msra.mxu0 %v824
        %921 = vmatprep.subr.mxu0 %v827
        %922 = vmatpush1.msra.mxu0 %v826
        %923 = vmatprep.subr.mxu0 %v829
        %924 = vmatpush1.msra.mxu0 %v828
        %925 = vmatprep.subr.mxu0 %v831
        %926 = vmatpush1.msra.mxu0 %v830
        %927 = vmatprep.subr.mxu0 %v833
        %928 = vmatpush1.msra.mxu0 %v832
        %929 = vmatprep.subr.mxu0 %v835
        %930 = vmatpush1.msra.mxu0 %v834
        %931 = vmatprep.subr.mxu0 %v837
        %932 = vmatpush1.msra.mxu0 %v836
        %933 = vmatprep.subr.mxu0 %v839
        %934 = vmatpush1.msra.mxu0 %v838
        %935 = vmatprep.subr.mxu0 %v841
        %936 = vmatpush1.msra.mxu0 %v840
        %937 = vmatprep.subr.mxu0 %v843
        %938 = vmatpush1.msra.mxu0 %v842
        %939 = vmatprep.subr.mxu0 %v845
        %940 = vmatpush1.msra.mxu0 %v844
        %941 = vmatprep.subr.mxu0 %v847
        %942 = vmatpush1.msra.mxu0 %v846
        %943 = vmatprep.subr.mxu0 %v849
        %944 = vmatpush1.msra.mxu0 %v848
        %945 = vmatprep.subr.mxu0 %v851
        %946 = vmatpush1.msra.mxu0 %v850
        %947 = vmatprep.subr.mxu0 %v853
        %948 = vmatpush1.msra.mxu0 %v852
        %949 = vmatprep.subr.mxu0 %v855
        %950 = vmatpush1.msra.mxu0 %v854
        %951 = vmatprep.subr.mxu0 %v857
        %952 = vmatpush1.msra.mxu0 %v856
        %953 = vmatprep.subr.mxu0 %v859
        %954 = vmatpush1.msra.mxu0 %v858
        %955 = vmatprep.mubr.f32.mxu0 %v870
        %956 = vmatmul.mubr.f32.gmra.mrb[0].mxu0 %v867
        %v957 = vpop.f32.mrb[0].mxu0
        %v958 = vadd.f32 0.0, %v957
        %v959 = vpop.f32.mrb[0].mxu0
        %v960 = vadd.f32 0.0, %v959
        %961 = vmatprep.mubr.f32.mxu0 %v874
        %962 = vmatmul.mubr.f32.gmra.mrb[0].mxu0 %v872
        %v963 = vpop.f32.mrb[0].mxu0
        %v964 = vadd.f32 0.0, %v963
        %v965 = vpop.f32.mrb[0].mxu0
        %v966 = vadd.f32 0.0, %v965
        %967 = vmatprep.mubr.f32.mxu0 %v878
        %968 = vmatmul.mubr.f32.gmra.mrb[0].mxu0 %v876
        %v969 = vpop.f32.mrb[0].mxu0
        %v970 = vadd.f32 0.0, %v969
        %v971 = vpop.f32.mrb[0].mxu0
        %v972 = vadd.f32 0.0, %v971
        %973 = vmatprep.mubr.f32.mxu0 %v882
        %974 = vmatmul.mubr.f32.gmra.mrb[0].mxu0 %v880
        %v975 = vpop.f32.mrb[0].mxu0
        %v976 = vadd.f32 0.0, %v975
        %v977 = vpop.f32.mrb[0].mxu0
        %v978 = vadd.f32 0.0, %v977
        %979 = vdwg.mxu0
        %v980 = vadd.f32 %v783, %v958
        %v981 = vadd.f32 %v784, %v960
        %v982 = vadd.f32 %v785, %v964
        %v983 = vadd.f32 %v786, %v966
        %v984 = vadd.f32 %v787, %v970
        %v985 = vadd.f32 %v788, %v972
        %v986 = vadd.f32 %v789, %v976
        %v987 = vadd.f32 %v790, %v978
        %v988 = vld [vmem:[%s232] sm:$0xf0]
        %v989 = vld [vmem:[%s232 + $0x8] sm:$0xf0]
        %v990 = vld [vmem:[%s232 + $0x40] sm:$0xf]
        %v991 = vld [vmem:[%s232 + $0x48] sm:$0xf]
        %s992 = scalar_lea.vmem [#allocation2], 2048
        %v993 = vld [vmem:[%s992] sm:$0xff]
        %v994 = vld [vmem:[%s992 + $0x8] sm:$0xff]
        %v995 = vld [vmem:[%s992 + $0x10] sm:$0xff]
        %v996 = vld [vmem:[%s992 + $0x18] sm:$0xff]
        %v997 = vld [vmem:[%s992 + $0x20] sm:$0xff]
        %v998 = vld [vmem:[%s992 + $0x28] sm:$0xff]
        %v999 = vld [vmem:[%s992 + $0x30] sm:$0xff]
        %v1000 = vld [vmem:[%s992 + $0x38] sm:$0xff]
        %v1001 = vld [vmem:[%s992 + $0x40] sm:$0xff]
        %v1002 = vld [vmem:[%s992 + $0x48] sm:$0xff]
        %v1003 = vld [vmem:[%s992 + $0x50] sm:$0xff]
        %v1004 = vld [vmem:[%s992 + $0x58] sm:$0xff]
        %v1005 = vld [vmem:[%s992 + $0x60] sm:$0xff]
        %v1006 = vld [vmem:[%s992 + $0x68] sm:$0xff]
        %v1007 = vld [vmem:[%s992 + $0x70] sm:$0xff]
        %v1008 = vld [vmem:[%s992 + $0x78] sm:$0xff]
        %v1009 = vld [vmem:[%s992 + $0x80] sm:$0xff]
        %v1010 = vld [vmem:[%s992 + $0x88] sm:$0xff]
        %v1011 = vld [vmem:[%s992 + $0x90] sm:$0xff]
        %v1012 = vld [vmem:[%s992 + $0x98] sm:$0xff]
        %v1013 = vld [vmem:[%s992 + $0xa0] sm:$0xff]
        %v1014 = vld [vmem:[%s992 + $0xa8] sm:$0xff]
        %v1015 = vld [vmem:[%s992 + $0xb0] sm:$0xff]
        %v1016 = vld [vmem:[%s992 + $0xb8] sm:$0xff]
        %v1017 = vld [vmem:[%s992 + $0xc0] sm:$0xff]
        %v1018 = vld [vmem:[%s992 + $0xc8] sm:$0xff]
        %v1019 = vld [vmem:[%s992 + $0xd0] sm:$0xff]
        %v1020 = vld [vmem:[%s992 + $0xd8] sm:$0xff]
        %v1021 = vld [vmem:[%s992 + $0xe0] sm:$0xff]
        %v1022 = vld [vmem:[%s992 + $0xe8] sm:$0xff]
        %v1023 = vld [vmem:[%s992 + $0xf0] sm:$0xff]
        %v1024 = vld [vmem:[%s992 + $0xf8] sm:$0xff]
        %v1025 = vld [vmem:[%s992 + $0x100] sm:$0xff]
        %v1026 = vld [vmem:[%s992 + $0x108] sm:$0xff]
        %v1027 = vld [vmem:[%s992 + $0x110] sm:$0xff]
        %v1028 = vld [vmem:[%s992 + $0x118] sm:$0xff]
        %v1029 = vld [vmem:[%s992 + $0x120] sm:$0xff]
        %v1030 = vld [vmem:[%s992 + $0x128] sm:$0xff]
        %v1031 = vld [vmem:[%s992 + $0x130] sm:$0xff]
        %v1032 = vld [vmem:[%s992 + $0x138] sm:$0xff]
        %v1033 = vld [vmem:[%s992 + $0x140] sm:$0xff]
        %v1034 = vld [vmem:[%s992 + $0x148] sm:$0xff]
        %v1035 = vld [vmem:[%s992 + $0x150] sm:$0xff]
        %v1036 = vld [vmem:[%s992 + $0x158] sm:$0xff]
        %v1037 = vld [vmem:[%s992 + $0x160] sm:$0xff]
        %v1038 = vld [vmem:[%s992 + $0x168] sm:$0xff]
        %v1039 = vld [vmem:[%s992 + $0x170] sm:$0xff]
        %v1040 = vld [vmem:[%s992 + $0x178] sm:$0xff]
        %v1041 = vld [vmem:[%s992 + $0x180] sm:$0xff]
        %v1042 = vld [vmem:[%s992 + $0x188] sm:$0xff]
        %v1043 = vld [vmem:[%s992 + $0x190] sm:$0xff]
        %v1044 = vld [vmem:[%s992 + $0x198] sm:$0xff]
        %v1045 = vld [vmem:[%s992 + $0x1a0] sm:$0xff]
        %v1046 = vld [vmem:[%s992 + $0x1a8] sm:$0xff]
        %v1047 = vld [vmem:[%s992 + $0x1b0] sm:$0xff]
        %v1048 = vld [vmem:[%s992 + $0x1b8] sm:$0xff]
        %v1049 = vld [vmem:[%s992 + $0x1c0] sm:$0xff]
        %v1050 = vld [vmem:[%s992 + $0x1c8] sm:$0xff]
        %v1051 = vld [vmem:[%s992 + $0x1d0] sm:$0xff]
        %v1052 = vld [vmem:[%s992 + $0x1d8] sm:$0xff]
        %v1053 = vld [vmem:[%s992 + $0x1e0] sm:$0xff]
        %v1054 = vld [vmem:[%s992 + $0x1e8] sm:$0xff]
        %v1055 = vld [vmem:[%s992 + $0x1f0] sm:$0xff]
        %v1056 = vld [vmem:[%s992 + $0x1f8] sm:$0xff]
        %vm1061 = vcmask 1043456
        %v1062 = vrot.slane %v988, 4
        %v1063 = vrot.slane %v240, 4
        %v1064 = vsel %vm1061, %v1062, %v1063
        %v1065 = vrot.slane %v989, 4
        %v1066 = vrot.slane %v241, 4
        %v1067 = vsel %vm1061, %v1065, %v1066
        %v1068 = vrot.slane %v242, 4
        %v1069 = vsel %vm1061, %v1063, %v1068
        %v1070 = vrot.slane %v243, 4
        %v1071 = vsel %vm1061, %v1066, %v1070
        %v1072 = vrot.slane %v244, 4
        %v1073 = vsel %vm1061, %v1068, %v1072
        %v1074 = vrot.slane %v245, 4
        %v1075 = vsel %vm1061, %v1070, %v1074
        %v1076 = vrot.slane %v990, 4
        %v1077 = vsel %vm1061, %v1072, %v1076
        %v1078 = vrot.slane %v991, 4
        %v1079 = vsel %vm1061, %v1074, %v1078
        %1088 = vmatprep.subr.mxu0 %v994
        %1089 = vmatpush1.msra.mxu0 %v993
        %1090 = vmatprep.subr.mxu0 %v996
        %1091 = vmatpush1.msra.mxu0 %v995
        %1092 = vmatprep.subr.mxu0 %v998
        %1093 = vmatpush1.msra.mxu0 %v997
        %1094 = vmatprep.subr.mxu0 %v1000
        %1095 = vmatpush1.msra.mxu0 %v999
        %1096 = vmatprep.subr.mxu0 %v1002
        %1097 = vmatpush1.msra.mxu0 %v1001
        %1098 = vmatprep.subr.mxu0 %v1004
        %1099 = vmatpush1.msra.mxu0 %v1003
        %1100 = vmatprep.subr.mxu0 %v1006
        %1101 = vmatpush1.msra.mxu0 %v1005
        %1102 = vmatprep.subr.mxu0 %v1008
        %1103 = vmatpush1.msra.mxu0 %v1007
        %1104 = vmatprep.subr.mxu0 %v1010
        %1105 = vmatpush1.msra.mxu0 %v1009
        %1106 = vmatprep.subr.mxu0 %v1012
        %1107 = vmatpush1.msra.mxu0 %v1011
        %1108 = vmatprep.subr.mxu0 %v1014
        %1109 = vmatpush1.msra.mxu0 %v1013
        %1110 = vmatprep.subr.mxu0 %v1016
        %1111 = vmatpush1.msra.mxu0 %v1015
        %1112 = vmatprep.subr.mxu0 %v1018
        %1113 = vmatpush1.msra.mxu0 %v1017
        %1114 = vmatprep.subr.mxu0 %v1020
        %1115 = vmatpush1.msra.mxu0 %v1019
        %1116 = vmatprep.subr.mxu0 %v1022
        %1117 = vmatpush1.msra.mxu0 %v1021
        %1118 = vmatprep.subr.mxu0 %v1024
        %1119 = vmatpush1.msra.mxu0 %v1023
        %1120 = vmatprep.subr.mxu0 %v1026
        %1121 = vmatpush1.msra.mxu0 %v1025
        %1122 = vmatprep.subr.mxu0 %v1028
        %1123 = vmatpush1.msra.mxu0 %v1027
        %1124 = vmatprep.subr.mxu0 %v1030
        %1125 = vmatpush1.msra.mxu0 %v1029
        %1126 = vmatprep.subr.mxu0 %v1032
        %1127 = vmatpush1.msra.mxu0 %v1031
        %1128 = vmatprep.subr.mxu0 %v1034
        %1129 = vmatpush1.msra.mxu0 %v1033
        %1130 = vmatprep.subr.mxu0 %v1036
        %1131 = vmatpush1.msra.mxu0 %v1035
        %1132 = vmatprep.subr.mxu0 %v1038
        %1133 = vmatpush1.msra.mxu0 %v1037
        %1134 = vmatprep.subr.mxu0 %v1040
        %1135 = vmatpush1.msra.mxu0 %v1039
        %1136 = vmatprep.subr.mxu0 %v1042
        %1137 = vmatpush1.msra.mxu0 %v1041
        %1138 = vmatprep.subr.mxu0 %v1044
        %1139 = vmatpush1.msra.mxu0 %v1043
        %1140 = vmatprep.subr.mxu0 %v1046
        %1141 = vmatpush1.msra.mxu0 %v1045
        %1142 = vmatprep.subr.mxu0 %v1048
        %1143 = vmatpush1.msra.mxu0 %v1047
        %1144 = vmatprep.subr.mxu0 %v1050
        %1145 = vmatpush1.msra.mxu0 %v1049
        %1146 = vmatprep.subr.mxu0 %v1052
        %1147 = vmatpush1.msra.mxu0 %v1051
        %1148 = vmatprep.subr.mxu0 %v1054
        %1149 = vmatpush1.msra.mxu0 %v1053
        %1150 = vmatprep.subr.mxu0 %v1056
        %1151 = vmatpush1.msra.mxu0 %v1055
        %1152 = vmatprep.mubr.f32.mxu0 %v1067
        %1153 = vmatmul.mubr.f32.gmra.mrb[0].mxu0 %v1064
        %v1154 = vpop.f32.mrb[0].mxu0
        %v1155 = vadd.f32 0.0, %v1154
        %v1156 = vpop.f32.mrb[0].mxu0
        %v1157 = vadd.f32 0.0, %v1156
        %1158 = vmatprep.mubr.f32.mxu0 %v1071
        %1159 = vmatmul.mubr.f32.gmra.mrb[0].mxu0 %v1069
        %v1160 = vpop.f32.mrb[0].mxu0
        %v1161 = vadd.f32 0.0, %v1160
        %v1162 = vpop.f32.mrb[0].mxu0
        %v1163 = vadd.f32 0.0, %v1162
        %1164 = vmatprep.mubr.f32.mxu0 %v1075
        %1165 = vmatmul.mubr.f32.gmra.mrb[0].mxu0 %v1073
        %v1166 = vpop.f32.mrb[0].mxu0
        %v1167 = vadd.f32 0.0, %v1166
        %v1168 = vpop.f32.mrb[0].mxu0
        %v1169 = vadd.f32 0.0, %v1168
        %1170 = vmatprep.mubr.f32.mxu0 %v1079
        %1171 = vmatmul.mubr.f32.gmra.mrb[0].mxu0 %v1077
        %v1172 = vpop.f32.mrb[0].mxu0
        %v1173 = vadd.f32 0.0, %v1172
        %v1174 = vpop.f32.mrb[0].mxu0
        %v1175 = vadd.f32 0.0, %v1174
        %1176 = vdwg.mxu0
        %v1177 = vadd.f32 %v980, %v1155
        %v1178 = vadd.f32 %v981, %v1157
        %v1179 = vadd.f32 %v982, %v1161
        %v1180 = vadd.f32 %v983, %v1163
        %v1181 = vadd.f32 %v984, %v1167
        %v1182 = vadd.f32 %v985, %v1169
        %v1183 = vadd.f32 %v986, %v1173
        %v1184 = vadd.f32 %v987, %v1175
        %v1185 = vld [vmem:[#allocation4] sm:$0x3]
        %v1187 = vlaneseq
        %v1188 = vshrl.u32 %v1187, 7
        %v1189 = vsub.s32 0, %v1188
        %v1190 = vrot.slane %v1185, %v1189
        %v1191 = vlaneseq
        %v1192 = vshrl.u32 %v1191, 7
        %v1193 = vsub.s32 1, %v1192
        %v1194 = vrot.slane %v1185, %v1193
        %v1197 = vmul.f32 %v1177, %v1190
        %v1198 = vmul.f32 %v1178, %v1194
        %v1199 = vmul.f32 %v1179, %v1190
        %v1200 = vmul.f32 %v1180, %v1194
        %v1201 = vmul.f32 %v1181, %v1190
        %v1202 = vmul.f32 %v1182, %v1194
        %v1203 = vmul.f32 %v1183, %v1190
        %v1204 = vmul.f32 %v1184, %v1194
        %v1205 = vld [vmem:[#allocation6] sm:$0x3]
        %v1207 = vlaneseq
        %v1208 = vshrl.u32 %v1207, 7
        %v1209 = vsub.s32 0, %v1208
        %v1210 = vrot.slane %v1205, %v1209
        %v1211 = vlaneseq
        %v1212 = vshrl.u32 %v1211, 7
        %v1213 = vsub.s32 1, %v1212
        %v1214 = vrot.slane %v1205, %v1213
        %v1217 = vadd.f32 %v1197, %v1210
        %v1218 = vadd.f32 %v1198, %v1214
        %v1219 = vadd.f32 %v1199, %v1210
        %v1220 = vadd.f32 %v1200, %v1214
        %v1221 = vadd.f32 %v1201, %v1210
        %v1222 = vadd.f32 %v1202, %v1214
        %v1223 = vadd.f32 %v1203, %v1210
        %v1224 = vadd.f32 %v1204, %v1214
        %v1225 = vmax.f32 %v1217, 0.0
        %v1226 = vmax.f32 %v1218, 0.0
        %v1227 = vmax.f32 %v1219, 0.0
        %v1228 = vmax.f32 %v1220, 0.0
        %v1229 = vmax.f32 %v1221, 0.0
        %v1230 = vmax.f32 %v1222, 0.0
        %v1231 = vmax.f32 %v1223, 0.0
        %v1232 = vmax.f32 %v1224, 0.0
        %1233 = vst [vmem:[%s237] sm:$0xff] %v1225
        %1234 = vst [vmem:[%s237 + $0x8] sm:$0xff] %v1226
        %1235 = vst [vmem:[%s237 + $0x10] sm:$0xff] %v1227
        %1236 = vst [vmem:[%s237 + $0x18] sm:$0xff] %v1228
        %1237 = vst [vmem:[%s237 + $0x20] sm:$0xff] %v1229
        %1238 = vst [vmem:[%s237 + $0x28] sm:$0xff] %v1230
        %1239 = vst [vmem:[%s237 + $0x30] sm:$0xff] %v1231
        %1240 = vst [vmem:[%s237 + $0x38] sm:$0xff] %v1232
        %p1241 = scmp.lt.s32.totalorder %s17, 1
        %s1242 = scalar_select %p1241, %s17, 1
        %s1243 = smul.addr %s1242, 8
        %s1244 = smul.addr %s1243, 8
        %s1245 = scalar_lea.vmem %s4, %s1244
        // Predicated region
        $region49: #{encoder_forward.4} parent=35 // pred_check
          %p1246 = pneg %p124
        $region50: #{encoder_forward.4} parent=35 // pred_check_branch
          %1248 = sbr.rel (%p1246) target = $region52
        $region51: #{encoder_forward.4} parent=35 // pred_region
          _
        $region52: #{encoder_forward.4} parent=35 // pred_fallthru
          _
      $region36: #{encoder_forward.4} parent=5 // pred_fallthru
        _
      %p1249 = scmp.le.s32.totalorder 2, %s12
      // Predicated region
      $region53: #{encoder_forward.4} parent=5 // pred_check
        %p1250 = pneg %p1249
      $region54: #{encoder_forward.4} parent=5 // pred_check_branch
        %1252 = sbr.rel (%p1250) target = $region56
      $region55: #{encoder_forward.4} parent=5 // pred_region
        %s1253 = ssub.s32 %s12, 2
        // Predicated region
        $region57: #{encoder_forward.4} parent=55 // pred_check
          %p1254 = pneg %p130
        $region58: #{encoder_forward.4} parent=55 // pred_check_branch
          %1256 = sbr.rel (%p1254) target = $region60
        $region59: #{encoder_forward.4} parent=55 // pred_region
          %p1257 = scmp.lt.s32.totalorder %s18, 1
          %s1258 = scalar_select %p1257, %s18, 1
          %s1259 = smul.addr %s1258, 8
          %s1260 = smul.addr %s1259, 8
          %s1261 = scalar_lea.vmem %s4, %s1260
        $region60: #{encoder_forward.4} parent=55 // pred_fallthru
          _
      $region56: #{encoder_forward.4} parent=5 // pred_fallthru
        _
    $region6: #{encoder_forward.4} parent=1 // loop_footer
      %s16 = sadd.s32 1, %s12
    $region7: #{encoder_forward.4} parent=1 // loop_footer_branch
      %11 = sbr.rel target = $region3
    $region8: #{encoder_forward.4} parent=1 // loop_exit
      _
    %1262 = vsyncpa [#allocation3], 1
    %s1263 = scalar_lea.sflag [#allocation3], 1
    %1264 = vsyncpa %s1263, 1
    %1265 = vsyncpa [#allocation5], 1

// kernel: encoder_forward.5
$region0: #{encoder_forward.5}
  #allocation0 [shape = 'u32[]', space=smem, size = 0x4, offset = 0x4, fixed_abs, tag = 'smem constant byte address 0x4 - core index']
  #allocation1 [shape = 'u32[144,128]{1,0:T(1,128)}', space=vmem, size = 0x12000, scoped, tag = 'internal scratch']
  %s0 = inlined_call_operand.vmem [shape: f32[2,36,256], index: 0, kind: input, shape index: {}]
  %s1 = inlined_call_operand.vmem [shape: f32[5,256,256], index: 1, kind: input, shape index: {}]
  %s2 = inlined_call_operand.vmem [shape: f32[1,256], index: 2, kind: input, shape index: {}]
  %s3 = inlined_call_operand.vmem [shape: f32[1,256], index: 3, kind: input, shape index: {}]
  %s4 = inlined_call_operand.vmem [shape: f32[2,32,256], index: 4, kind: output, shape index: {}]
  %s5 = sld [smem:[#allocation0]]
  $region49: #{encoder_forward.5} parent=0
    _
  %s7 = ssub.s32 1, %s5
  %s8 = scalar_select 0, %s7, %s5
  loop: start=0, step=1, limit=4
  $region2: #{encoder_forward.5} parent=0 // loop_pre_header
    _
  $region3: #{encoder_forward.5} parent=0 // loop_header
    %s10 = sphi 0, %s14
    %p11 = scmp.ge.s32.totalorder %s10, 4
    %s20 = sphi 0, %s22
    %s23 = sphi 0, %s20
    %s24 = sphi 0, %s23
    %s40 = sphi 0, %s24
    %s44 = sphi 0, %s44
    %s46 = sphi 0, %s44
    %s47 = sphi 0, %s46
    %s61 = sphi 0, %s47
    %s65 = sphi 0, %s65
    %s67 = sphi 0, %s65
    %s68 = sphi 0, %s67
    %s82 = sphi 0, %s68
    %s86 = sphi 0, %s86
    %s88 = sphi 0, %s86
    %s89 = sphi 0, %s88
    %s103 = sphi 0, %s89
    %s109 = sphi 0, %s111
    %s112 = sphi 0, %s109
    %s113 = sphi 0, %s112
    %s129 = sphi 0, %s113
  $region4: #{encoder_forward.5} parent=0 // loop_header_branch
    %13 = sbr.rel (%p11) target = $region8
  $region5: #{encoder_forward.5} parent=0 // loop_body
    %s15 = ssub.s32 %s10, 1
    %s16 = ssub.s32 %s10, 2
    %s17 = sadd.s32 %s10, 1
    %s18 = ssub.s32 %s10, %s17
    %p19 = scmp.eq.s32.totalorder %s18, 0
    %s21 = sadd.s32 %s20, 1
    %s22 = scalar_select %p19, %s20, %s21
    %p25 = pneg %p19
    %p26 = scmp.eq.s32.totalorder %s10, 1
    %p27 = por %p25, %p26
    %p28 = scmp.ne.s32.totalorder %s20, %s23
    %p29 = scmp.eq.s32.totalorder %s10, 0
    %p30 = por %p28, %p29
    %p31 = scmp.ne.s32.totalorder %s20, %s23
    %p32 = scmp.eq.s32.totalorder %s15, 1
    %p33 = por %p31, %p32
    %p34 = scmp.ne.s32.totalorder %s23, %s24
    %p35 = scmp.eq.s32.totalorder %s15, 0
    %p36 = por %p34, %p35
    %p37 = scmp.ne.s32.totalorder %s23, %s24
    %p38 = scmp.eq.s32.totalorder %s16, 1
    %p39 = por %p37, %p38
    %p41 = scmp.ne.s32.totalorder %s24, %s40
    %p42 = scmp.eq.s32.totalorder %s16, 0
    %p43 = por %p41, %p42
    %s45 = sadd.s32 %s44, 1
    %p48 = scmp.eq.s32.totalorder %s10, 1
    %p49 = scmp.ne.s32.totalorder %s44, %s46
    %p50 = scmp.eq.s32.totalorder %s10, 0
    %p51 = por %p49, %p50
    %p52 = scmp.ne.s32.totalorder %s44, %s46
    %p53 = scmp.eq.s32.totalorder %s15, 1
    %p54 = por %p52, %p53
    %p55 = scmp.ne.s32.totalorder %s46, %s47
    %p56 = scmp.eq.s32.totalorder %s15, 0
    %p57 = por %p55, %p56
    %p58 = scmp.ne.s32.totalorder %s46, %s47
    %p59 = scmp.eq.s32.totalorder %s16, 1
    %p60 = por %p58, %p59
    %p62 = scmp.ne.s32.totalorder %s47, %s61
    %p63 = scmp.eq.s32.totalorder %s16, 0
    %p64 = por %p62, %p63
    %s66 = sadd.s32 %s65, 1
    %p69 = scmp.eq.s32.totalorder %s10, 1
    %p70 = scmp.ne.s32.totalorder %s65, %s67
    %p71 = scmp.eq.s32.totalorder %s10, 0
    %p72 = por %p70, %p71
    %p73 = scmp.ne.s32.totalorder %s65, %s67
    %p74 = scmp.eq.s32.totalorder %s15, 1
    %p75 = por %p73, %p74
    %p76 = scmp.ne.s32.totalorder %s67, %s68
    %p77 = scmp.eq.s32.totalorder %s15, 0
    %p78 = por %p76, %p77
    %p79 = scmp.ne.s32.totalorder %s67, %s68
    %p80 = scmp.eq.s32.totalorder %s16, 1
    %p81 = por %p79, %p80
    %p83 = scmp.ne.s32.totalorder %s68, %s82
    %p84 = scmp.eq.s32.totalorder %s16, 0
    %p85 = por %p83, %p84
    %s87 = sadd.s32 %s86, 1
    %p90 = scmp.eq.s32.totalorder %s10, 1
    %p91 = scmp.ne.s32.totalorder %s86, %s88
    %p92 = scmp.eq.s32.totalorder %s10, 0
    %p93 = por %p91, %p92
    %p94 = scmp.ne.s32.totalorder %s86, %s88
    %p95 = scmp.eq.s32.totalorder %s15, 1
    %p96 = por %p94, %p95
    %p97 = scmp.ne.s32.totalorder %s88, %s89
    %p98 = scmp.eq.s32.totalorder %s15, 0
    %p99 = por %p97, %p98
    %p100 = scmp.ne.s32.totalorder %s88, %s89
    %p101 = scmp.eq.s32.totalorder %s16, 1
    %p102 = por %p100, %p101
    %p104 = scmp.ne.s32.totalorder %s89, %s103
    %p105 = scmp.eq.s32.totalorder %s16, 0
    %p106 = por %p104, %p105
    %s107 = ssub.s32 %s10, %s17
    %p108 = scmp.eq.s32.totalorder %s107, 0
    %s110 = sadd.s32 %s109, 1
    %s111 = scalar_select %p108, %s109, %s110
    %p114 = pneg %p108
    %p115 = scmp.eq.s32.totalorder %s10, 1
    %p116 = por %p114, %p115
    %p117 = scmp.ne.s32.totalorder %s109, %s112
    %p118 = scmp.eq.s32.totalorder %s10, 0
    %p119 = por %p117, %p118
    %p120 = scmp.ne.s32.totalorder %s109, %s112
    %p121 = scmp.eq.s32.totalorder %s15, 1
    %p122 = por %p120, %p121
    %p123 = scmp.ne.s32.totalorder %s112, %s113
    %p124 = scmp.eq.s32.totalorder %s15, 0
    %p125 = por %p123, %p124
    %p126 = scmp.ne.s32.totalorder %s112, %s113
    %p127 = scmp.eq.s32.totalorder %s16, 1
    %p128 = por %p126, %p127
    %p130 = scmp.ne.s32.totalorder %s113, %s129
    %p131 = scmp.eq.s32.totalorder %s16, 0
    %p132 = por %p130, %p131
    %p133 = scmp.le.s32.totalorder 1, %s10
    %p134 = scmp.lt.s32.totalorder %s10, 3
    %p135 = pnand %p133, %p134
    %p136 = pneg %p135
    // Predicated region
    $region9: #{encoder_forward.5} parent=5 // pred_check
      _
    $region10: #{encoder_forward.5} parent=5 // pred_check_branch
      %138 = sbr.rel (%p135) target = $region12
    $region11: #{encoder_forward.5} parent=5 // pred_region
      %s139 = ssub.s32 %s10, 1
      // Predicated region
      $region13: #{encoder_forward.5} parent=11 // pred_check
        %p140 = pneg %p57
      $region14: #{encoder_forward.5} parent=11 // pred_check_branch
        %142 = sbr.rel (%p140) target = $region16
      $region15: #{encoder_forward.5} parent=11 // pred_region
        _
      $region16: #{encoder_forward.5} parent=11 // pred_fallthru
        _
      // Predicated region
      $region17: #{encoder_forward.5} parent=11 // pred_check
        %p143 = pneg %p78
      $region18: #{encoder_forward.5} parent=11 // pred_check_branch
        %145 = sbr.rel (%p143) target = $region20
      $region19: #{encoder_forward.5} parent=11 // pred_region
        _
      $region20: #{encoder_forward.5} parent=11 // pred_fallthru
        _
      // Predicated region
      $region21: #{encoder_forward.5} parent=11 // pred_check
        %p146 = pneg %p99
      $region22: #{encoder_forward.5} parent=11 // pred_check_branch
        %148 = sbr.rel (%p146) target = $region24
      $region23: #{encoder_forward.5} parent=11 // pred_region
        _
      $region24: #{encoder_forward.5} parent=11 // pred_fallthru
        _
    $region12: #{encoder_forward.5} parent=5 // pred_fallthru
      _
    %p149 = scmp.lt.s32.totalorder %s10, 2
    // Predicated region
    $region25: #{encoder_forward.5} parent=5 // pred_check
      %p150 = pneg %p149
    $region26: #{encoder_forward.5} parent=5 // pred_check_branch
      %152 = sbr.rel (%p150) target = $region28
    $region27: #{encoder_forward.5} parent=5 // pred_region
      // Predicated region
      $region29: #{encoder_forward.5} parent=27 // pred_check
        %p153 = pneg %p30
      $region30: #{encoder_forward.5} parent=27 // pred_check_branch
        %155 = sbr.rel (%p153) target = $region32
      $region31: #{encoder_forward.5} parent=27 // pred_region
        %p156 = scmp.lt.s32.totalorder %s10, 1
        %s157 = scalar_select %p156, %s10, 1
        %s158 = smul.addr %s157, 10
        %s159 = smul.addr %s158, 8
        %s160 = scalar_lea.vmem %s0, %s159
      $region32: #{encoder_forward.5} parent=27 // pred_fallthru
        _
    $region28: #{encoder_forward.5} parent=5 // pred_fallthru
      _
    %p161 = scmp.le.s32.totalorder 1, %s10
    %p162 = scmp.lt.s32.totalorder %s10, 3
    %p163 = pnand %p161, %p162
    %p164 = pneg %p163
    // Predicated region
    $region33: #{encoder_forward.5} parent=5 // pred_check
      _
    $region34: #{encoder_forward.5} parent=5 // pred_check_branch
      %166 = sbr.rel (%p163) target = $region36
    $region35: #{encoder_forward.5} parent=5 // pred_region
      %s167 = ssub.s32 %s10, 1
      %p168 = scmp.lt.s32.totalorder %s15, 1
      %s169 = scalar_select %p168, %s15, 1
      %s170 = smul.addr %s169, 10
      %s171 = smul.addr %s170, 8
      %s172 = scalar_lea.vmem %s0, %s171
      %p173 = pneg %p36
      %p174 = pneg %p33
      %p175 = pneg %p57
      %p176 = pneg %p54
      %p177 = pneg %p78
      %p178 = pneg %p75
      %p179 = pneg %p99
      %p180 = pneg %p96
      %p181 = pneg %p125
      %p182 = pneg %p122
      %p183 = scmp.lt.s32.totalorder %s15, 1
      %s184 = scalar_select %p183, %s15, 1
      %s185 = smul.addr %s184, 8
      %s186 = smul.addr %s185, 8
      %s187 = scalar_lea.vmem %s4, %s186
      %p188 = scmp.lt.s32.totalorder %s15, 1
      %s189 = scalar_select %p188, %s15, 1
      %s190 = smul.addr %s189, 10
      %s191 = smul.addr %s190, 8
      %s192 = scalar_lea.vmem %s0, %s191
      %p193 = scmp.lt.s32.totalorder %s15, 1
      %s194 = scalar_select %p193, %s15, 1
      %s195 = smul.addr %s194, 8
      %s196 = smul.addr %s195, 8
      %s197 = scalar_lea.vmem %s4, %s196
      %v198 = vld [vmem:[%s192] sm:$0xff]
      %v199 = vld [vmem:[%s192 + $0x8] sm:$0xff]
      %v200 = vld [vmem:[%s192 + $0x10] sm:$0xff]
      %v201 = vld [vmem:[%s192 + $0x18] sm:$0xff]
      %v202 = vld [vmem:[%s192 + $0x20] sm:$0xff]
      %v203 = vld [vmem:[%s192 + $0x28] sm:$0xff]
      %v204 = vld [vmem:[%s192 + $0x30] sm:$0xff]
      %v205 = vld [vmem:[%s192 + $0x38] sm:$0xff]
      %v206 = vld [vmem:[%s1] sm:$0xff]
      %v207 = vld [vmem:[%s1 + $0x8] sm:$0xff]
      %v208 = vld [vmem:[%s1 + $0x10] sm:$0xff]
      %v209 = vld [vmem:[%s1 + $0x18] sm:$0xff]
      %v210 = vld [vmem:[%s1 + $0x20] sm:$0xff]
      %v211 = vld [vmem:[%s1 + $0x28] sm:$0xff]
      %v212 = vld [vmem:[%s1 + $0x30] sm:$0xff]
      %v213 = vld [vmem:[%s1 + $0x38] sm:$0xff]
      %v214 = vld [vmem:[%s1 + $0x40] sm:$0xff]
      %v215 = vld [vmem:[%s1 + $0x48] sm:$0xff]
      %v216 = vld [vmem:[%s1 + $0x50] sm:$0xff]
      %v217 = vld [vmem:[%s1 + $0x58] sm:$0xff]
      %v218 = vld [vmem:[%s1 + $0x60] sm:$0xff]
      %v219 = vld [vmem:[%s1 + $0x68] sm:$0xff]
      %v220 = vld [vmem:[%s1 + $0x70] sm:$0xff]
      %v221 = vld [vmem:[%s1 + $0x78] sm:$0xff]
      %v222 = vld [vmem:[%s1 + $0x80] sm:$0xff]
      %v223 = vld [vmem:[%s1 + $0x88] sm:$0xff]
      %v224 = vld [vmem:[%s1 + $0x90] sm:$0xff]
      %v225 = vld [vmem:[%s1 + $0x98] sm:$0xff]
      %v226 = vld [vmem:[%s1 + $0xa0] sm:$0xff]
      %v227 = vld [vmem:[%s1 + $0xa8] sm:$0xff]
      %v228 = vld [vmem:[%s1 + $0xb0] sm:$0xff]
      %v229 = vld [vmem:[%s1 + $0xb8] sm:$0xff]
      %v230 = vld [vmem:[%s1 + $0xc0] sm:$0xff]
      %v231 = vld [vmem:[%s1 + $0xc8] sm:$0xff]
      %v232 = vld [vmem:[%s1 + $0xd0] sm:$0xff]
      %v233 = vld [vmem:[%s1 + $0xd8] sm:$0xff]
      %v234 = vld [vmem:[%s1 + $0xe0] sm:$0xff]
      %v235 = vld [vmem:[%s1 + $0xe8] sm:$0xff]
      %v236 = vld [vmem:[%s1 + $0xf0] sm:$0xff]
      %v237 = vld [vmem:[%s1 + $0xf8] sm:$0xff]
      %v238 = vld [vmem:[%s1 + $0x100] sm:$0xff]
      %v239 = vld [vmem:[%s1 + $0x108] sm:$0xff]
      %v240 = vld [vmem:[%s1 + $0x110] sm:$0xff]
      %v241 = vld [vmem:[%s1 + $0x118] sm:$0xff]
      %v242 = vld [vmem:[%s1 + $0x120] sm:$0xff]
      %v243 = vld [vmem:[%s1 + $0x128] sm:$0xff]
      %v244 = vld [vmem:[%s1 + $0x130] sm:$0xff]
      %v245 = vld [vmem:[%s1 + $0x138] sm:$0xff]
      %v246 = vld [vmem:[%s1 + $0x140] sm:$0xff]
      %v247 = vld [vmem:[%s1 + $0x148] sm:$0xff]
      %v248 = vld [vmem:[%s1 + $0x150] sm:$0xff]
      %v249 = vld [vmem:[%s1 + $0x158] sm:$0xff]
      %v250 = vld [vmem:[%s1 + $0x160] sm:$0xff]
      %v251 = vld [vmem:[%s1 + $0x168] sm:$0xff]
      %v252 = vld [vmem:[%s1 + $0x170] sm:$0xff]
      %v253 = vld [vmem:[%s1 + $0x178] sm:$0xff]
      %v254 = vld [vmem:[%s1 + $0x180] sm:$0xff]
      %v255 = vld [vmem:[%s1 + $0x188] sm:$0xff]
      %v256 = vld [vmem:[%s1 + $0x190] sm:$0xff]
      %v257 = vld [vmem:[%s1 + $0x198] sm:$0xff]
      %v258 = vld [vmem:[%s1 + $0x1a0] sm:$0xff]
      %v259 = vld [vmem:[%s1 + $0x1a8] sm:$0xff]
      %v260 = vld [vmem:[%s1 + $0x1b0] sm:$0xff]
      %v261 = vld [vmem:[%s1 + $0x1b8] sm:$0xff]
      %v262 = vld [vmem:[%s1 + $0x1c0] sm:$0xff]
      %v263 = vld [vmem:[%s1 + $0x1c8] sm:$0xff]
      %v264 = vld [vmem:[%s1 + $0x1d0] sm:$0xff]
      %v265 = vld [vmem:[%s1 + $0x1d8] sm:$0xff]
      %v266 = vld [vmem:[%s1 + $0x1e0] sm:$0xff]
      %v267 = vld [vmem:[%s1 + $0x1e8] sm:$0xff]
      %v268 = vld [vmem:[%s1 + $0x1f0] sm:$0xff]
      %v269 = vld [vmem:[%s1 + $0x1f8] sm:$0xff]
      %v270 = vld [vmem:[%s192] sm:$0xfe]
      %v271 = vld [vmem:[%s192 + $0x8] sm:$0xfe]
      %v272 = vld [vmem:[%s192 + $0x40] sm:$0x1]
      %v273 = vld [vmem:[%s192 + $0x48] sm:$0x1]
      %s274 = scalar_lea.vmem %s1, 512
      %v275 = vld [vmem:[%s274] sm:$0xff]
      %v276 = vld [vmem:[%s274 + $0x8] sm:$0xff]
      %v277 = vld [vmem:[%s274 + $0x10] sm:$0xff]
      %v278 = vld [vmem:[%s274 + $0x18] sm:$0xff]
      %v279 = vld [vmem:[%s274 + $0x20] sm:$0xff]
      %v280 = vld [vmem:[%s274 + $0x28] sm:$0xff]
      %v281 = vld [vmem:[%s274 + $0x30] sm:$0xff]
      %v282 = vld [vmem:[%s274 + $0x38] sm:$0xff]
      %v283 = vld [vmem:[%s274 + $0x40] sm:$0xff]
      %v284 = vld [vmem:[%s274 + $0x48] sm:$0xff]
      %v285 = vld [vmem:[%s274 + $0x50] sm:$0xff]
      %v286 = vld [vmem:[%s274 + $0x58] sm:$0xff]
      %v287 = vld [vmem:[%s274 + $0x60] sm:$0xff]
      %v288 = vld [vmem:[%s274 + $0x68] sm:$0xff]
      %v289 = vld [vmem:[%s274 + $0x70] sm:$0xff]
      %v290 = vld [vmem:[%s274 + $0x78] sm:$0xff]
      %v291 = vld [vmem:[%s274 + $0x80] sm:$0xff]
      %v292 = vld [vmem:[%s274 + $0x88] sm:$0xff]
      %v293 = vld [vmem:[%s274 + $0x90] sm:$0xff]
      %v294 = vld [vmem:[%s274 + $0x98] sm:$0xff]
      %v295 = vld [vmem:[%s274 + $0xa0] sm:$0xff]
      %v296 = vld [vmem:[%s274 + $0xa8] sm:$0xff]
      %v297 = vld [vmem:[%s274 + $0xb0] sm:$0xff]
      %v298 = vld [vmem:[%s274 + $0xb8] sm:$0xff]
      %v299 = vld [vmem:[%s274 + $0xc0] sm:$0xff]
      %v300 = vld [vmem:[%s274 + $0xc8] sm:$0xff]
      %v301 = vld [vmem:[%s274 + $0xd0] sm:$0xff]
      %v302 = vld [vmem:[%s274 + $0xd8] sm:$0xff]
      %v303 = vld [vmem:[%s274 + $0xe0] sm:$0xff]
      %v304 = vld [vmem:[%s274 + $0xe8] sm:$0xff]
      %v305 = vld [vmem:[%s274 + $0xf0] sm:$0xff]
      %v306 = vld [vmem:[%s274 + $0xf8] sm:$0xff]
      %v307 = vld [vmem:[%s274 + $0x100] sm:$0xff]
      %v308 = vld [vmem:[%s274 + $0x108] sm:$0xff]
      %v309 = vld [vmem:[%s274 + $0x110] sm:$0xff]
      %v310 = vld [vmem:[%s274 + $0x118] sm:$0xff]
      %v311 = vld [vmem:[%s274 + $0x120] sm:$0xff]
      %v312 = vld [vmem:[%s274 + $0x128] sm:$0xff]
      %v313 = vld [vmem:[%s274 + $0x130] sm:$0xff]
      %v314 = vld [vmem:[%s274 + $0x138] sm:$0xff]
      %v315 = vld [vmem:[%s274 + $0x140] sm:$0xff]
      %v316 = vld [vmem:[%s274 + $0x148] sm:$0xff]
      %v317 = vld [vmem:[%s274 + $0x150] sm:$0xff]
      %v318 = vld [vmem:[%s274 + $0x158] sm:$0xff]
      %v319 = vld [vmem:[%s274 + $0x160] sm:$0xff]
      %v320 = vld [vmem:[%s274 + $0x168] sm:$0xff]
      %v321 = vld [vmem:[%s274 + $0x170] sm:$0xff]
      %v322 = vld [vmem:[%s274 + $0x178] sm:$0xff]
      %v323 = vld [vmem:[%s274 + $0x180] sm:$0xff]
      %v324 = vld [vmem:[%s274 + $0x188] sm:$0xff]
      %v325 = vld [vmem:[%s274 + $0x190] sm:$0xff]
      %v326 = vld [vmem:[%s274 + $0x198] sm:$0xff]
      %v327 = vld [vmem:[%s274 + $0x1a0] sm:$0xff]
      %v328 = vld [vmem:[%s274 + $0x1a8] sm:$0xff]
      %v329 = vld [vmem:[%s274 + $0x1b0] sm:$0xff]
      %v330 = vld [vmem:[%s274 + $0x1b8] sm:$0xff]
      %v331 = vld [vmem:[%s274 + $0x1c0] sm:$0xff]
      %v332 = vld [vmem:[%s274 + $0x1c8] sm:$0xff]
      %v333 = vld [vmem:[%s274 + $0x1d0] sm:$0xff]
      %v334 = vld [vmem:[%s274 + $0x1d8] sm:$0xff]
      %v335 = vld [vmem:[%s274 + $0x1e0] sm:$0xff]
      %v336 = vld [vmem:[%s274 + $0x1e8] sm:$0xff]
      %v337 = vld [vmem:[%s274 + $0x1f0] sm:$0xff]
      %v338 = vld [vmem:[%s274 + $0x1f8] sm:$0xff]
      %vm349 = vcmask 1046528
      %v350 = vrot.slane %v270, 1
      %v351 = vrot.slane %v200, 1
      %v352 = vsel %vm349, %v350, %v351
      %v353 = vrot.slane %v271, 1
      %v354 = vrot.slane %v201, 1
      %v355 = vsel %vm349, %v353, %v354
      %v356 = vrot.slane %v202, 1
      %v357 = vsel %vm349, %v351, %v356
      %v358 = vrot.slane %v203, 1
      %v359 = vsel %vm349, %v354, %v358
      %v360 = vrot.slane %v204, 1
      %v361 = vsel %vm349, %v356, %v360
      %v362 = vrot.slane %v205, 1
      %v363 = vsel %vm349, %v358, %v362
      %v364 = vrot.slane %v272, 1
      %v365 = vsel %vm349, %v360, %v364
      %v366 = vrot.slane %v273, 1
      %v367 = vsel %vm349, %v362, %v366
      %376 = vmatprep.subr.mxu0 %v276
      %377 = vmatpush1.msra.mxu0 %v275
      %378 = vmatprep.subr.mxu0 %v278
      %379 = vmatpush1.msra.mxu0 %v277
      %380 = vmatprep.subr.mxu0 %v280
      %381 = vmatpush1.msra.mxu0 %v279
      %382 = vmatprep.subr.mxu0 %v282
      %383 = vmatpush1.msra.mxu0 %v281
      %384 = vmatprep.subr.mxu0 %v284
      %385 = vmatpush1.msra.mxu0 %v283
      %386 = vmatprep.subr.mxu0 %v286
      %387 = vmatpush1.msra.mxu0 %v285
      %388 = vmatprep.subr.mxu0 %v288
      %389 = vmatpush1.msra.mxu0 %v287
      %390 = vmatprep.subr.mxu0 %v290
      %391 = vmatpush1.msra.mxu0 %v289
      %392 = vmatprep.subr.mxu0 %v292
      %393 = vmatpush1.msra.mxu0 %v291
      %394 = vmatprep.subr.mxu0 %v294
      %395 = vmatpush1.msra.mxu0 %v293
      %396 = vmatprep.subr.mxu0 %v296
      %397 = vmatpush1.msra.mxu0 %v295
      %398 = vmatprep.subr.mxu0 %v298
      %399 = vmatpush1.msra.mxu0 %v297
      %400 = vmatprep.subr.mxu0 %v300
      %401 = vmatpush1.msra.mxu0 %v299
      %402 = vmatprep.subr.mxu0 %v302
      %403 = vmatpush1.msra.mxu0 %v301
      %404 = vmatprep.subr.mxu0 %v304
      %405 = vmatpush1.msra.mxu0 %v303
      %406 = vmatprep.subr.mxu0 %v306
      %407 = vmatpush1.msra.mxu0 %v305
      %408 = vmatprep.subr.mxu0 %v308
      %409 = vmatpush1.msra.mxu0 %v307
      %410 = vmatprep.subr.mxu0 %v310
      %411 = vmatpush1.msra.mxu0 %v309
      %412 = vmatprep.subr.mxu0 %v312
      %413 = vmatpush1.msra.mxu0 %v311
      %414 = vmatprep.subr.mxu0 %v314
      %415 = vmatpush1.msra.mxu0 %v313
      %416 = vmatprep.subr.mxu0 %v316
      %417 = vmatpush1.msra.mxu0 %v315
      %418 = vmatprep.subr.mxu0 %v318
      %419 = vmatpush1.msra.mxu0 %v317
      %420 = vmatprep.subr.mxu0 %v320
      %421 = vmatpush1.msra.mxu0 %v319
      %422 = vmatprep.subr.mxu0 %v322
      %423 = vmatpush1.msra.mxu0 %v321
      %424 = vmatprep.subr.mxu0 %v324
      %425 = vmatpush1.msra.mxu0 %v323
      %426 = vmatprep.subr.mxu0 %v326
      %427 = vmatpush1.msra.mxu0 %v325
      %428 = vmatprep.subr.mxu0 %v328
      %429 = vmatpush1.msra.mxu0 %v327
      %430 = vmatprep.subr.mxu0 %v330
      %431 = vmatpush1.msra.mxu0 %v329
      %432 = vmatprep.subr.mxu0 %v332
      %433 = vmatpush1.msra.mxu0 %v331
      %434 = vmatprep.subr.mxu0 %v334
      %435 = vmatpush1.msra.mxu0 %v333
      %436 = vmatprep.subr.mxu0 %v336
      %437 = vmatpush1.msra.mxu0 %v335
      %438 = vmatprep.subr.mxu0 %v338
      %439 = vmatpush1.msra.mxu0 %v337
      %440 = vmatprep.mubr.f32.mxu0 %v355
      %441 = vmatmul.mubr.f32.gmra.mrb[0].mxu0 %v352
      %v442 = vpop.f32.mrb[0].mxu0
      %v443 = vadd.f32 0.0, %v442
      %v444 = vpop.f32.mrb[0].mxu0
      %v445 = vadd.f32 0.0, %v444
      %446 = vmatprep.mubr.f32.mxu0 %v359
      %447 = vmatmul.mubr.f32.gmra.mrb[0].mxu0 %v357
      %v448 = vpop.f32.mrb[0].mxu0
      %v449 = vadd.f32 0.0, %v448
      %v450 = vpop.f32.mrb[0].mxu0
      %v451 = vadd.f32 0.0, %v450
      %452 = vmatprep.mubr.f32.mxu0 %v363
      %453 = vmatmul.mubr.f32.gmra.mrb[0].mxu0 %v361
      %v454 = vpop.f32.mrb[0].mxu0
      %v455 = vadd.f32 0.0, %v454
      %v456 = vpop.f32.mrb[0].mxu0
      %v457 = vadd.f32 0.0, %v456
      %458 = vmatprep.mubr.f32.mxu0 %v367
      %459 = vmatmul.mubr.f32.gmra.mrb[0].mxu0 %v365
      %v460 = vpop.f32.mrb[0].mxu0
      %v461 = vadd.f32 0.0, %v460
      %v462 = vpop.f32.mrb[0].mxu0
      %v463 = vadd.f32 0.0, %v462
      %464 = vdwg.mxu0
      %465 = vmatprep.subr.mxu0 %v207
      %466 = vmatpush1.msra.mxu0 %v206
      %467 = vmatprep.subr.mxu0 %v209
      %468 = vmatpush1.msra.mxu0 %v208
      %469 = vmatprep.subr.mxu0 %v211
      %470 = vmatpush1.msra.mxu0 %v210
      %471 = vmatprep.subr.mxu0 %v213
      %472 = vmatpush1.msra.mxu0 %v212
      %473 = vmatprep.subr.mxu0 %v215
      %474 = vmatpush1.msra.mxu0 %v214
      %475 = vmatprep.subr.mxu0 %v217
      %476 = vmatpush1.msra.mxu0 %v216
      %477 = vmatprep.subr.mxu0 %v219
      %478 = vmatpush1.msra.mxu0 %v218
      %479 = vmatprep.subr.mxu0 %v221
      %480 = vmatpush1.msra.mxu0 %v220
      %481 = vmatprep.subr.mxu0 %v223
      %482 = vmatpush1.msra.mxu0 %v222
      %483 = vmatprep.subr.mxu0 %v225
      %484 = vmatpush1.msra.mxu0 %v224
      %485 = vmatprep.subr.mxu0 %v227
      %486 = vmatpush1.msra.mxu0 %v226
      %487 = vmatprep.subr.mxu0 %v229
      %488 = vmatpush1.msra.mxu0 %v228
      %489 = vmatprep.subr.mxu0 %v231
      %490 = vmatpush1.msra.mxu0 %v230
      %491 = vmatprep.subr.mxu0 %v233
      %492 = vmatpush1.msra.mxu0 %v232
      %493 = vmatprep.subr.mxu0 %v235
      %494 = vmatpush1.msra.mxu0 %v234
      %495 = vmatprep.subr.mxu0 %v237
      %496 = vmatpush1.msra.mxu0 %v236
      %497 = vmatprep.subr.mxu0 %v239
      %498 = vmatpush1.msra.mxu0 %v238
      %499 = vmatprep.subr.mxu0 %v241
      %500 = vmatpush1.msra.mxu0 %v240
      %501 = vmatprep.subr.mxu0 %v243
      %502 = vmatpush1.msra.mxu0 %v242
      %503 = vmatprep.subr.mxu0 %v245
      %504 = vmatpush1.msra.mxu0 %v244
      %505 = vmatprep.subr.mxu0 %v247
      %506 = vmatpush1.msra.mxu0 %v246
      %507 = vmatprep.subr.mxu0 %v249
      %508 = vmatpush1.msra.mxu0 %v248
      %509 = vmatprep.subr.mxu0 %v251
      %510 = vmatpush1.msra.mxu0 %v250
      %511 = vmatprep.subr.mxu0 %v253
      %512 = vmatpush1.msra.mxu0 %v252
      %513 = vmatprep.subr.mxu0 %v255
      %514 = vmatpush1.msra.mxu0 %v254
      %515 = vmatprep.subr.mxu0 %v257
      %516 = vmatpush1.msra.mxu0 %v256
      %517 = vmatprep.subr.mxu0 %v259
      %518 = vmatpush1.msra.mxu0 %v258
      %519 = vmatprep.subr.mxu0 %v261
      %520 = vmatpush1.msra.mxu0 %v260
      %521 = vmatprep.subr.mxu0 %v263
      %522 = vmatpush1.msra.mxu0 %v262
      %523 = vmatprep.subr.mxu0 %v265
      %524 = vmatpush1.msra.mxu0 %v264
      %525 = vmatprep.subr.mxu0 %v267
      %526 = vmatpush1.msra.mxu0 %v266
      %527 = vmatprep.subr.mxu0 %v269
      %528 = vmatpush1.msra.mxu0 %v268
      %529 = vmatprep.mubr.f32.mxu0 %v199
      %530 = vmatmul.mubr.f32.gmra.mrb[0].mxu0 %v198
      %v531 = vpop.f32.mrb[0].mxu0
      %v532 = vadd.f32 %v443, %v531
      %v533 = vpop.f32.mrb[0].mxu0
      %v534 = vadd.f32 %v445, %v533
      %535 = vmatprep.mubr.f32.mxu0 %v201
      %536 = vmatmul.mubr.f32.gmra.mrb[0].mxu0 %v200
      %v537 = vpop.f32.mrb[0].mxu0
      %v538 = vadd.f32 %v449, %v537
      %v539 = vpop.f32.mrb[0].mxu0
      %v540 = vadd.f32 %v451, %v539
      %541 = vmatprep.mubr.f32.mxu0 %v203
      %542 = vmatmul.mubr.f32.gmra.mrb[0].mxu0 %v202
      %v543 = vpop.f32.mrb[0].mxu0
      %v544 = vadd.f32 %v455, %v543
      %v545 = vpop.f32.mrb[0].mxu0
      %v546 = vadd.f32 %v457, %v545
      %547 = vmatprep.mubr.f32.mxu0 %v205
      %548 = vmatmul.mubr.f32.gmra.mrb[0].mxu0 %v204
      %v549 = vpop.f32.mrb[0].mxu0
      %v550 = vadd.f32 %v461, %v549
      %v551 = vpop.f32.mrb[0].mxu0
      %v552 = vadd.f32 %v463, %v551
      %553 = vdwg.mxu0
      %v554 = vld [vmem:[%s192] sm:$0xfc]
      %v555 = vld [vmem:[%s192 + $0x8] sm:$0xfc]
      %v556 = vld [vmem:[%s192 + $0x40] sm:$0x3]
      %v557 = vld [vmem:[%s192 + $0x48] sm:$0x3]
      %s558 = scalar_lea.vmem %s1, 1024
      %v559 = vld [vmem:[%s558] sm:$0xff]
      %v560 = vld [vmem:[%s558 + $0x8] sm:$0xff]
      %v561 = vld [vmem:[%s558 + $0x10] sm:$0xff]
      %v562 = vld [vmem:[%s558 + $0x18] sm:$0xff]
      %v563 = vld [vmem:[%s558 + $0x20] sm:$0xff]
      %v564 = vld [vmem:[%s558 + $0x28] sm:$0xff]
      %v565 = vld [vmem:[%s558 + $0x30] sm:$0xff]
      %v566 = vld [vmem:[%s558 + $0x38] sm:$0xff]
      %v567 = vld [vmem:[%s558 + $0x40] sm:$0xff]
      %v568 = vld [vmem:[%s558 + $0x48] sm:$0xff]
      %v569 = vld [vmem:[%s558 + $0x50] sm:$0xff]
      %v570 = vld [vmem:[%s558 + $0x58] sm:$0xff]
      %v571 = vld [vmem:[%s558 + $0x60] sm:$0xff]
      %v572 = vld [vmem:[%s558 + $0x68] sm:$0xff]
      %v573 = vld [vmem:[%s558 + $0x70] sm:$0xff]
      %v574 = vld [vmem:[%s558 + $0x78] sm:$0xff]
      %v575 = vld [vmem:[%s558 + $0x80] sm:$0xff]
      %v576 = vld [vmem:[%s558 + $0x88] sm:$0xff]
      %v577 = vld [vmem:[%s558 + $0x90] sm:$0xff]
      %v578 = vld [vmem:[%s558 + $0x98] sm:$0xff]
      %v579 = vld [vmem:[%s558 + $0xa0] sm:$0xff]
      %v580 = vld [vmem:[%s558 + $0xa8] sm:$0xff]
      %v581 = vld [vmem:[%s558 + $0xb0] sm:$0xff]
      %v582 = vld [vmem:[%s558 + $0xb8] sm:$0xff]
      %v583 = vld [vmem:[%s558 + $0xc0] sm:$0xff]
      %v584 = vld [vmem:[%s558 + $0xc8] sm:$0xff]
      %v585 = vld [vmem:[%s558 + $0xd0] sm:$0xff]
      %v586 = vld [vmem:[%s558 + $0xd8] sm:$0xff]
      %v587 = vld [vmem:[%s558 + $0xe0] sm:$0xff]
      %v588 = vld [vmem:[%s558 + $0xe8] sm:$0xff]
      %v589 = vld [vmem:[%s558 + $0xf0] sm:$0xff]
      %v590 = vld [vmem:[%s558 + $0xf8] sm:$0xff]
      %v591 = vld [vmem:[%s558 + $0x100] sm:$0xff]
      %v592 = vld [vmem:[%s558 + $0x108] sm:$0xff]
      %v593 = vld [vmem:[%s558 + $0x110] sm:$0xff]
      %v594 = vld [vmem:[%s558 + $0x118] sm:$0xff]
      %v595 = vld [vmem:[%s558 + $0x120] sm:$0xff]
      %v596 = vld [vmem:[%s558 + $0x128] sm:$0xff]
      %v597 = vld [vmem:[%s558 + $0x130] sm:$0xff]
      %v598 = vld [vmem:[%s558 + $0x138] sm:$0xff]
      %v599 = vld [vmem:[%s558 + $0x140] sm:$0xff]
      %v600 = vld [vmem:[%s558 + $0x148] sm:$0xff]
      %v601 = vld [vmem:[%s558 + $0x150] sm:$0xff]
      %v602 = vld [vmem:[%s558 + $0x158] sm:$0xff]
      %v603 = vld [vmem:[%s558 + $0x160] sm:$0xff]
      %v604 = vld [vmem:[%s558 + $0x168] sm:$0xff]
      %v605 = vld [vmem:[%s558 + $0x170] sm:$0xff]
      %v606 = vld [vmem:[%s558 + $0x178] sm:$0xff]
      %v607 = vld [vmem:[%s558 + $0x180] sm:$0xff]
      %v608 = vld [vmem:[%s558 + $0x188] sm:$0xff]
      %v609 = vld [vmem:[%s558 + $0x190] sm:$0xff]
      %v610 = vld [vmem:[%s558 + $0x198] sm:$0xff]
      %v611 = vld [vmem:[%s558 + $0x1a0] sm:$0xff]
      %v612 = vld [vmem:[%s558 + $0x1a8] sm:$0xff]
      %v613 = vld [vmem:[%s558 + $0x1b0] sm:$0xff]
      %v614 = vld [vmem:[%s558 + $0x1b8] sm:$0xff]
      %v615 = vld [vmem:[%s558 + $0x1c0] sm:$0xff]
      %v616 = vld [vmem:[%s558 + $0x1c8] sm:$0xff]
      %v617 = vld [vmem:[%s558 + $0x1d0] sm:$0xff]
      %v618 = vld [vmem:[%s558 + $0x1d8] sm:$0xff]
      %v619 = vld [vmem:[%s558 + $0x1e0] sm:$0xff]
      %v620 = vld [vmem:[%s558 + $0x1e8] sm:$0xff]
      %v621 = vld [vmem:[%s558 + $0x1f0] sm:$0xff]
      %v622 = vld [vmem:[%s558 + $0x1f8] sm:$0xff]
      %vm627 = vcmask 1045504
      %v628 = vrot.slane %v554, 2
      %v629 = vrot.slane %v200, 2
      %v630 = vsel %vm627, %v628, %v629
      %v631 = vrot.slane %v555, 2
      %v632 = vrot.slane %v201, 2
      %v633 = vsel %vm627, %v631, %v632
      %v634 = vrot.slane %v202, 2
      %v635 = vsel %vm627, %v629, %v634
      %v636 = vrot.slane %v203, 2
      %v637 = vsel %vm627, %v632, %v636
      %v638 = vrot.slane %v204, 2
      %v639 = vsel %vm627, %v634, %v638
      %v640 = vrot.slane %v205, 2
      %v641 = vsel %vm627, %v636, %v640
      %v642 = vrot.slane %v556, 2
      %v643 = vsel %vm627, %v638, %v642
      %v644 = vrot.slane %v557, 2
      %v645 = vsel %vm627, %v640, %v644
      %654 = vmatprep.subr.mxu0 %v560
      %655 = vmatpush1.msra.mxu0 %v559
      %656 = vmatprep.subr.mxu0 %v562
      %657 = vmatpush1.msra.mxu0 %v561
      %658 = vmatprep.subr.mxu0 %v564
      %659 = vmatpush1.msra.mxu0 %v563
      %660 = vmatprep.subr.mxu0 %v566
      %661 = vmatpush1.msra.mxu0 %v565
      %662 = vmatprep.subr.mxu0 %v568
      %663 = vmatpush1.msra.mxu0 %v567
      %664 = vmatprep.subr.mxu0 %v570
      %665 = vmatpush1.msra.mxu0 %v569
      %666 = vmatprep.subr.mxu0 %v572
      %667 = vmatpush1.msra.mxu0 %v571
      %668 = vmatprep.subr.mxu0 %v574
      %669 = vmatpush1.msra.mxu0 %v573
      %670 = vmatprep.subr.mxu0 %v576
      %671 = vmatpush1.msra.mxu0 %v575
      %672 = vmatprep.subr.mxu0 %v578
      %673 = vmatpush1.msra.mxu0 %v577
      %674 = vmatprep.subr.mxu0 %v580
      %675 = vmatpush1.msra.mxu0 %v579
      %676 = vmatprep.subr.mxu0 %v582
      %677 = vmatpush1.msra.mxu0 %v581
      %678 = vmatprep.subr.mxu0 %v584
      %679 = vmatpush1.msra.mxu0 %v583
      %680 = vmatprep.subr.mxu0 %v586
      %681 = vmatpush1.msra.mxu0 %v585
      %682 = vmatprep.subr.mxu0 %v588
      %683 = vmatpush1.msra.mxu0 %v587
      %684 = vmatprep.subr.mxu0 %v590
      %685 = vmatpush1.msra.mxu0 %v589
      %686 = vmatprep.subr.mxu0 %v592
      %687 = vmatpush1.msra.mxu0 %v591
      %688 = vmatprep.subr.mxu0 %v594
      %689 = vmatpush1.msra.mxu0 %v593
      %690 = vmatprep.subr.mxu0 %v596
      %691 = vmatpush1.msra.mxu0 %v595
      %692 = vmatprep.subr.mxu0 %v598
      %693 = vmatpush1.msra.mxu0 %v597
      %694 = vmatprep.subr.mxu0 %v600
      %695 = vmatpush1.msra.mxu0 %v599
      %696 = vmatprep.subr.mxu0 %v602
      %697 = vmatpush1.msra.mxu0 %v601
      %698 = vmatprep.subr.mxu0 %v604
      %699 = vmatpush1.msra.mxu0 %v603
      %700 = vmatprep.subr.mxu0 %v606
      %701 = vmatpush1.msra.mxu0 %v605
      %702 = vmatprep.subr.mxu0 %v608
      %703 = vmatpush1.msra.mxu0 %v607
      %704 = vmatprep.subr.mxu0 %v610
      %705 = vmatpush1.msra.mxu0 %v609
      %706 = vmatprep.subr.mxu0 %v612
      %707 = vmatpush1.msra.mxu0 %v611
      %708 = vmatprep.subr.mxu0 %v614
      %709 = vmatpush1.msra.mxu0 %v613
      %710 = vmatprep.subr.mxu0 %v616
      %711 = vmatpush1.msra.mxu0 %v615
      %712 = vmatprep.subr.mxu0 %v618
      %713 = vmatpush1.msra.mxu0 %v617
      %714 = vmatprep.subr.mxu0 %v620
      %715 = vmatpush1.msra.mxu0 %v619
      %716 = vmatprep.subr.mxu0 %v622
      %717 = vmatpush1.msra.mxu0 %v621
      %718 = vmatprep.mubr.f32.mxu0 %v633
      %719 = vmatmul.mubr.f32.gmra.mrb[0].mxu0 %v630
      %v720 = vpop.f32.mrb[0].mxu0
      %v721 = vadd.f32 0.0, %v720
      %v722 = vpop.f32.mrb[0].mxu0
      %v723 = vadd.f32 0.0, %v722
      %724 = vmatprep.mubr.f32.mxu0 %v637
      %725 = vmatmul.mubr.f32.gmra.mrb[0].mxu0 %v635
      %v726 = vpop.f32.mrb[0].mxu0
      %v727 = vadd.f32 0.0, %v726
      %v728 = vpop.f32.mrb[0].mxu0
      %v729 = vadd.f32 0.0, %v728
      %730 = vmatprep.mubr.f32.mxu0 %v641
      %731 = vmatmul.mubr.f32.gmra.mrb[0].mxu0 %v639
      %v732 = vpop.f32.mrb[0].mxu0
      %v733 = vadd.f32 0.0, %v732
      %v734 = vpop.f32.mrb[0].mxu0
      %v735 = vadd.f32 0.0, %v734
      %736 = vmatprep.mubr.f32.mxu0 %v645
      %737 = vmatmul.mubr.f32.gmra.mrb[0].mxu0 %v643
      %v738 = vpop.f32.mrb[0].mxu0
      %v739 = vadd.f32 0.0, %v738
      %v740 = vpop.f32.mrb[0].mxu0
      %v741 = vadd.f32 0.0, %v740
      %742 = vdwg.mxu0
      %v743 = vadd.f32 %v532, %v721
      %v744 = vadd.f32 %v534, %v723
      %v745 = vadd.f32 %v538, %v727
      %v746 = vadd.f32 %v540, %v729
      %v747 = vadd.f32 %v544, %v733
      %v748 = vadd.f32 %v546, %v735
      %v749 = vadd.f32 %v550, %v739
      %v750 = vadd.f32 %v552, %v741
      %v751 = vld [vmem:[%s192] sm:$0xf8]
      %v752 = vld [vmem:[%s192 + $0x8] sm:$0xf8]
      %v753 = vld [vmem:[%s192 + $0x40] sm:$0x7]
      %v754 = vld [vmem:[%s192 + $0x48] sm:$0x7]
      %s755 = scalar_lea.vmem %s1, 1536
      %v756 = vld [vmem:[%s755] sm:$0xff]
      %v757 = vld [vmem:[%s755 + $0x8] sm:$0xff]
      %v758 = vld [vmem:[%s755 + $0x10] sm:$0xff]
      %v759 = vld [vmem:[%s755 + $0x18] sm:$0xff]
      %v760 = vld [vmem:[%s755 + $0x20] sm:$0xff]
      %v761 = vld [vmem:[%s755 + $0x28] sm:$0xff]
      %v762 = vld [vmem:[%s755 + $0x30] sm:$0xff]
      %v763 = vld [vmem:[%s755 + $0x38] sm:$0xff]
      %v764 = vld [vmem:[%s755 + $0x40] sm:$0xff]
      %v765 = vld [vmem:[%s755 + $0x48] sm:$0xff]
      %v766 = vld [vmem:[%s755 + $0x50] sm:$0xff]
      %v767 = vld [vmem:[%s755 + $0x58] sm:$0xff]
      %v768 = vld [vmem:[%s755 + $0x60] sm:$0xff]
      %v769 = vld [vmem:[%s755 + $0x68] sm:$0xff]
      %v770 = vld [vmem:[%s755 + $0x70] sm:$0xff]
      %v771 = vld [vmem:[%s755 + $0x78] sm:$0xff]
      %v772 = vld [vmem:[%s755 + $0x80] sm:$0xff]
      %v773 = vld [vmem:[%s755 + $0x88] sm:$0xff]
      %v774 = vld [vmem:[%s755 + $0x90] sm:$0xff]
      %v775 = vld [vmem:[%s755 + $0x98] sm:$0xff]
      %v776 = vld [vmem:[%s755 + $0xa0] sm:$0xff]
      %v777 = vld [vmem:[%s755 + $0xa8] sm:$0xff]
      %v778 = vld [vmem:[%s755 + $0xb0] sm:$0xff]
      %v779 = vld [vmem:[%s755 + $0xb8] sm:$0xff]
      %v780 = vld [vmem:[%s755 + $0xc0] sm:$0xff]
      %v781 = vld [vmem:[%s755 + $0xc8] sm:$0xff]
      %v782 = vld [vmem:[%s755 + $0xd0] sm:$0xff]
      %v783 = vld [vmem:[%s755 + $0xd8] sm:$0xff]
      %v784 = vld [vmem:[%s755 + $0xe0] sm:$0xff]
      %v785 = vld [vmem:[%s755 + $0xe8] sm:$0xff]
      %v786 = vld [vmem:[%s755 + $0xf0] sm:$0xff]
      %v787 = vld [vmem:[%s755 + $0xf8] sm:$0xff]
      %v788 = vld [vmem:[%s755 + $0x100] sm:$0xff]
      %v789 = vld [vmem:[%s755 + $0x108] sm:$0xff]
      %v790 = vld [vmem:[%s755 + $0x110] sm:$0xff]
      %v791 = vld [vmem:[%s755 + $0x118] sm:$0xff]
      %v792 = vld [vmem:[%s755 + $0x120] sm:$0xff]
      %v793 = vld [vmem:[%s755 + $0x128] sm:$0xff]
      %v794 = vld [vmem:[%s755 + $0x130] sm:$0xff]
      %v795 = vld [vmem:[%s755 + $0x138] sm:$0xff]
      %v796 = vld [vmem:[%s755 + $0x140] sm:$0xff]
      %v797 = vld [vmem:[%s755 + $0x148] sm:$0xff]
      %v798 = vld [vmem:[%s755 + $0x150] sm:$0xff]
      %v799 = vld [vmem:[%s755 + $0x158] sm:$0xff]
      %v800 = vld [vmem:[%s755 + $0x160] sm:$0xff]
      %v801 = vld [vmem:[%s755 + $0x168] sm:$0xff]
      %v802 = vld [vmem:[%s755 + $0x170] sm:$0xff]
      %v803 = vld [vmem:[%s755 + $0x178] sm:$0xff]
      %v804 = vld [vmem:[%s755 + $0x180] sm:$0xff]
      %v805 = vld [vmem:[%s755 + $0x188] sm:$0xff]
      %v806 = vld [vmem:[%s755 + $0x190] sm:$0xff]
      %v807 = vld [vmem:[%s755 + $0x198] sm:$0xff]
      %v808 = vld [vmem:[%s755 + $0x1a0] sm:$0xff]
      %v809 = vld [vmem:[%s755 + $0x1a8] sm:$0xff]
      %v810 = vld [vmem:[%s755 + $0x1b0] sm:$0xff]
      %v811 = vld [vmem:[%s755 + $0x1b8] sm:$0xff]
      %v812 = vld [vmem:[%s755 + $0x1c0] sm:$0xff]
      %v813 = vld [vmem:[%s755 + $0x1c8] sm:$0xff]
      %v814 = vld [vmem:[%s755 + $0x1d0] sm:$0xff]
      %v815 = vld [vmem:[%s755 + $0x1d8] sm:$0xff]
      %v816 = vld [vmem:[%s755 + $0x1e0] sm:$0xff]
      %v817 = vld [vmem:[%s755 + $0x1e8] sm:$0xff]
      %v818 = vld [vmem:[%s755 + $0x1f0] sm:$0xff]
      %v819 = vld [vmem:[%s755 + $0x1f8] sm:$0xff]
      %vm824 = vcmask 1044480
      %v825 = vrot.slane %v751, 3
      %v826 = vrot.slane %v200, 3
      %v827 = vsel %vm824, %v825, %v826
      %v828 = vrot.slane %v752, 3
      %v829 = vrot.slane %v201, 3
      %v830 = vsel %vm824, %v828, %v829
      %v831 = vrot.slane %v202, 3
      %v832 = vsel %vm824, %v826, %v831
      %v833 = vrot.slane %v203, 3
      %v834 = vsel %vm824, %v829, %v833
      %v835 = vrot.slane %v204, 3
      %v836 = vsel %vm824, %v831, %v835
      %v837 = vrot.slane %v205, 3
      %v838 = vsel %vm824, %v833, %v837
      %v839 = vrot.slane %v753, 3
      %v840 = vsel %vm824, %v835, %v839
      %v841 = vrot.slane %v754, 3
      %v842 = vsel %vm824, %v837, %v841
      %851 = vmatprep.subr.mxu0 %v757
      %852 = vmatpush1.msra.mxu0 %v756
      %853 = vmatprep.subr.mxu0 %v759
      %854 = vmatpush1.msra.mxu0 %v758
      %855 = vmatprep.subr.mxu0 %v761
      %856 = vmatpush1.msra.mxu0 %v760
      %857 = vmatprep.subr.mxu0 %v763
      %858 = vmatpush1.msra.mxu0 %v762
      %859 = vmatprep.subr.mxu0 %v765
      %860 = vmatpush1.msra.mxu0 %v764
      %861 = vmatprep.subr.mxu0 %v767
      %862 = vmatpush1.msra.mxu0 %v766
      %863 = vmatprep.subr.mxu0 %v769
      %864 = vmatpush1.msra.mxu0 %v768
      %865 = vmatprep.subr.mxu0 %v771
      %866 = vmatpush1.msra.mxu0 %v770
      %867 = vmatprep.subr.mxu0 %v773
      %868 = vmatpush1.msra.mxu0 %v772
      %869 = vmatprep.subr.mxu0 %v775
      %870 = vmatpush1.msra.mxu0 %v774
      %871 = vmatprep.subr.mxu0 %v777
      %872 = vmatpush1.msra.mxu0 %v776
      %873 = vmatprep.subr.mxu0 %v779
      %874 = vmatpush1.msra.mxu0 %v778
      %875 = vmatprep.subr.mxu0 %v781
      %876 = vmatpush1.msra.mxu0 %v780
      %877 = vmatprep.subr.mxu0 %v783
      %878 = vmatpush1.msra.mxu0 %v782
      %879 = vmatprep.subr.mxu0 %v785
      %880 = vmatpush1.msra.mxu0 %v784
      %881 = vmatprep.subr.mxu0 %v787
      %882 = vmatpush1.msra.mxu0 %v786
      %883 = vmatprep.subr.mxu0 %v789
      %884 = vmatpush1.msra.mxu0 %v788
      %885 = vmatprep.subr.mxu0 %v791
      %886 = vmatpush1.msra.mxu0 %v790
      %887 = vmatprep.subr.mxu0 %v793
      %888 = vmatpush1.msra.mxu0 %v792
      %889 = vmatprep.subr.mxu0 %v795
      %890 = vmatpush1.msra.mxu0 %v794
      %891 = vmatprep.subr.mxu0 %v797
      %892 = vmatpush1.msra.mxu0 %v796
      %893 = vmatprep.subr.mxu0 %v799
      %894 = vmatpush1.msra.mxu0 %v798
      %895 = vmatprep.subr.mxu0 %v801
      %896 = vmatpush1.msra.mxu0 %v800
      %897 = vmatprep.subr.mxu0 %v803
      %898 = vmatpush1.msra.mxu0 %v802
      %899 = vmatprep.subr.mxu0 %v805
      %900 = vmatpush1.msra.mxu0 %v804
      %901 = vmatprep.subr.mxu0 %v807
      %902 = vmatpush1.msra.mxu0 %v806
      %903 = vmatprep.subr.mxu0 %v809
      %904 = vmatpush1.msra.mxu0 %v808
      %905 = vmatprep.subr.mxu0 %v811
      %906 = vmatpush1.msra.mxu0 %v810
      %907 = vmatprep.subr.mxu0 %v813
      %908 = vmatpush1.msra.mxu0 %v812
      %909 = vmatprep.subr.mxu0 %v815
      %910 = vmatpush1.msra.mxu0 %v814
      %911 = vmatprep.subr.mxu0 %v817
      %912 = vmatpush1.msra.mxu0 %v816
      %913 = vmatprep.subr.mxu0 %v819
      %914 = vmatpush1.msra.mxu0 %v818
      %915 = vmatprep.mubr.f32.mxu0 %v830
      %916 = vmatmul.mubr.f32.gmra.mrb[0].mxu0 %v827
      %v917 = vpop.f32.mrb[0].mxu0
      %v918 = vadd.f32 0.0, %v917
      %v919 = vpop.f32.mrb[0].mxu0
      %v920 = vadd.f32 0.0, %v919
      %921 = vmatprep.mubr.f32.mxu0 %v834
      %922 = vmatmul.mubr.f32.gmra.mrb[0].mxu0 %v832
      %v923 = vpop.f32.mrb[0].mxu0
      %v924 = vadd.f32 0.0, %v923
      %v925 = vpop.f32.mrb[0].mxu0
      %v926 = vadd.f32 0.0, %v925
      %927 = vmatprep.mubr.f32.mxu0 %v838
      %928 = vmatmul.mubr.f32.gmra.mrb[0].mxu0 %v836
      %v929 = vpop.f32.mrb[0].mxu0
      %v930 = vadd.f32 0.0, %v929
      %v931 = vpop.f32.mrb[0].mxu0
      %v932 = vadd.f32 0.0, %v931
      %933 = vmatprep.mubr.f32.mxu0 %v842
      %934 = vmatmul.mubr.f32.gmra.mrb[0].mxu0 %v840
      %v935 = vpop.f32.mrb[0].mxu0
      %v936 = vadd.f32 0.0, %v935
      %v937 = vpop.f32.mrb[0].mxu0
      %v938 = vadd.f32 0.0, %v937
      %939 = vdwg.mxu0
      %v940 = vadd.f32 %v743, %v918
      %v941 = vadd.f32 %v744, %v920
      %v942 = vadd.f32 %v745, %v924
      %v943 = vadd.f32 %v746, %v926
      %v944 = vadd.f32 %v747, %v930
      %v945 = vadd.f32 %v748, %v932
      %v946 = vadd.f32 %v749, %v936
      %v947 = vadd.f32 %v750, %v938
      %v948 = vld [vmem:[%s192] sm:$0xf0]
      %v949 = vld [vmem:[%s192 + $0x8] sm:$0xf0]
      %v950 = vld [vmem:[%s192 + $0x40] sm:$0xf]
      %v951 = vld [vmem:[%s192 + $0x48] sm:$0xf]
      %s952 = scalar_lea.vmem %s1, 2048
      %v953 = vld [vmem:[%s952] sm:$0xff]
      %v954 = vld [vmem:[%s952 + $0x8] sm:$0xff]
      %v955 = vld [vmem:[%s952 + $0x10] sm:$0xff]
      %v956 = vld [vmem:[%s952 + $0x18] sm:$0xff]
      %v957 = vld [vmem:[%s952 + $0x20] sm:$0xff]
      %v958 = vld [vmem:[%s952 + $0x28] sm:$0xff]
      %v959 = vld [vmem:[%s952 + $0x30] sm:$0xff]
      %v960 = vld [vmem:[%s952 + $0x38] sm:$0xff]
      %v961 = vld [vmem:[%s952 + $0x40] sm:$0xff]
      %v962 = vld [vmem:[%s952 + $0x48] sm:$0xff]
      %v963 = vld [vmem:[%s952 + $0x50] sm:$0xff]
      %v964 = vld [vmem:[%s952 + $0x58] sm:$0xff]
      %v965 = vld [vmem:[%s952 + $0x60] sm:$0xff]
      %v966 = vld [vmem:[%s952 + $0x68] sm:$0xff]
      %v967 = vld [vmem:[%s952 + $0x70] sm:$0xff]
      %v968 = vld [vmem:[%s952 + $0x78] sm:$0xff]
      %v969 = vld [vmem:[%s952 + $0x80] sm:$0xff]
      %v970 = vld [vmem:[%s952 + $0x88] sm:$0xff]
      %v971 = vld [vmem:[%s952 + $0x90] sm:$0xff]
      %v972 = vld [vmem:[%s952 + $0x98] sm:$0xff]
      %v973 = vld [vmem:[%s952 + $0xa0] sm:$0xff]
      %v974 = vld [vmem:[%s952 + $0xa8] sm:$0xff]
      %v975 = vld [vmem:[%s952 + $0xb0] sm:$0xff]
      %v976 = vld [vmem:[%s952 + $0xb8] sm:$0xff]
      %v977 = vld [vmem:[%s952 + $0xc0] sm:$0xff]
      %v978 = vld [vmem:[%s952 + $0xc8] sm:$0xff]
      %v979 = vld [vmem:[%s952 + $0xd0] sm:$0xff]
      %v980 = vld [vmem:[%s952 + $0xd8] sm:$0xff]
      %v981 = vld [vmem:[%s952 + $0xe0] sm:$0xff]
      %v982 = vld [vmem:[%s952 + $0xe8] sm:$0xff]
      %v983 = vld [vmem:[%s952 + $0xf0] sm:$0xff]
      %v984 = vld [vmem:[%s952 + $0xf8] sm:$0xff]
      %v985 = vld [vmem:[%s952 + $0x100] sm:$0xff]
      %v986 = vld [vmem:[%s952 + $0x108] sm:$0xff]
      %v987 = vld [vmem:[%s952 + $0x110] sm:$0xff]
      %v988 = vld [vmem:[%s952 + $0x118] sm:$0xff]
      %v989 = vld [vmem:[%s952 + $0x120] sm:$0xff]
      %v990 = vld [vmem:[%s952 + $0x128] sm:$0xff]
      %v991 = vld [vmem:[%s952 + $0x130] sm:$0xff]
      %v992 = vld [vmem:[%s952 + $0x138] sm:$0xff]
      %v993 = vld [vmem:[%s952 + $0x140] sm:$0xff]
      %v994 = vld [vmem:[%s952 + $0x148] sm:$0xff]
      %v995 = vld [vmem:[%s952 + $0x150] sm:$0xff]
      %v996 = vld [vmem:[%s952 + $0x158] sm:$0xff]
      %v997 = vld [vmem:[%s952 + $0x160] sm:$0xff]
      %v998 = vld [vmem:[%s952 + $0x168] sm:$0xff]
      %v999 = vld [vmem:[%s952 + $0x170] sm:$0xff]
      %v1000 = vld [vmem:[%s952 + $0x178] sm:$0xff]
      %v1001 = vld [vmem:[%s952 + $0x180] sm:$0xff]
      %v1002 = vld [vmem:[%s952 + $0x188] sm:$0xff]
      %v1003 = vld [vmem:[%s952 + $0x190] sm:$0xff]
      %v1004 = vld [vmem:[%s952 + $0x198] sm:$0xff]
      %v1005 = vld [vmem:[%s952 + $0x1a0] sm:$0xff]
      %v1006 = vld [vmem:[%s952 + $0x1a8] sm:$0xff]
      %v1007 = vld [vmem:[%s952 + $0x1b0] sm:$0xff]
      %v1008 = vld [vmem:[%s952 + $0x1b8] sm:$0xff]
      %v1009 = vld [vmem:[%s952 + $0x1c0] sm:$0xff]
      %v1010 = vld [vmem:[%s952 + $0x1c8] sm:$0xff]
      %v1011 = vld [vmem:[%s952 + $0x1d0] sm:$0xff]
      %v1012 = vld [vmem:[%s952 + $0x1d8] sm:$0xff]
      %v1013 = vld [vmem:[%s952 + $0x1e0] sm:$0xff]
      %v1014 = vld [vmem:[%s952 + $0x1e8] sm:$0xff]
      %v1015 = vld [vmem:[%s952 + $0x1f0] sm:$0xff]
      %v1016 = vld [vmem:[%s952 + $0x1f8] sm:$0xff]
      %vm1021 = vcmask 1043456
      %v1022 = vrot.slane %v948, 4
      %v1023 = vrot.slane %v200, 4
      %v1024 = vsel %vm1021, %v1022, %v1023
      %v1025 = vrot.slane %v949, 4
      %v1026 = vrot.slane %v201, 4
      %v1027 = vsel %vm1021, %v1025, %v1026
      %v1028 = vrot.slane %v202, 4
      %v1029 = vsel %vm1021, %v1023, %v1028
      %v1030 = vrot.slane %v203, 4
      %v1031 = vsel %vm1021, %v1026, %v1030
      %v1032 = vrot.slane %v204, 4
      %v1033 = vsel %vm1021, %v1028, %v1032
      %v1034 = vrot.slane %v205, 4
      %v1035 = vsel %vm1021, %v1030, %v1034
      %v1036 = vrot.slane %v950, 4
      %v1037 = vsel %vm1021, %v1032, %v1036
      %v1038 = vrot.slane %v951, 4
      %v1039 = vsel %vm1021, %v1034, %v1038
      %1048 = vmatprep.subr.mxu0 %v954
      %1049 = vmatpush1.msra.mxu0 %v953
      %1050 = vmatprep.subr.mxu0 %v956
      %1051 = vmatpush1.msra.mxu0 %v955
      %1052 = vmatprep.subr.mxu0 %v958
      %1053 = vmatpush1.msra.mxu0 %v957
      %1054 = vmatprep.subr.mxu0 %v960
      %1055 = vmatpush1.msra.mxu0 %v959
      %1056 = vmatprep.subr.mxu0 %v962
      %1057 = vmatpush1.msra.mxu0 %v961
      %1058 = vmatprep.subr.mxu0 %v964
      %1059 = vmatpush1.msra.mxu0 %v963
      %1060 = vmatprep.subr.mxu0 %v966
      %1061 = vmatpush1.msra.mxu0 %v965
      %1062 = vmatprep.subr.mxu0 %v968
      %1063 = vmatpush1.msra.mxu0 %v967
      %1064 = vmatprep.subr.mxu0 %v970
      %1065 = vmatpush1.msra.mxu0 %v969
      %1066 = vmatprep.subr.mxu0 %v972
      %1067 = vmatpush1.msra.mxu0 %v971
      %1068 = vmatprep.subr.mxu0 %v974
      %1069 = vmatpush1.msra.mxu0 %v973
      %1070 = vmatprep.subr.mxu0 %v976
      %1071 = vmatpush1.msra.mxu0 %v975
      %1072 = vmatprep.subr.mxu0 %v978
      %1073 = vmatpush1.msra.mxu0 %v977
      %1074 = vmatprep.subr.mxu0 %v980
      %1075 = vmatpush1.msra.mxu0 %v979
      %1076 = vmatprep.subr.mxu0 %v982
      %1077 = vmatpush1.msra.mxu0 %v981
      %1078 = vmatprep.subr.mxu0 %v984
      %1079 = vmatpush1.msra.mxu0 %v983
      %1080 = vmatprep.subr.mxu0 %v986
      %1081 = vmatpush1.msra.mxu0 %v985
      %1082 = vmatprep.subr.mxu0 %v988
      %1083 = vmatpush1.msra.mxu0 %v987
      %1084 = vmatprep.subr.mxu0 %v990
      %1085 = vmatpush1.msra.mxu0 %v989
      %1086 = vmatprep.subr.mxu0 %v992
      %1087 = vmatpush1.msra.mxu0 %v991
      %1088 = vmatprep.subr.mxu0 %v994
      %1089 = vmatpush1.msra.mxu0 %v993
      %1090 = vmatprep.subr.mxu0 %v996
      %1091 = vmatpush1.msra.mxu0 %v995
      %1092 = vmatprep.subr.mxu0 %v998
      %1093 = vmatpush1.msra.mxu0 %v997
      %1094 = vmatprep.subr.mxu0 %v1000
      %1095 = vmatpush1.msra.mxu0 %v999
      %1096 = vmatprep.subr.mxu0 %v1002
      %1097 = vmatpush1.msra.mxu0 %v1001
      %1098 = vmatprep.subr.mxu0 %v1004
      %1099 = vmatpush1.msra.mxu0 %v1003
      %1100 = vmatprep.subr.mxu0 %v1006
      %1101 = vmatpush1.msra.mxu0 %v1005
      %1102 = vmatprep.subr.mxu0 %v1008
      %1103 = vmatpush1.msra.mxu0 %v1007
      %1104 = vmatprep.subr.mxu0 %v1010
      %1105 = vmatpush1.msra.mxu0 %v1009
      %1106 = vmatprep.subr.mxu0 %v1012
      %1107 = vmatpush1.msra.mxu0 %v1011
      %1108 = vmatprep.subr.mxu0 %v1014
      %1109 = vmatpush1.msra.mxu0 %v1013
      %1110 = vmatprep.subr.mxu0 %v1016
      %1111 = vmatpush1.msra.mxu0 %v1015
      %1112 = vmatprep.mubr.f32.mxu0 %v1027
      %1113 = vmatmul.mubr.f32.gmra.mrb[0].mxu0 %v1024
      %v1114 = vpop.f32.mrb[0].mxu0
      %v1115 = vadd.f32 0.0, %v1114
      %v1116 = vpop.f32.mrb[0].mxu0
      %v1117 = vadd.f32 0.0, %v1116
      %1118 = vmatprep.mubr.f32.mxu0 %v1031
      %1119 = vmatmul.mubr.f32.gmra.mrb[0].mxu0 %v1029
      %v1120 = vpop.f32.mrb[0].mxu0
      %v1121 = vadd.f32 0.0, %v1120
      %v1122 = vpop.f32.mrb[0].mxu0
      %v1123 = vadd.f32 0.0, %v1122
      %1124 = vmatprep.mubr.f32.mxu0 %v1035
      %1125 = vmatmul.mubr.f32.gmra.mrb[0].mxu0 %v1033
      %v1126 = vpop.f32.mrb[0].mxu0
      %v1127 = vadd.f32 0.0, %v1126
      %v1128 = vpop.f32.mrb[0].mxu0
      %v1129 = vadd.f32 0.0, %v1128
      %1130 = vmatprep.mubr.f32.mxu0 %v1039
      %1131 = vmatmul.mubr.f32.gmra.mrb[0].mxu0 %v1037
      %v1132 = vpop.f32.mrb[0].mxu0
      %v1133 = vadd.f32 0.0, %v1132
      %v1134 = vpop.f32.mrb[0].mxu0
      %v1135 = vadd.f32 0.0, %v1134
      %1136 = vdwg.mxu0
      %v1137 = vadd.f32 %v940, %v1115
      %v1138 = vadd.f32 %v941, %v1117
      %v1139 = vadd.f32 %v942, %v1121
      %v1140 = vadd.f32 %v943, %v1123
      %v1141 = vadd.f32 %v944, %v1127
      %v1142 = vadd.f32 %v945, %v1129
      %v1143 = vadd.f32 %v946, %v1133
      %v1144 = vadd.f32 %v947, %v1135
      %v1145 = vld [vmem:[%s2] sm:$0x3]
      %v1147 = vlaneseq
      %v1148 = vshrl.u32 %v1147, 7
      %v1149 = vsub.s32 0, %v1148
      %v1150 = vrot.slane %v1145, %v1149
      %v1151 = vlaneseq
      %v1152 = vshrl.u32 %v1151, 7
      %v1153 = vsub.s32 1, %v1152
      %v1154 = vrot.slane %v1145, %v1153
      %v1157 = vmul.f32 %v1137, %v1150
      %v1158 = vmul.f32 %v1138, %v1154
      %v1159 = vmul.f32 %v1139, %v1150
      %v1160 = vmul.f32 %v1140, %v1154
      %v1161 = vmul.f32 %v1141, %v1150
      %v1162 = vmul.f32 %v1142, %v1154
      %v1163 = vmul.f32 %v1143, %v1150
      %v1164 = vmul.f32 %v1144, %v1154
      %v1165 = vld [vmem:[%s3] sm:$0x3]
      %v1167 = vlaneseq
      %v1168 = vshrl.u32 %v1167, 7
      %v1169 = vsub.s32 0, %v1168
      %v1170 = vrot.slane %v1165, %v1169
      %v1171 = vlaneseq
      %v1172 = vshrl.u32 %v1171, 7
      %v1173 = vsub.s32 1, %v1172
      %v1174 = vrot.slane %v1165, %v1173
      %v1177 = vadd.f32 %v1157, %v1170
      %v1178 = vadd.f32 %v1158, %v1174
      %v1179 = vadd.f32 %v1159, %v1170
      %v1180 = vadd.f32 %v1160, %v1174
      %v1181 = vadd.f32 %v1161, %v1170
      %v1182 = vadd.f32 %v1162, %v1174
      %v1183 = vadd.f32 %v1163, %v1170
      %v1184 = vadd.f32 %v1164, %v1174
      %v1185 = vmax.f32 %v1177, 0.0
      %v1186 = vmax.f32 %v1178, 0.0
      %v1187 = vmax.f32 %v1179, 0.0
      %v1188 = vmax.f32 %v1180, 0.0
      %v1189 = vmax.f32 %v1181, 0.0
      %v1190 = vmax.f32 %v1182, 0.0
      %v1191 = vmax.f32 %v1183, 0.0
      %v1192 = vmax.f32 %v1184, 0.0
      %1193 = vst [vmem:[%s197] sm:$0xff] %v1185
      %1194 = vst [vmem:[%s197 + $0x8] sm:$0xff] %v1186
      %1195 = vst [vmem:[%s197 + $0x10] sm:$0xff] %v1187
      %1196 = vst [vmem:[%s197 + $0x18] sm:$0xff] %v1188
      %1197 = vst [vmem:[%s197 + $0x20] sm:$0xff] %v1189
      %1198 = vst [vmem:[%s197 + $0x28] sm:$0xff] %v1190
      %1199 = vst [vmem:[%s197 + $0x30] sm:$0xff] %v1191
      %1200 = vst [vmem:[%s197 + $0x38] sm:$0xff] %v1192
      %p1201 = scmp.lt.s32.totalorder %s15, 1
      %s1202 = scalar_select %p1201, %s15, 1
      %s1203 = smul.addr %s1202, 8
      %s1204 = smul.addr %s1203, 8
      %s1205 = scalar_lea.vmem %s4, %s1204
      // Predicated region
      $region37: #{encoder_forward.5} parent=35 // pred_check
        %p1206 = pneg %p122
      $region38: #{encoder_forward.5} parent=35 // pred_check_branch
        %1208 = sbr.rel (%p1206) target = $region40
      $region39: #{encoder_forward.5} parent=35 // pred_region
        _
      $region40: #{encoder_forward.5} parent=35 // pred_fallthru
        _
    $region36: #{encoder_forward.5} parent=5 // pred_fallthru
      _
    %p1209 = scmp.le.s32.totalorder 2, %s10
    // Predicated region
    $region41: #{encoder_forward.5} parent=5 // pred_check
      %p1210 = pneg %p1209
    $region42: #{encoder_forward.5} parent=5 // pred_check_branch
      %1212 = sbr.rel (%p1210) target = $region44
    $region43: #{encoder_forward.5} parent=5 // pred_region
      %s1213 = ssub.s32 %s10, 2
      // Predicated region
      $region45: #{encoder_forward.5} parent=43 // pred_check
        %p1214 = pneg %p128
      $region46: #{encoder_forward.5} parent=43 // pred_check_branch
        %1216 = sbr.rel (%p1214) target = $region48
      $region47: #{encoder_forward.5} parent=43 // pred_region
        %p1217 = scmp.lt.s32.totalorder %s16, 1
        %s1218 = scalar_select %p1217, %s16, 1
        %s1219 = smul.addr %s1218, 8
        %s1220 = smul.addr %s1219, 8
        %s1221 = scalar_lea.vmem %s4, %s1220
      $region48: #{encoder_forward.5} parent=43 // pred_fallthru
        _
    $region44: #{encoder_forward.5} parent=5 // pred_fallthru
      _
  $region6: #{encoder_forward.5} parent=0 // loop_footer
    %s14 = sadd.s32 1, %s10
  $region7: #{encoder_forward.5} parent=0 // loop_footer_branch
    %9 = sbr.rel target = $region3
  $region8: #{encoder_forward.5} parent=0 // loop_exit
    _

// kernel: encoder_forward.7
$region0: #{encoder_forward.7}
  #allocation0 [shape = 'u32[]', space=smem, size = 0x4, offset = 0x4, fixed_abs, tag = 'smem constant byte address 0x4 - core index']
  #allocation1 [shape = 'u32[144,128]{1,0:T(1,128)}', space=vmem, size = 0x12000, scoped, tag = 'internal scratch']
  #allocation2 [shape = 'f32[2,128]{1,0:T(2,128)}', space=vmem, size = 0x400, scoped, tag = 'scratch operand']
  #allocation3 [shape = 'f32[2,128]{1,0:T(2,128)}', space=vmem, size = 0x400, scoped, tag = 'scratch operand']
  #allocation4 [shape = 'f32[2,128]{1,0:T(2,128)}', space=vmem, size = 0x400, scoped, tag = 'scratch operand']
  #allocation5 [shape = 'f32[2,128]{1,0:T(2,128)}', space=vmem, size = 0x400, scoped, tag = 'scratch operand']
  %s0 = inlined_call_operand.vmem [shape: f32[32,2,256], index: 0, kind: input, shape index: {}, may-alias: {0,1}]
  %s1 = inlined_call_operand.vmem [shape: f32[32,2,256], index: 1, kind: input, shape index: {}, may-alias: {0,1}]
  %s2 = inlined_call_operand.vmem [shape: s32[2,1], index: 2, kind: input, shape index: {}]
  %s3 = inlined_call_operand.vmem [shape: f32[256,512], index: 3, kind: input, shape index: {}]
  %s4 = inlined_call_operand.vmem [shape: f32[128,512], index: 4, kind: input, shape index: {}]
  %s5 = inlined_call_operand.vmem [shape: f32[1,512], index: 5, kind: input, shape index: {}]
  %s6 = inlined_call_operand.vmem [shape: f32[256,512], index: 6, kind: input, shape index: {}]
  %s7 = inlined_call_operand.vmem [shape: f32[128,512], index: 7, kind: input, shape index: {}]
  %s8 = inlined_call_operand.vmem [shape: f32[1,512], index: 8, kind: input, shape index: {}]
  %s9 = inlined_call_operand.vmem [shape: f32[32,2,128], index: 9, kind: output, shape index: {0}]
  %s10 = inlined_call_operand.vmem [shape: f32[32,2,128], index: 10, kind: output, shape index: {1}]
  %11 = xla_tuple %s9, %s10
  %s12 = sld [smem:[#allocation0]]
  $region81: #{encoder_forward.7} parent=0
    _
  %s14 = ssub.s32 1, %s12
  %s15 = scalar_select 0, %s14, %s12
  loop: start=0, step=1, limit=34
  $region2: #{encoder_forward.7} parent=0 // loop_pre_header
    _
  $region3: #{encoder_forward.7} parent=0 // loop_header
    %s17 = sphi 0, %s21
    %p18 = scmp.ge.s32.totalorder %s17, 34
    %s27 = sphi 0, %s29
    %s30 = sphi 0, %s27
    %s31 = sphi 0, %s30
    %s47 = sphi 0, %s31
    %s55 = sphi 0, %s57
    %s58 = sphi 0, %s55
    %s59 = sphi 0, %s58
    %s75 = sphi 0, %s59
    %s79 = sphi 0, %s79
    %s81 = sphi 0, %s79
    %s82 = sphi 0, %s81
    %s96 = sphi 0, %s82
    %s100 = sphi 0, %s100
    %s102 = sphi 0, %s100
    %s103 = sphi 0, %s102
    %s117 = sphi 0, %s103
    %s121 = sphi 0, %s121
    %s123 = sphi 0, %s121
    %s124 = sphi 0, %s123
    %s138 = sphi 0, %s124
    %s142 = sphi 0, %s142
    %s144 = sphi 0, %s142
    %s145 = sphi 0, %s144
    %s159 = sphi 0, %s145
    %s163 = sphi 0, %s163
    %s165 = sphi 0, %s163
    %s166 = sphi 0, %s165
    %s180 = sphi 0, %s166
    %s184 = sphi 0, %s184
    %s186 = sphi 0, %s184
    %s187 = sphi 0, %s186
    %s201 = sphi 0, %s187
    %s205 = sphi 0, %s205
    %s207 = sphi 0, %s205
    %s208 = sphi 0, %s207
    %s222 = sphi 0, %s208
    %s228 = sphi 0, %s230
    %s231 = sphi 0, %s228
    %s232 = sphi 0, %s231
    %s248 = sphi 0, %s232
    %s256 = sphi 0, %s258
    %s259 = sphi 0, %s256
    %s260 = sphi 0, %s259
    %s276 = sphi 0, %s260
  $region4: #{encoder_forward.7} parent=0 // loop_header_branch
    %20 = sbr.rel (%p18) target = $region8
  $region5: #{encoder_forward.7} parent=0 // loop_body
    %s22 = ssub.s32 %s17, 1
    %s23 = ssub.s32 %s17, 2
    %s24 = sadd.s32 %s17, 1
    %s25 = ssub.s32 %s17, %s24
    %p26 = scmp.eq.s32.totalorder %s25, 0
    %s28 = sadd.s32 %s27, 1
    %s29 = scalar_select %p26, %s27, %s28
    %p32 = pneg %p26
    %p33 = scmp.eq.s32.totalorder %s17, 31
    %p34 = por %p32, %p33
    %p35 = scmp.ne.s32.totalorder %s27, %s30
    %p36 = scmp.eq.s32.totalorder %s17, 0
    %p37 = por %p35, %p36
    %p38 = scmp.ne.s32.totalorder %s27, %s30
    %p39 = scmp.eq.s32.totalorder %s22, 31
    %p40 = por %p38, %p39
    %p41 = scmp.ne.s32.totalorder %s30, %s31
    %p42 = scmp.eq.s32.totalorder %s22, 0
    %p43 = por %p41, %p42
    %p44 = scmp.ne.s32.totalorder %s30, %s31
    %p45 = scmp.eq.s32.totalorder %s23, 31
    %p46 = por %p44, %p45
    %p48 = scmp.ne.s32.totalorder %s31, %s47
    %p49 = scmp.eq.s32.totalorder %s23, 0
    %p50 = por %p48, %p49
    %s51 = ssub.s32 31, %s17
    %s52 = ssub.s32 31, %s24
    %s53 = ssub.s32 %s51, %s52
    %p54 = scmp.eq.s32.totalorder %s53, 0
    %s56 = sadd.s32 %s55, 1
    %s57 = scalar_select %p54, %s55, %s56
    %p60 = pneg %p54
    %p61 = scmp.eq.s32.totalorder %s17, 31
    %p62 = por %p60, %p61
    %p63 = scmp.ne.s32.totalorder %s55, %s58
    %p64 = scmp.eq.s32.totalorder %s17, 0
    %p65 = por %p63, %p64
    %p66 = scmp.ne.s32.totalorder %s55, %s58
    %p67 = scmp.eq.s32.totalorder %s22, 31
    %p68 = por %p66, %p67
    %p69 = scmp.ne.s32.totalorder %s58, %s59
    %p70 = scmp.eq.s32.totalorder %s22, 0
    %p71 = por %p69, %p70
    %p72 = scmp.ne.s32.totalorder %s58, %s59
    %p73 = scmp.eq.s32.totalorder %s23, 31
    %p74 = por %p72, %p73
    %p76 = scmp.ne.s32.totalorder %s59, %s75
    %p77 = scmp.eq.s32.totalorder %s23, 0
    %p78 = por %p76, %p77
    %s80 = sadd.s32 %s79, 1
    %p83 = scmp.eq.s32.totalorder %s17, 31
    %p84 = scmp.ne.s32.totalorder %s79, %s81
    %p85 = scmp.eq.s32.totalorder %s17, 0
    %p86 = por %p84, %p85
    %p87 = scmp.ne.s32.totalorder %s79, %s81
    %p88 = scmp.eq.s32.totalorder %s22, 31
    %p89 = por %p87, %p88
    %p90 = scmp.ne.s32.totalorder %s81, %s82
    %p91 = scmp.eq.s32.totalorder %s22, 0
    %p92 = por %p90, %p91
    %p93 = scmp.ne.s32.totalorder %s81, %s82
    %p94 = scmp.eq.s32.totalorder %s23, 31
    %p95 = por %p93, %p94
    %p97 = scmp.ne.s32.totalorder %s82, %s96
    %p98 = scmp.eq.s32.totalorder %s23, 0
    %p99 = por %p97, %p98
    %s101 = sadd.s32 %s100, 1
    %p104 = scmp.eq.s32.totalorder %s17, 31
    %p105 = scmp.ne.s32.totalorder %s100, %s102
    %p106 = scmp.eq.s32.totalorder %s17, 0
    %p107 = por %p105, %p106
    %p108 = scmp.ne.s32.totalorder %s100, %s102
    %p109 = scmp.eq.s32.totalorder %s22, 31
    %p110 = por %p108, %p109
    %p111 = scmp.ne.s32.totalorder %s102, %s103
    %p112 = scmp.eq.s32.totalorder %s22, 0
    %p113 = por %p111, %p112
    %p114 = scmp.ne.s32.totalorder %s102, %s103
    %p115 = scmp.eq.s32.totalorder %s23, 31
    %p116 = por %p114, %p115
    %p118 = scmp.ne.s32.totalorder %s103, %s117
    %p119 = scmp.eq.s32.totalorder %s23, 0
    %p120 = por %p118, %p119
    %s122 = sadd.s32 %s121, 1
    %p125 = scmp.eq.s32.totalorder %s17, 31
    %p126 = scmp.ne.s32.totalorder %s121, %s123
    %p127 = scmp.eq.s32.totalorder %s17, 0
    %p128 = por %p126, %p127
    %p129 = scmp.ne.s32.totalorder %s121, %s123
    %p130 = scmp.eq.s32.totalorder %s22, 31
    %p131 = por %p129, %p130
    %p132 = scmp.ne.s32.totalorder %s123, %s124
    %p133 = scmp.eq.s32.totalorder %s22, 0
    %p134 = por %p132, %p133
    %p135 = scmp.ne.s32.totalorder %s123, %s124
    %p136 = scmp.eq.s32.totalorder %s23, 31
    %p137 = por %p135, %p136
    %p139 = scmp.ne.s32.totalorder %s124, %s138
    %p140 = scmp.eq.s32.totalorder %s23, 0
    %p141 = por %p139, %p140
    %s143 = sadd.s32 %s142, 1
    %p146 = scmp.eq.s32.totalorder %s17, 31
    %p147 = scmp.ne.s32.totalorder %s142, %s144
    %p148 = scmp.eq.s32.totalorder %s17, 0
    %p149 = por %p147, %p148
    %p150 = scmp.ne.s32.totalorder %s142, %s144
    %p151 = scmp.eq.s32.totalorder %s22, 31
    %p152 = por %p150, %p151
    %p153 = scmp.ne.s32.totalorder %s144, %s145
    %p154 = scmp.eq.s32.totalorder %s22, 0
    %p155 = por %p153, %p154
    %p156 = scmp.ne.s32.totalorder %s144, %s145
    %p157 = scmp.eq.s32.totalorder %s23, 31
    %p158 = por %p156, %p157
    %p160 = scmp.ne.s32.totalorder %s145, %s159
    %p161 = scmp.eq.s32.totalorder %s23, 0
    %p162 = por %p160, %p161
    %s164 = sadd.s32 %s163, 1
    %p167 = scmp.eq.s32.totalorder %s17, 31
    %p168 = scmp.ne.s32.totalorder %s163, %s165
    %p169 = scmp.eq.s32.totalorder %s17, 0
    %p170 = por %p168, %p169
    %p171 = scmp.ne.s32.totalorder %s163, %s165
    %p172 = scmp.eq.s32.totalorder %s22, 31
    %p173 = por %p171, %p172
    %p174 = scmp.ne.s32.totalorder %s165, %s166
    %p175 = scmp.eq.s32.totalorder %s22, 0
    %p176 = por %p174, %p175
    %p177 = scmp.ne.s32.totalorder %s165, %s166
    %p178 = scmp.eq.s32.totalorder %s23, 31
    %p179 = por %p177, %p178
    %p181 = scmp.ne.s32.totalorder %s166, %s180
    %p182 = scmp.eq.s32.totalorder %s23, 0
    %p183 = por %p181, %p182
    %s185 = sadd.s32 %s184, 1
    %p188 = scmp.eq.s32.totalorder %s17, 31
    %p189 = scmp.ne.s32.totalorder %s184, %s186
    %p190 = scmp.eq.s32.totalorder %s17, 0
    %p191 = por %p189, %p190
    %p192 = scmp.ne.s32.totalorder %s184, %s186
    %p193 = scmp.eq.s32.totalorder %s22, 31
    %p194 = por %p192, %p193
    %p195 = scmp.ne.s32.totalorder %s186, %s187
    %p196 = scmp.eq.s32.totalorder %s22, 0
    %p197 = por %p195, %p196
    %p198 = scmp.ne.s32.totalorder %s186, %s187
    %p199 = scmp.eq.s32.totalorder %s23, 31
    %p200 = por %p198, %p199
    %p202 = scmp.ne.s32.totalorder %s187, %s201
    %p203 = scmp.eq.s32.totalorder %s23, 0
    %p204 = por %p202, %p203
    %s206 = sadd.s32 %s205, 1
    %p209 = scmp.eq.s32.totalorder %s17, 31
    %p210 = scmp.ne.s32.totalorder %s205, %s207
    %p211 = scmp.eq.s32.totalorder %s17, 0
    %p212 = por %p210, %p211
    %p213 = scmp.ne.s32.totalorder %s205, %s207
    %p214 = scmp.eq.s32.totalorder %s22, 31
    %p215 = por %p213, %p214
    %p216 = scmp.ne.s32.totalorder %s207, %s208
    %p217 = scmp.eq.s32.totalorder %s22, 0
    %p218 = por %p216, %p217
    %p219 = scmp.ne.s32.totalorder %s207, %s208
    %p220 = scmp.eq.s32.totalorder %s23, 31
    %p221 = por %p219, %p220
    %p223 = scmp.ne.s32.totalorder %s208, %s222
    %p224 = scmp.eq.s32.totalorder %s23, 0
    %p225 = por %p223, %p224
    %s226 = ssub.s32 %s17, %s24
    %p227 = scmp.eq.s32.totalorder %s226, 0
    %s229 = sadd.s32 %s228, 1
    %s230 = scalar_select %p227, %s228, %s229
    %p233 = pneg %p227
    %p234 = scmp.eq.s32.totalorder %s17, 31
    %p235 = por %p233, %p234
    %p236 = scmp.ne.s32.totalorder %s228, %s231
    %p237 = scmp.eq.s32.totalorder %s17, 0
    %p238 = por %p236, %p237
    %p239 = scmp.ne.s32.totalorder %s228, %s231
    %p240 = scmp.eq.s32.totalorder %s22, 31
    %p241 = por %p239, %p240
    %p242 = scmp.ne.s32.totalorder %s231, %s232
    %p243 = scmp.eq.s32.totalorder %s22, 0
    %p244 = por %p242, %p243
    %p245 = scmp.ne.s32.totalorder %s231, %s232
    %p246 = scmp.eq.s32.totalorder %s23, 31
    %p247 = por %p245, %p246
    %p249 = scmp.ne.s32.totalorder %s232, %s248
    %p250 = scmp.eq.s32.totalorder %s23, 0
    %p251 = por %p249, %p250
    %s252 = ssub.s32 31, %s17
    %s253 = ssub.s32 31, %s24
    %s254 = ssub.s32 %s252, %s253
    %p255 = scmp.eq.s32.totalorder %s254, 0
    %s257 = sadd.s32 %s256, 1
    %s258 = scalar_select %p255, %s256, %s257
    %p261 = pneg %p255
    %p262 = scmp.eq.s32.totalorder %s17, 31
    %p263 = por %p261, %p262
    %p264 = scmp.ne.s32.totalorder %s256, %s259
    %p265 = scmp.eq.s32.totalorder %s17, 0
    %p266 = por %p264, %p265
    %p267 = scmp.ne.s32.totalorder %s256, %s259
    %p268 = scmp.eq.s32.totalorder %s22, 31
    %p269 = por %p267, %p268
    %p270 = scmp.ne.s32.totalorder %s259, %s260
    %p271 = scmp.eq.s32.totalorder %s22, 0
    %p272 = por %p270, %p271
    %p273 = scmp.ne.s32.totalorder %s259, %s260
    %p274 = scmp.eq.s32.totalorder %s23, 31
    %p275 = por %p273, %p274
    %p277 = scmp.ne.s32.totalorder %s260, %s276
    %p278 = scmp.eq.s32.totalorder %s23, 0
    %p279 = por %p277, %p278
    %p280 = scmp.le.s32.totalorder 1, %s17
    %p281 = scmp.lt.s32.totalorder %s17, 33
    %p282 = pnand %p280, %p281
    %p283 = pneg %p282
    // Predicated region
    $region9: #{encoder_forward.7} parent=5 // pred_check
      _
    $region10: #{encoder_forward.7} parent=5 // pred_check_branch
      %285 = sbr.rel (%p282) target = $region12
    $region11: #{encoder_forward.7} parent=5 // pred_region
      %s286 = ssub.s32 %s17, 1
      // Predicated region
      $region13: #{encoder_forward.7} parent=11 // pred_check
        %p287 = pneg %p92
      $region14: #{encoder_forward.7} parent=11 // pred_check_branch
        %289 = sbr.rel (%p287) target = $region16
      $region15: #{encoder_forward.7} parent=11 // pred_region
        _
      $region16: #{encoder_forward.7} parent=11 // pred_fallthru
        _
      // Predicated region
      $region17: #{encoder_forward.7} parent=11 // pred_check
        %p290 = pneg %p113
      $region18: #{encoder_forward.7} parent=11 // pred_check_branch
        %292 = sbr.rel (%p290) target = $region20
      $region19: #{encoder_forward.7} parent=11 // pred_region
        _
      $region20: #{encoder_forward.7} parent=11 // pred_fallthru
        _
      // Predicated region
      $region21: #{encoder_forward.7} parent=11 // pred_check
        %p293 = pneg %p134
      $region22: #{encoder_forward.7} parent=11 // pred_check_branch
        %295 = sbr.rel (%p293) target = $region24
      $region23: #{encoder_forward.7} parent=11 // pred_region
        _
      $region24: #{encoder_forward.7} parent=11 // pred_fallthru
        _
      // Predicated region
      $region25: #{encoder_forward.7} parent=11 // pred_check
        %p296 = pneg %p155
      $region26: #{encoder_forward.7} parent=11 // pred_check_branch
        %298 = sbr.rel (%p296) target = $region28
      $region27: #{encoder_forward.7} parent=11 // pred_region
        _
      $region28: #{encoder_forward.7} parent=11 // pred_fallthru
        _
      // Predicated region
      $region29: #{encoder_forward.7} parent=11 // pred_check
        %p299 = pneg %p176
      $region30: #{encoder_forward.7} parent=11 // pred_check_branch
        %301 = sbr.rel (%p299) target = $region32
      $region31: #{encoder_forward.7} parent=11 // pred_region
        _
      $region32: #{encoder_forward.7} parent=11 // pred_fallthru
        _
      // Predicated region
      $region33: #{encoder_forward.7} parent=11 // pred_check
        %p302 = pneg %p197
      $region34: #{encoder_forward.7} parent=11 // pred_check_branch
        %304 = sbr.rel (%p302) target = $region36
      $region35: #{encoder_forward.7} parent=11 // pred_region
        _
      $region36: #{encoder_forward.7} parent=11 // pred_fallthru
        _
      // Predicated region
      $region37: #{encoder_forward.7} parent=11 // pred_check
        %p305 = pneg %p218
      $region38: #{encoder_forward.7} parent=11 // pred_check_branch
        %307 = sbr.rel (%p305) target = $region40
      $region39: #{encoder_forward.7} parent=11 // pred_region
        _
      $region40: #{encoder_forward.7} parent=11 // pred_fallthru
        _
    $region12: #{encoder_forward.7} parent=5 // pred_fallthru
      _
    %p308 = scmp.lt.s32.totalorder %s17, 32
    // Predicated region
    $region41: #{encoder_forward.7} parent=5 // pred_check
      %p309 = pneg %p308
    $region42: #{encoder_forward.7} parent=5 // pred_check_branch
      %311 = sbr.rel (%p309) target = $region44
    $region43: #{encoder_forward.7} parent=5 // pred_region
      // Predicated region
      $region45: #{encoder_forward.7} parent=43 // pred_check
        %p312 = pneg %p37
      $region46: #{encoder_forward.7} parent=43 // pred_check_branch
        %314 = sbr.rel (%p312) target = $region48
      $region47: #{encoder_forward.7} parent=43 // pred_region
        %p315 = scmp.lt.s32.totalorder %s17, 31
        %s316 = scalar_select %p315, %s17, 31
        %s317 = smul.addr %s316, 2
        %s318 = smul.addr %s317, 2
        %s319 = scalar_lea.vmem %s0, %s318
      $region48: #{encoder_forward.7} parent=43 // pred_fallthru
        _
      // Predicated region
      $region49: #{encoder_forward.7} parent=43 // pred_check
        %p320 = pneg %p65
      $region50: #{encoder_forward.7} parent=43 // pred_check_branch
        %322 = sbr.rel (%p320) target = $region52
      $region51: #{encoder_forward.7} parent=43 // pred_region
        %s323 = ssub.s32 31, %s17
        %p324 = scmp.lt.s32.totalorder %s323, 31
        %s325 = scalar_select %p324, %s323, 31
        %s326 = smul.addr %s325, 2
        %s327 = smul.addr %s326, 2
        %s328 = scalar_lea.vmem %s1, %s327
        %s329 = ssub.s32 31, %s17
      $region52: #{encoder_forward.7} parent=43 // pred_fallthru
        _
    $region44: #{encoder_forward.7} parent=5 // pred_fallthru
      _
    %p330 = scmp.le.s32.totalorder 1, %s17
    %p331 = scmp.lt.s32.totalorder %s17, 33
    %p332 = pnand %p330, %p331
    %p333 = pneg %p332
    // Predicated region
    $region53: #{encoder_forward.7} parent=5 // pred_check
      _
    $region54: #{encoder_forward.7} parent=5 // pred_check_branch
      %335 = sbr.rel (%p332) target = $region56
    $region55: #{encoder_forward.7} parent=5 // pred_region
      %s336 = ssub.s32 %s17, 1
      %p337 = scmp.lt.s32.totalorder %s22, 31
      %s338 = scalar_select %p337, %s22, 31
      %s339 = smul.addr %s338, 2
      %s340 = smul.addr %s339, 2
      %s341 = scalar_lea.vmem %s0, %s340
      %p342 = pneg %p43
      %p343 = pneg %p40
      %s344 = ssub.s32 31, %s22
      %p345 = scmp.lt.s32.totalorder %s344, 31
      %s346 = scalar_select %p345, %s344, 31
      %s347 = smul.addr %s346, 2
      %s348 = smul.addr %s347, 2
      %s349 = scalar_lea.vmem %s1, %s348
      %p350 = pneg %p71
      %p351 = pneg %p68
      %p352 = pneg %p92
      %p353 = pneg %p89
      %p354 = pneg %p113
      %p355 = pneg %p110
      %p356 = pneg %p134
      %p357 = pneg %p131
      %p358 = pneg %p155
      %p359 = pneg %p152
      %p360 = pneg %p176
      %p361 = pneg %p173
      %p362 = pneg %p197
      %p363 = pneg %p194
      %p364 = pneg %p218
      %p365 = pneg %p215
      %p366 = pneg %p244
      %p367 = pneg %p241
      %p368 = scmp.lt.s32.totalorder %s22, 31
      %s369 = scalar_select %p368, %s22, 31
      %s370 = smul.addr %s369, 2
      %s371 = scalar_lea.vmem %s9, %s370
      %p372 = pneg %p272
      %p373 = pneg %p269
      %s374 = ssub.s32 31, %s22
      %p375 = scmp.lt.s32.totalorder %s374, 31
      %s376 = scalar_select %p375, %s374, 31
      %s377 = smul.addr %s376, 2
      %s378 = scalar_lea.vmem %s10, %s377
      %p379 = scmp.lt.s32.totalorder %s22, 31
      %s380 = scalar_select %p379, %s22, 31
      %s381 = smul.addr %s380, 2
      %s382 = smul.addr %s381, 2
      %s383 = scalar_lea.vmem %s0, %s382
      %s384 = ssub.s32 31, %s22
      %p385 = scmp.lt.s32.totalorder %s384, 31
      %s386 = scalar_select %p385, %s384, 31
      %s387 = smul.addr %s386, 2
      %s388 = smul.addr %s387, 2
      %s389 = scalar_lea.vmem %s1, %s388
      %s390 = ssub.s32 31, %s22
      %p391 = scmp.lt.s32.totalorder %s22, 31
      %s392 = scalar_select %p391, %s22, 31
      %s393 = smul.addr %s392, 2
      %s394 = scalar_lea.vmem %s9, %s393
      %s395 = ssub.s32 31, %s22
      %p396 = scmp.lt.s32.totalorder %s395, 31
      %s397 = scalar_select %p396, %s395, 31
      %s398 = smul.addr %s397, 2
      %s399 = scalar_lea.vmem %s10, %s398
      %s400 = ssub.s32 31, %s22
      %p401 = scmp.eq.s32.totalorder %s22, 0
      // Predicated region
      $region57: #{encoder_forward.7} parent=55 // pred_check
        %p402 = pneg %p401
      $region58: #{encoder_forward.7} parent=55 // pred_check_branch
        %404 = sbr.rel (%p402) target = $region60
      $region59: #{encoder_forward.7} parent=55 // pred_region
        %405 = vst [vmem:[#allocation2] sm:$0x3] 0.0
        %406 = vst [vmem:[#allocation3] sm:$0x3] 0.0
        %407 = vst [vmem:[#allocation4] sm:$0x3] 0.0
        %408 = vst [vmem:[#allocation5] sm:$0x3] 0.0
      $region60: #{encoder_forward.7} parent=55 // pred_fallthru
        _
      %v409 = vld [vmem:[%s2] sm:$0x3]
      %v410 = vld [vmem:[%s383] sm:$0xf]
      %v411 = vld [vmem:[#allocation2] sm:$0x3]
      %v412 = vld [vmem:[#allocation3] sm:$0x3]
      %v413 = vld [vmem:[%s3] sm:$0xff]
      %v414 = vld [vmem:[%s3 + $0x8] sm:$0xff]
      %v415 = vld [vmem:[%s3 + $0x10] sm:$0xff]
      %v416 = vld [vmem:[%s3 + $0x18] sm:$0xff]
      %v417 = vld [vmem:[%s3 + $0x20] sm:$0xff]
      %v418 = vld [vmem:[%s3 + $0x28] sm:$0xff]
      %v419 = vld [vmem:[%s3 + $0x30] sm:$0xff]
      %v420 = vld [vmem:[%s3 + $0x38] sm:$0xff]
      %v421 = vld [vmem:[%s3 + $0x40] sm:$0xff]
      %v422 = vld [vmem:[%s3 + $0x48] sm:$0xff]
      %v423 = vld [vmem:[%s3 + $0x50] sm:$0xff]
      %v424 = vld [vmem:[%s3 + $0x58] sm:$0xff]
      %v425 = vld [vmem:[%s3 + $0x60] sm:$0xff]
      %v426 = vld [vmem:[%s3 + $0x68] sm:$0xff]
      %v427 = vld [vmem:[%s3 + $0x70] sm:$0xff]
      %v428 = vld [vmem:[%s3 + $0x78] sm:$0xff]
      %v429 = vld [vmem:[%s3 + $0x80] sm:$0xff]
      %v430 = vld [vmem:[%s3 + $0x88] sm:$0xff]
      %v431 = vld [vmem:[%s3 + $0x90] sm:$0xff]
      %v432 = vld [vmem:[%s3 + $0x98] sm:$0xff]
      %v433 = vld [vmem:[%s3 + $0xa0] sm:$0xff]
      %v434 = vld [vmem:[%s3 + $0xa8] sm:$0xff]
      %v435 = vld [vmem:[%s3 + $0xb0] sm:$0xff]
      %v436 = vld [vmem:[%s3 + $0xb8] sm:$0xff]
      %v437 = vld [vmem:[%s3 + $0xc0] sm:$0xff]
      %v438 = vld [vmem:[%s3 + $0xc8] sm:$0xff]
      %v439 = vld [vmem:[%s3 + $0xd0] sm:$0xff]
      %v440 = vld [vmem:[%s3 + $0xd8] sm:$0xff]
      %v441 = vld [vmem:[%s3 + $0xe0] sm:$0xff]
      %v442 = vld [vmem:[%s3 + $0xe8] sm:$0xff]
      %v443 = vld [vmem:[%s3 + $0xf0] sm:$0xff]
      %v444 = vld [vmem:[%s3 + $0xf8] sm:$0xff]
      %v445 = vld [vmem:[%s3 + $0x100] sm:$0xff]
      %v446 = vld [vmem:[%s3 + $0x108] sm:$0xff]
      %v447 = vld [vmem:[%s3 + $0x110] sm:$0xff]
      %v448 = vld [vmem:[%s3 + $0x118] sm:$0xff]
      %v449 = vld [vmem:[%s3 + $0x120] sm:$0xff]
      %v450 = vld [vmem:[%s3 + $0x128] sm:$0xff]
      %v451 = vld [vmem:[%s3 + $0x130] sm:$0xff]
      %v452 = vld [vmem:[%s3 + $0x138] sm:$0xff]
      %v453 = vld [vmem:[%s3 + $0x140] sm:$0xff]
      %v454 = vld [vmem:[%s3 + $0x148] sm:$0xff]
      %v455 = vld [vmem:[%s3 + $0x150] sm:$0xff]
      %v456 = vld [vmem:[%s3 + $0x158] sm:$0xff]
      %v457 = vld [vmem:[%s3 + $0x160] sm:$0xff]
      %v458 = vld [vmem:[%s3 + $0x168] sm:$0xff]
      %v459 = vld [vmem:[%s3 + $0x170] sm:$0xff]
      %v460 = vld [vmem:[%s3 + $0x178] sm:$0xff]
      %v461 = vld [vmem:[%s3 + $0x180] sm:$0xff]
      %v462 = vld [vmem:[%s3 + $0x188] sm:$0xff]
      %v463 = vld [vmem:[%s3 + $0x190] sm:$0xff]
      %v464 = vld [vmem:[%s3 + $0x198] sm:$0xff]
      %v465 = vld [vmem:[%s3 + $0x1a0] sm:$0xff]
      %v466 = vld [vmem:[%s3 + $0x1a8] sm:$0xff]
      %v467 = vld [vmem:[%s3 + $0x1b0] sm:$0xff]
      %v468 = vld [vmem:[%s3 + $0x1b8] sm:$0xff]
      %v469 = vld [vmem:[%s3 + $0x1c0] sm:$0xff]
      %v470 = vld [vmem:[%s3 + $0x1c8] sm:$0xff]
      %v471 = vld [vmem:[%s3 + $0x1d0] sm:$0xff]
      %v472 = vld [vmem:[%s3 + $0x1d8] sm:$0xff]
      %v473 = vld [vmem:[%s3 + $0x1e0] sm:$0xff]
      %v474 = vld [vmem:[%s3 + $0x1e8] sm:$0xff]
      %v475 = vld [vmem:[%s3 + $0x1f0] sm:$0xff]
      %v476 = vld [vmem:[%s3 + $0x1f8] sm:$0xff]
      %v477 = vld [vmem:[%s3 + $0x200] sm:$0xff]
      %v478 = vld [vmem:[%s3 + $0x208] sm:$0xff]
      %v479 = vld [vmem:[%s3 + $0x210] sm:$0xff]
      %v480 = vld [vmem:[%s3 + $0x218] sm:$0xff]
      %v481 = vld [vmem:[%s3 + $0x220] sm:$0xff]
      %v482 = vld [vmem:[%s3 + $0x228] sm:$0xff]
      %v483 = vld [vmem:[%s3 + $0x230] sm:$0xff]
      %v484 = vld [vmem:[%s3 + $0x238] sm:$0xff]
      %v485 = vld [vmem:[%s3 + $0x240] sm:$0xff]
      %v486 = vld [vmem:[%s3 + $0x248] sm:$0xff]
      %v487 = vld [vmem:[%s3 + $0x250] sm:$0xff]
      %v488 = vld [vmem:[%s3 + $0x258] sm:$0xff]
      %v489 = vld [vmem:[%s3 + $0x260] sm:$0xff]
      %v490 = vld [vmem:[%s3 + $0x268] sm:$0xff]
      %v491 = vld [vmem:[%s3 + $0x270] sm:$0xff]
      %v492 = vld [vmem:[%s3 + $0x278] sm:$0xff]
      %v493 = vld [vmem:[%s3 + $0x280] sm:$0xff]
      %v494 = vld [vmem:[%s3 + $0x288] sm:$0xff]
      %v495 = vld [vmem:[%s3 + $0x290] sm:$0xff]
      %v496 = vld [vmem:[%s3 + $0x298] sm:$0xff]
      %v497 = vld [vmem:[%s3 + $0x2a0] sm:$0xff]
      %v498 = vld [vmem:[%s3 + $0x2a8] sm:$0xff]
      %v499 = vld [vmem:[%s3 + $0x2b0] sm:$0xff]
      %v500 = vld [vmem:[%s3 + $0x2b8] sm:$0xff]
      %v501 = vld [vmem:[%s3 + $0x2c0] sm:$0xff]
      %v502 = vld [vmem:[%s3 + $0x2c8] sm:$0xff]
      %v503 = vld [vmem:[%s3 + $0x2d0] sm:$0xff]
      %v504 = vld [vmem:[%s3 + $0x2d8] sm:$0xff]
      %v505 = vld [vmem:[%s3 + $0x2e0] sm:$0xff]
      %v506 = vld [vmem:[%s3 + $0x2e8] sm:$0xff]
      %v507 = vld [vmem:[%s3 + $0x2f0] sm:$0xff]
      %v508 = vld [vmem:[%s3 + $0x2f8] sm:$0xff]
      %v509 = vld [vmem:[%s3 + $0x300] sm:$0xff]
      %v510 = vld [vmem:[%s3 + $0x308] sm:$0xff]
      %v511 = vld [vmem:[%s3 + $0x310] sm:$0xff]
      %v512 = vld [vmem:[%s3 + $0x318] sm:$0xff]
      %v513 = vld [vmem:[%s3 + $0x320] sm:$0xff]
      %v514 = vld [vmem:[%s3 + $0x328] sm:$0xff]
      %v515 = vld [vmem:[%s3 + $0x330] sm:$0xff]
      %v516 = vld [vmem:[%s3 + $0x338] sm:$0xff]
      %v517 = vld [vmem:[%s3 + $0x340] sm:$0xff]
      %v518 = vld [vmem:[%s3 + $0x348] sm:$0xff]
      %v519 = vld [vmem:[%s3 + $0x350] sm:$0xff]
      %v520 = vld [vmem:[%s3 + $0x358] sm:$0xff]
      %v521 = vld [vmem:[%s3 + $0x360] sm:$0xff]
      %v522 = vld [vmem:[%s3 + $0x368] sm:$0xff]
      %v523 = vld [vmem:[%s3 + $0x370] sm:$0xff]
      %v524 = vld [vmem:[%s3 + $0x378] sm:$0xff]
      %v525 = vld [vmem:[%s3 + $0x380] sm:$0xff]
      %v526 = vld [vmem:[%s3 + $0x388] sm:$0xff]
      %v527 = vld [vmem:[%s3 + $0x390] sm:$0xff]
      %v528 = vld [vmem:[%s3 + $0x398] sm:$0xff]
      %v529 = vld [vmem:[%s3 + $0x3a0] sm:$0xff]
      %v530 = vld [vmem:[%s3 + $0x3a8] sm:$0xff]
      %v531 = vld [vmem:[%s3 + $0x3b0] sm:$0xff]
      %v532 = vld [vmem:[%s3 + $0x3b8] sm:$0xff]
      %v533 = vld [vmem:[%s3 + $0x3c0] sm:$0xff]
      %v534 = vld [vmem:[%s3 + $0x3c8] sm:$0xff]
      %v535 = vld [vmem:[%s3 + $0x3d0] sm:$0xff]
      %v536 = vld [vmem:[%s3 + $0x3d8] sm:$0xff]
      %v537 = vld [vmem:[%s3 + $0x3e0] sm:$0xff]
      %v538 = vld [vmem:[%s3 + $0x3e8] sm:$0xff]
      %v539 = vld [vmem:[%s3 + $0x3f0] sm:$0xff]
      %v540 = vld [vmem:[%s3 + $0x3f8] sm:$0xff]
      %v541 = vld [vmem:[%s4] sm:$0xff]
      %v542 = vld [vmem:[%s4 + $0x8] sm:$0xff]
      %v543 = vld [vmem:[%s4 + $0x10] sm:$0xff]
      %v544 = vld [vmem:[%s4 + $0x18] sm:$0xff]
      %v545 = vld [vmem:[%s4 + $0x20] sm:$0xff]
      %v546 = vld [vmem:[%s4 + $0x28] sm:$0xff]
      %v547 = vld [vmem:[%s4 + $0x30] sm:$0xff]
      %v548 = vld [vmem:[%s4 + $0x38] sm:$0xff]
      %v549 = vld [vmem:[%s4 + $0x40] sm:$0xff]
      %v550 = vld [vmem:[%s4 + $0x48] sm:$0xff]
      %v551 = vld [vmem:[%s4 + $0x50] sm:$0xff]
      %v552 = vld [vmem:[%s4 + $0x58] sm:$0xff]
      %v553 = vld [vmem:[%s4 + $0x60] sm:$0xff]
      %v554 = vld [vmem:[%s4 + $0x68] sm:$0xff]
      %v555 = vld [vmem:[%s4 + $0x70] sm:$0xff]
      %v556 = vld [vmem:[%s4 + $0x78] sm:$0xff]
      %v557 = vld [vmem:[%s4 + $0x80] sm:$0xff]
      %v558 = vld [vmem:[%s4 + $0x88] sm:$0xff]
      %v559 = vld [vmem:[%s4 + $0x90] sm:$0xff]
      %v560 = vld [vmem:[%s4 + $0x98] sm:$0xff]
      %v561 = vld [vmem:[%s4 + $0xa0] sm:$0xff]
      %v562 = vld [vmem:[%s4 + $0xa8] sm:$0xff]
      %v563 = vld [vmem:[%s4 + $0xb0] sm:$0xff]
      %v564 = vld [vmem:[%s4 + $0xb8] sm:$0xff]
      %v565 = vld [vmem:[%s4 + $0xc0] sm:$0xff]
      %v566 = vld [vmem:[%s4 + $0xc8] sm:$0xff]
      %v567 = vld [vmem:[%s4 + $0xd0] sm:$0xff]
      %v568 = vld [vmem:[%s4 + $0xd8] sm:$0xff]
      %v569 = vld [vmem:[%s4 + $0xe0] sm:$0xff]
      %v570 = vld [vmem:[%s4 + $0xe8] sm:$0xff]
      %v571 = vld [vmem:[%s4 + $0xf0] sm:$0xff]
      %v572 = vld [vmem:[%s4 + $0xf8] sm:$0xff]
      %v573 = vld [vmem:[%s4 + $0x100] sm:$0xff]
      %v574 = vld [vmem:[%s4 + $0x108] sm:$0xff]
      %v575 = vld [vmem:[%s4 + $0x110] sm:$0xff]
      %v576 = vld [vmem:[%s4 + $0x118] sm:$0xff]
      %v577 = vld [vmem:[%s4 + $0x120] sm:$0xff]
      %v578 = vld [vmem:[%s4 + $0x128] sm:$0xff]
      %v579 = vld [vmem:[%s4 + $0x130] sm:$0xff]
      %v580 = vld [vmem:[%s4 + $0x138] sm:$0xff]
      %v581 = vld [vmem:[%s4 + $0x140] sm:$0xff]
      %v582 = vld [vmem:[%s4 + $0x148] sm:$0xff]
      %v583 = vld [vmem:[%s4 + $0x150] sm:$0xff]
      %v584 = vld [vmem:[%s4 + $0x158] sm:$0xff]
      %v585 = vld [vmem:[%s4 + $0x160] sm:$0xff]
      %v586 = vld [vmem:[%s4 + $0x168] sm:$0xff]
      %v587 = vld [vmem:[%s4 + $0x170] sm:$0xff]
      %v588 = vld [vmem:[%s4 + $0x178] sm:$0xff]
      %v589 = vld [vmem:[%s4 + $0x180] sm:$0xff]
      %v590 = vld [vmem:[%s4 + $0x188] sm:$0xff]
      %v591 = vld [vmem:[%s4 + $0x190] sm:$0xff]
      %v592 = vld [vmem:[%s4 + $0x198] sm:$0xff]
      %v593 = vld [vmem:[%s4 + $0x1a0] sm:$0xff]
      %v594 = vld [vmem:[%s4 + $0x1a8] sm:$0xff]
      %v595 = vld [vmem:[%s4 + $0x1b0] sm:$0xff]
      %v596 = vld [vmem:[%s4 + $0x1b8] sm:$0xff]
      %v597 = vld [vmem:[%s4 + $0x1c0] sm:$0xff]
      %v598 = vld [vmem:[%s4 + $0x1c8] sm:$0xff]
      %v599 = vld [vmem:[%s4 + $0x1d0] sm:$0xff]
      %v600 = vld [vmem:[%s4 + $0x1d8] sm:$0xff]
      %v601 = vld [vmem:[%s4 + $0x1e0] sm:$0xff]
      %v602 = vld [vmem:[%s4 + $0x1e8] sm:$0xff]
      %v603 = vld [vmem:[%s4 + $0x1f0] sm:$0xff]
      %v604 = vld [vmem:[%s4 + $0x1f8] sm:$0xff]
      %v605 = vld [vmem:[%s5] sm:$0xf]
      %606 = vmatprep.subr.mxu0 %v542
      %607 = vmatpush1.msra.mxu0 %v541
      %608 = vmatprep.subr.mxu0 %v546
      %609 = vmatpush1.msra.mxu0 %v545
      %610 = vmatprep.subr.mxu0 %v550
      %611 = vmatpush1.msra.mxu0 %v549
      %612 = vmatprep.subr.mxu0 %v554
      %613 = vmatpush1.msra.mxu0 %v553
      %614 = vmatprep.subr.mxu0 %v558
      %615 = vmatpush1.msra.mxu0 %v557
      %616 = vmatprep.subr.mxu0 %v562
      %617 = vmatpush1.msra.mxu0 %v561
      %618 = vmatprep.subr.mxu0 %v566
      %619 = vmatpush1.msra.mxu0 %v565
      %620 = vmatprep.subr.mxu0 %v570
      %621 = vmatpush1.msra.mxu0 %v569
      %622 = vmatprep.subr.mxu0 %v574
      %623 = vmatpush1.msra.mxu0 %v573
      %624 = vmatprep.subr.mxu0 %v578
      %625 = vmatpush1.msra.mxu0 %v577
      %626 = vmatprep.subr.mxu0 %v582
      %627 = vmatpush1.msra.mxu0 %v581
      %628 = vmatprep.subr.mxu0 %v586
      %629 = vmatpush1.msra.mxu0 %v585
      %630 = vmatprep.subr.mxu0 %v590
      %631 = vmatpush1.msra.mxu0 %v589
      %632 = vmatprep.subr.mxu0 %v594
      %633 = vmatpush1.msra.mxu0 %v593
      %634 = vmatprep.subr.mxu0 %v598
      %635 = vmatpush1.msra.mxu0 %v597
      %636 = vmatprep.subr.mxu0 %v602
      %637 = vmatpush1.msra.mxu0 %v601
      %638 = vmatprep.subr.mxu0 0.0
      %639 = vmatpush1.msra.mxu0 0.0
      %640 = vmatprep.subr.mxu0 0.0
      %641 = vmatpush1.msra.mxu0 0.0
      %642 = vmatprep.subr.mxu0 0.0
      %643 = vmatpush1.msra.mxu0 0.0
      %644 = vmatprep.subr.mxu0 0.0
      %645 = vmatpush1.msra.mxu0 0.0
      %646 = vmatprep.subr.mxu0 0.0
      %647 = vmatpush1.msra.mxu0 0.0
      %648 = vmatprep.subr.mxu0 0.0
      %649 = vmatpush1.msra.mxu0 0.0
      %650 = vmatprep.subr.mxu0 0.0
      %651 = vmatpush1.msra.mxu0 0.0
      %652 = vmatprep.subr.mxu0 0.0
      %653 = vmatpush1.msra.mxu0 0.0
      %654 = vmatprep.subr.mxu0 0.0
      %655 = vmatpush1.msra.mxu0 0.0
      %656 = vmatprep.subr.mxu0 0.0
      %657 = vmatpush1.msra.mxu0 0.0
      %658 = vmatprep.subr.mxu0 0.0
      %659 = vmatpush1.msra.mxu0 0.0
      %660 = vmatprep.subr.mxu0 0.0
      %661 = vmatpush1.msra.mxu0 0.0
      %662 = vmatprep.subr.mxu0 0.0
      %663 = vmatpush1.msra.mxu0 0.0
      %664 = vmatprep.subr.mxu0 0.0
      %665 = vmatpush1.msra.mxu0 0.0
      %666 = vmatprep.subr.mxu0 0.0
      %667 = vmatpush1.msra.mxu0 0.0
      %668 = vmatprep.subr.mxu0 0.0
      %669 = vmatpush1.msra.mxu0 0.0
      %670 = vmatprep.mubr.f32.mxu0 0.0
      %671 = vmatmul.mubr.f32.gmra.mrb[0].mxu0 %v411
      %v672 = vpop.f32.mrb[0].mxu0
      %v673 = vadd.f32 0.0, %v672
      %v674 = vpop.f32.mrb[0].mxu0
      %v675 = vadd.f32 0.0, %v674
      %676 = vdwg.mxu0
      %677 = vmatprep.subr.mxu0 %v544
      %678 = vmatpush1.msra.mxu0 %v543
      %679 = vmatprep.subr.mxu0 %v548
      %680 = vmatpush1.msra.mxu0 %v547
      %681 = vmatprep.subr.mxu0 %v552
      %682 = vmatpush1.msra.mxu0 %v551
      %683 = vmatprep.subr.mxu0 %v556
      %684 = vmatpush1.msra.mxu0 %v555
      %685 = vmatprep.subr.mxu0 %v560
      %686 = vmatpush1.msra.mxu0 %v559
      %687 = vmatprep.subr.mxu0 %v564
      %688 = vmatpush1.msra.mxu0 %v563
      %689 = vmatprep.subr.mxu0 %v568
      %690 = vmatpush1.msra.mxu0 %v567
      %691 = vmatprep.subr.mxu0 %v572
      %692 = vmatpush1.msra.mxu0 %v571
      %693 = vmatprep.subr.mxu0 %v576
      %694 = vmatpush1.msra.mxu0 %v575
      %695 = vmatprep.subr.mxu0 %v580
      %696 = vmatpush1.msra.mxu0 %v579
      %697 = vmatprep.subr.mxu0 %v584
      %698 = vmatpush1.msra.mxu0 %v583
      %699 = vmatprep.subr.mxu0 %v588
      %700 = vmatpush1.msra.mxu0 %v587
      %701 = vmatprep.subr.mxu0 %v592
      %702 = vmatpush1.msra.mxu0 %v591
      %703 = vmatprep.subr.mxu0 %v596
      %704 = vmatpush1.msra.mxu0 %v595
      %705 = vmatprep.subr.mxu0 %v600
      %706 = vmatpush1.msra.mxu0 %v599
      %707 = vmatprep.subr.mxu0 %v604
      %708 = vmatpush1.msra.mxu0 %v603
      %709 = vmatprep.subr.mxu0 0.0
      %710 = vmatpush1.msra.mxu0 0.0
      %711 = vmatprep.subr.mxu0 0.0
      %712 = vmatpush1.msra.mxu0 0.0
      %713 = vmatprep.subr.mxu0 0.0
      %714 = vmatpush1.msra.mxu0 0.0
      %715 = vmatprep.subr.mxu0 0.0
      %716 = vmatpush1.msra.mxu0 0.0
      %717 = vmatprep.subr.mxu0 0.0
      %718 = vmatpush1.msra.mxu0 0.0
      %719 = vmatprep.subr.mxu0 0.0
      %720 = vmatpush1.msra.mxu0 0.0
      %721 = vmatprep.subr.mxu0 0.0
      %722 = vmatpush1.msra.mxu0 0.0
      %723 = vmatprep.subr.mxu0 0.0
      %724 = vmatpush1.msra.mxu0 0.0
      %725 = vmatprep.subr.mxu0 0.0
      %726 = vmatpush1.msra.mxu0 0.0
      %727 = vmatprep.subr.mxu0 0.0
      %728 = vmatpush1.msra.mxu0 0.0
      %729 = vmatprep.subr.mxu0 0.0
      %730 = vmatpush1.msra.mxu0 0.0
      %731 = vmatprep.subr.mxu0 0.0
      %732 = vmatpush1.msra.mxu0 0.0
      %733 = vmatprep.subr.mxu0 0.0
      %734 = vmatpush1.msra.mxu0 0.0
      %735 = vmatprep.subr.mxu0 0.0
      %736 = vmatpush1.msra.mxu0 0.0
      %737 = vmatprep.subr.mxu0 0.0
      %738 = vmatpush1.msra.mxu0 0.0
      %739 = vmatprep.subr.mxu0 0.0
      %740 = vmatpush1.msra.mxu0 0.0
      %741 = vmatprep.mubr.f32.mxu0 0.0
      %742 = vmatmul.mubr.f32.gmra.mrb[0].mxu0 %v411
      %v743 = vpop.f32.mrb[0].mxu0
      %v744 = vadd.f32 0.0, %v743
      %v745 = vpop.f32.mrb[0].mxu0
      %v746 = vadd.f32 0.0, %v745
      %747 = vdwg.mxu0
      %v750 = vunpack.c.l.s4 1983009808
      %v751 = vunpack.c.0.s8 %v750
      %v752 = vlaneseq
      %v753 = vshrl.u32 %v752, 7
      %v754 = vsub.s32 %v751, %v753
      %v755 = vrot.slane %v410, %v754
      %v756 = vcombine.high %v755, %v755
      %759 = vmatprep.subr.mxu0 %v414
      %760 = vmatpush1.msra.mxu0 %v413
      %761 = vmatprep.subr.mxu0 %v418
      %762 = vmatpush1.msra.mxu0 %v417
      %763 = vmatprep.subr.mxu0 %v422
      %764 = vmatpush1.msra.mxu0 %v421
      %765 = vmatprep.subr.mxu0 %v426
      %766 = vmatpush1.msra.mxu0 %v425
      %767 = vmatprep.subr.mxu0 %v430
      %768 = vmatpush1.msra.mxu0 %v429
      %769 = vmatprep.subr.mxu0 %v434
      %770 = vmatpush1.msra.mxu0 %v433
      %771 = vmatprep.subr.mxu0 %v438
      %772 = vmatpush1.msra.mxu0 %v437
      %773 = vmatprep.subr.mxu0 %v442
      %774 = vmatpush1.msra.mxu0 %v441
      %775 = vmatprep.subr.mxu0 %v446
      %776 = vmatpush1.msra.mxu0 %v445
      %777 = vmatprep.subr.mxu0 %v450
      %778 = vmatpush1.msra.mxu0 %v449
      %779 = vmatprep.subr.mxu0 %v454
      %780 = vmatpush1.msra.mxu0 %v453
      %781 = vmatprep.subr.mxu0 %v458
      %782 = vmatpush1.msra.mxu0 %v457
      %783 = vmatprep.subr.mxu0 %v462
      %784 = vmatpush1.msra.mxu0 %v461
      %785 = vmatprep.subr.mxu0 %v466
      %786 = vmatpush1.msra.mxu0 %v465
      %787 = vmatprep.subr.mxu0 %v470
      %788 = vmatpush1.msra.mxu0 %v469
      %789 = vmatprep.subr.mxu0 %v474
      %790 = vmatpush1.msra.mxu0 %v473
      %791 = vmatprep.subr.mxu0 %v478
      %792 = vmatpush1.msra.mxu0 %v477
      %793 = vmatprep.subr.mxu0 %v482
      %794 = vmatpush1.msra.mxu0 %v481
      %795 = vmatprep.subr.mxu0 %v486
      %796 = vmatpush1.msra.mxu0 %v485
      %797 = vmatprep.subr.mxu0 %v490
      %798 = vmatpush1.msra.mxu0 %v489
      %799 = vmatprep.subr.mxu0 %v494
      %800 = vmatpush1.msra.mxu0 %v493
      %801 = vmatprep.subr.mxu0 %v498
      %802 = vmatpush1.msra.mxu0 %v497
      %803 = vmatprep.subr.mxu0 %v502
      %804 = vmatpush1.msra.mxu0 %v501
      %805 = vmatprep.subr.mxu0 %v506
      %806 = vmatpush1.msra.mxu0 %v505
      %807 = vmatprep.subr.mxu0 %v510
      %808 = vmatpush1.msra.mxu0 %v509
      %809 = vmatprep.subr.mxu0 %v514
      %810 = vmatpush1.msra.mxu0 %v513
      %811 = vmatprep.subr.mxu0 %v518
      %812 = vmatpush1.msra.mxu0 %v517
      %813 = vmatprep.subr.mxu0 %v522
      %814 = vmatpush1.msra.mxu0 %v521
      %815 = vmatprep.subr.mxu0 %v526
      %816 = vmatpush1.msra.mxu0 %v525
      %817 = vmatprep.subr.mxu0 %v530
      %818 = vmatpush1.msra.mxu0 %v529
      %819 = vmatprep.subr.mxu0 %v534
      %820 = vmatpush1.msra.mxu0 %v533
      %821 = vmatprep.subr.mxu0 %v538
      %822 = vmatpush1.msra.mxu0 %v537
      %823 = vmatprep.mubr.f32.mxu0 %v756
      %824 = vmatmul.mubr.f32.gmra.mrb[0].mxu0 %v755
      %v825 = vpop.f32.mrb[0].mxu0
      %v826 = vadd.f32 %v673, %v825
      %v827 = vpop.f32.mrb[0].mxu0
      %v828 = vadd.f32 %v675, %v827
      %829 = vdwg.mxu0
      %830 = vmatprep.subr.mxu0 %v416
      %831 = vmatpush1.msra.mxu0 %v415
      %832 = vmatprep.subr.mxu0 %v420
      %833 = vmatpush1.msra.mxu0 %v419
      %834 = vmatprep.subr.mxu0 %v424
      %835 = vmatpush1.msra.mxu0 %v423
      %836 = vmatprep.subr.mxu0 %v428
      %837 = vmatpush1.msra.mxu0 %v427
      %838 = vmatprep.subr.mxu0 %v432
      %839 = vmatpush1.msra.mxu0 %v431
      %840 = vmatprep.subr.mxu0 %v436
      %841 = vmatpush1.msra.mxu0 %v435
      %842 = vmatprep.subr.mxu0 %v440
      %843 = vmatpush1.msra.mxu0 %v439
      %844 = vmatprep.subr.mxu0 %v444
      %845 = vmatpush1.msra.mxu0 %v443
      %846 = vmatprep.subr.mxu0 %v448
      %847 = vmatpush1.msra.mxu0 %v447
      %848 = vmatprep.subr.mxu0 %v452
      %849 = vmatpush1.msra.mxu0 %v451
      %850 = vmatprep.subr.mxu0 %v456
      %851 = vmatpush1.msra.mxu0 %v455
      %852 = vmatprep.subr.mxu0 %v460
      %853 = vmatpush1.msra.mxu0 %v459
      %854 = vmatprep.subr.mxu0 %v464
      %855 = vmatpush1.msra.mxu0 %v463
      %856 = vmatprep.subr.mxu0 %v468
      %857 = vmatpush1.msra.mxu0 %v467
      %858 = vmatprep.subr.mxu0 %v472
      %859 = vmatpush1.msra.mxu0 %v471
      %860 = vmatprep.subr.mxu0 %v476
      %861 = vmatpush1.msra.mxu0 %v475
      %862 = vmatprep.subr.mxu0 %v480
      %863 = vmatpush1.msra.mxu0 %v479
      %864 = vmatprep.subr.mxu0 %v484
      %865 = vmatpush1.msra.mxu0 %v483
      %866 = vmatprep.subr.mxu0 %v488
      %867 = vmatpush1.msra.mxu0 %v487
      %868 = vmatprep.subr.mxu0 %v492
      %869 = vmatpush1.msra.mxu0 %v491
      %870 = vmatprep.subr.mxu0 %v496
      %871 = vmatpush1.msra.mxu0 %v495
      %872 = vmatprep.subr.mxu0 %v500
      %873 = vmatpush1.msra.mxu0 %v499
      %874 = vmatprep.subr.mxu0 %v504
      %875 = vmatpush1.msra.mxu0 %v503
      %876 = vmatprep.subr.mxu0 %v508
      %877 = vmatpush1.msra.mxu0 %v507
      %878 = vmatprep.subr.mxu0 %v512
      %879 = vmatpush1.msra.mxu0 %v511
      %880 = vmatprep.subr.mxu0 %v516
      %881 = vmatpush1.msra.mxu0 %v515
      %882 = vmatprep.subr.mxu0 %v520
      %883 = vmatpush1.msra.mxu0 %v519
      %884 = vmatprep.subr.mxu0 %v524
      %885 = vmatpush1.msra.mxu0 %v523
      %886 = vmatprep.subr.mxu0 %v528
      %887 = vmatpush1.msra.mxu0 %v527
      %888 = vmatprep.subr.mxu0 %v532
      %889 = vmatpush1.msra.mxu0 %v531
      %890 = vmatprep.subr.mxu0 %v536
      %891 = vmatpush1.msra.mxu0 %v535
      %892 = vmatprep.subr.mxu0 %v540
      %893 = vmatpush1.msra.mxu0 %v539
      %894 = vmatprep.mubr.f32.mxu0 %v756
      %895 = vmatmul.mubr.f32.gmra.mrb[0].mxu0 %v755
      %v896 = vpop.f32.mrb[0].mxu0
      %v897 = vadd.f32 %v744, %v896
      %v898 = vpop.f32.mrb[0].mxu0
      %v899 = vadd.f32 %v746, %v898
      %900 = vdwg.mxu0
      %v902 = vlaneseq
      %v903 = vshrl.u32 %v902, 7
      %v904 = vsub.s32 0, %v903
      %v905 = vrot.slane %v605, %v904
      %v906 = vlaneseq
      %v907 = vshrl.u32 %v906, 7
      %v908 = vsub.s32 1, %v907
      %v909 = vrot.slane %v605, %v908
      %v910 = vlaneseq
      %v911 = vshrl.u32 %v910, 7
      %v912 = vsub.s32 2, %v911
      %v913 = vrot.slane %v605, %v912
      %v914 = vlaneseq
      %v915 = vshrl.u32 %v914, 7
      %v916 = vsub.s32 3, %v915
      %v917 = vrot.slane %v605, %v916
      %v922 = vadd.f32 %v826, %v905
      %v923 = vadd.f32 %v828, %v909
      %v924 = vadd.f32 %v897, %v913
      %v925 = vadd.f32 %v899, %v917
      %v926 = vxor.u32 %v922, 2147483648
      %v927 = vmul.f32 %v926, 1.442695
      %v928 = vpow.pop %v927
      %v929 = vadd.f32 %v928, 1.0
      %v930 = vrcp.pop %v929
      %v931 = vmul.f32 1.0, %v930
      %v932 = vxor.u32 %v923, 2147483648
      %v933 = vmul.f32 %v932, 1.442695
      %v934 = vpow.pop %v933
      %v935 = vadd.f32 %v934, 1.0
      %v936 = vrcp.pop %v935
      %v937 = vmul.f32 1.0, %v936
      %v938 = vtanh.pop %v924
      %v939 = vxor.u32 %v925, 2147483648
      %v940 = vmul.f32 %v939, 1.442695
      %v941 = vpow.pop %v940
      %v942 = vadd.f32 %v941, 1.0
      %v943 = vrcp.pop %v942
      %v944 = vmul.f32 1.0, %v943
      %v945 = vmul.f32 %v937, %v412
      %v946 = vmul.f32 %v931, %v938
      %v947 = vadd.f32 %v945, %v946
      %v948 = vtanh.pop %v947
      %v949 = vmul.f32 %v944, %v948
      %950 = vst [vmem:[#allocation2] sm:$0x3] %v949
      %951 = vst [vmem:[#allocation3] sm:$0x3] %v947
      %v952 = vstv %s22
      %vm953 = vcmp.lt.s32.totalorder %v952, %v409
      %v954 = vsel %vm953, 1, 0
      %v955 = vcvt.s32.f32 %v954
      %957 = vset.pattern.permute.xlu0 0
      %958 = vperm.xlu0 %957, %v955
      %v959 = vpop.permute.xlu0 %958
      %v961 = vmul.f32 %v949, %v959
      %962 = vst [vmem:[%s394] sm:$0x3] %v961
      %s963 = ssub.s32 31, %s22
      %v964 = vld [vmem:[%s389] sm:$0xf]
      %v965 = vld [vmem:[#allocation4] sm:$0x3]
      %v966 = vld [vmem:[#allocation5] sm:$0x3]
      %v967 = vld [vmem:[%s6] sm:$0xff]
      %v968 = vld [vmem:[%s6 + $0x8] sm:$0xff]
      %v969 = vld [vmem:[%s6 + $0x10] sm:$0xff]
      %v970 = vld [vmem:[%s6 + $0x18] sm:$0xff]
      %v971 = vld [vmem:[%s6 + $0x20] sm:$0xff]
      %v972 = vld [vmem:[%s6 + $0x28] sm:$0xff]
      %v973 = vld [vmem:[%s6 + $0x30] sm:$0xff]
      %v974 = vld [vmem:[%s6 + $0x38] sm:$0xff]
      %v975 = vld [vmem:[%s6 + $0x40] sm:$0xff]
      %v976 = vld [vmem:[%s6 + $0x48] sm:$0xff]
      %v977 = vld [vmem:[%s6 + $0x50] sm:$0xff]
      %v978 = vld [vmem:[%s6 + $0x58] sm:$0xff]
      %v979 = vld [vmem:[%s6 + $0x60] sm:$0xff]
      %v980 = vld [vmem:[%s6 + $0x68] sm:$0xff]
      %v981 = vld [vmem:[%s6 + $0x70] sm:$0xff]
      %v982 = vld [vmem:[%s6 + $0x78] sm:$0xff]
      %v983 = vld [vmem:[%s6 + $0x80] sm:$0xff]
      %v984 = vld [vmem:[%s6 + $0x88] sm:$0xff]
      %v985 = vld [vmem:[%s6 + $0x90] sm:$0xff]
      %v986 = vld [vmem:[%s6 + $0x98] sm:$0xff]
      %v987 = vld [vmem:[%s6 + $0xa0] sm:$0xff]
      %v988 = vld [vmem:[%s6 + $0xa8] sm:$0xff]
      %v989 = vld [vmem:[%s6 + $0xb0] sm:$0xff]
      %v990 = vld [vmem:[%s6 + $0xb8] sm:$0xff]
      %v991 = vld [vmem:[%s6 + $0xc0] sm:$0xff]
      %v992 = vld [vmem:[%s6 + $0xc8] sm:$0xff]
      %v993 = vld [vmem:[%s6 + $0xd0] sm:$0xff]
      %v994 = vld [vmem:[%s6 + $0xd8] sm:$0xff]
      %v995 = vld [vmem:[%s6 + $0xe0] sm:$0xff]
      %v996 = vld [vmem:[%s6 + $0xe8] sm:$0xff]
      %v997 = vld [vmem:[%s6 + $0xf0] sm:$0xff]
      %v998 = vld [vmem:[%s6 + $0xf8] sm:$0xff]
      %v999 = vld [vmem:[%s6 + $0x100] sm:$0xff]
      %v1000 = vld [vmem:[%s6 + $0x108] sm:$0xff]
      %v1001 = vld [vmem:[%s6 + $0x110] sm:$0xff]
      %v1002 = vld [vmem:[%s6 + $0x118] sm:$0xff]
      %v1003 = vld [vmem:[%s6 + $0x120] sm:$0xff]
      %v1004 = vld [vmem:[%s6 + $0x128] sm:$0xff]
      %v1005 = vld [vmem:[%s6 + $0x130] sm:$0xff]
      %v1006 = vld [vmem:[%s6 + $0x138] sm:$0xff]
      %v1007 = vld [vmem:[%s6 + $0x140] sm:$0xff]
      %v1008 = vld [vmem:[%s6 + $0x148] sm:$0xff]
      %v1009 = vld [vmem:[%s6 + $0x150] sm:$0xff]
      %v1010 = vld [vmem:[%s6 + $0x158] sm:$0xff]
      %v1011 = vld [vmem:[%s6 + $0x160] sm:$0xff]
      %v1012 = vld [vmem:[%s6 + $0x168] sm:$0xff]
      %v1013 = vld [vmem:[%s6 + $0x170] sm:$0xff]
      %v1014 = vld [vmem:[%s6 + $0x178] sm:$0xff]
      %v1015 = vld [vmem:[%s6 + $0x180] sm:$0xff]
      %v1016 = vld [vmem:[%s6 + $0x188] sm:$0xff]
      %v1017 = vld [vmem:[%s6 + $0x190] sm:$0xff]
      %v1018 = vld [vmem:[%s6 + $0x198] sm:$0xff]
      %v1019 = vld [vmem:[%s6 + $0x1a0] sm:$0xff]
      %v1020 = vld [vmem:[%s6 + $0x1a8] sm:$0xff]
      %v1021 = vld [vmem:[%s6 + $0x1b0] sm:$0xff]
      %v1022 = vld [vmem:[%s6 + $0x1b8] sm:$0xff]
      %v1023 = vld [vmem:[%s6 + $0x1c0] sm:$0xff]
      %v1024 = vld [vmem:[%s6 + $0x1c8] sm:$0xff]
      %v1025 = vld [vmem:[%s6 + $0x1d0] sm:$0xff]
      %v1026 = vld [vmem:[%s6 + $0x1d8] sm:$0xff]
      %v1027 = vld [vmem:[%s6 + $0x1e0] sm:$0xff]
      %v1028 = vld [vmem:[%s6 + $0x1e8] sm:$0xff]
      %v1029 = vld [vmem:[%s6 + $0x1f0] sm:$0xff]
      %v1030 = vld [vmem:[%s6 + $0x1f8] sm:$0xff]
      %v1031 = vld [vmem:[%s6 + $0x200] sm:$0xff]
      %v1032 = vld [vmem:[%s6 + $0x208] sm:$0xff]
      %v1033 = vld [vmem:[%s6 + $0x210] sm:$0xff]
      %v1034 = vld [vmem:[%s6 + $0x218] sm:$0xff]
      %v1035 = vld [vmem:[%s6 + $0x220] sm:$0xff]
      %v1036 = vld [vmem:[%s6 + $0x228] sm:$0xff]
      %v1037 = vld [vmem:[%s6 + $0x230] sm:$0xff]
      %v1038 = vld [vmem:[%s6 + $0x238] sm:$0xff]
      %v1039 = vld [vmem:[%s6 + $0x240] sm:$0xff]
      %v1040 = vld [vmem:[%s6 + $0x248] sm:$0xff]
      %v1041 = vld [vmem:[%s6 + $0x250] sm:$0xff]
      %v1042 = vld [vmem:[%s6 + $0x258] sm:$0xff]
      %v1043 = vld [vmem:[%s6 + $0x260] sm:$0xff]
      %v1044 = vld [vmem:[%s6 + $0x268] sm:$0xff]
      %v1045 = vld [vmem:[%s6 + $0x270] sm:$0xff]
      %v1046 = vld [vmem:[%s6 + $0x278] sm:$0xff]
      %v1047 = vld [vmem:[%s6 + $0x280] sm:$0xff]
      %v1048 = vld [vmem:[%s6 + $0x288] sm:$0xff]
      %v1049 = vld [vmem:[%s6 + $0x290] sm:$0xff]
      %v1050 = vld [vmem:[%s6 + $0x298] sm:$0xff]
      %v1051 = vld [vmem:[%s6 + $0x2a0] sm:$0xff]
      %v1052 = vld [vmem:[%s6 + $0x2a8] sm:$0xff]
      %v1053 = vld [vmem:[%s6 + $0x2b0] sm:$0xff]
      %v1054 = vld [vmem:[%s6 + $0x2b8] sm:$0xff]
      %v1055 = vld [vmem:[%s6 + $0x2c0] sm:$0xff]
      %v1056 = vld [vmem:[%s6 + $0x2c8] sm:$0xff]
      %v1057 = vld [vmem:[%s6 + $0x2d0] sm:$0xff]
      %v1058 = vld [vmem:[%s6 + $0x2d8] sm:$0xff]
      %v1059 = vld [vmem:[%s6 + $0x2e0] sm:$0xff]
      %v1060 = vld [vmem:[%s6 + $0x2e8] sm:$0xff]
      %v1061 = vld [vmem:[%s6 + $0x2f0] sm:$0xff]
      %v1062 = vld [vmem:[%s6 + $0x2f8] sm:$0xff]
      %v1063 = vld [vmem:[%s6 + $0x300] sm:$0xff]
      %v1064 = vld [vmem:[%s6 + $0x308] sm:$0xff]
      %v1065 = vld [vmem:[%s6 + $0x310] sm:$0xff]
      %v1066 = vld [vmem:[%s6 + $0x318] sm:$0xff]
      %v1067 = vld [vmem:[%s6 + $0x320] sm:$0xff]
      %v1068 = vld [vmem:[%s6 + $0x328] sm:$0xff]
      %v1069 = vld [vmem:[%s6 + $0x330] sm:$0xff]
      %v1070 = vld [vmem:[%s6 + $0x338] sm:$0xff]
      %v1071 = vld [vmem:[%s6 + $0x340] sm:$0xff]
      %v1072 = vld [vmem:[%s6 + $0x348] sm:$0xff]
      %v1073 = vld [vmem:[%s6 + $0x350] sm:$0xff]
      %v1074 = vld [vmem:[%s6 + $0x358] sm:$0xff]
      %v1075 = vld [vmem:[%s6 + $0x360] sm:$0xff]
      %v1076 = vld [vmem:[%s6 + $0x368] sm:$0xff]
      %v1077 = vld [vmem:[%s6 + $0x370] sm:$0xff]
      %v1078 = vld [vmem:[%s6 + $0x378] sm:$0xff]
      %v1079 = vld [vmem:[%s6 + $0x380] sm:$0xff]
      %v1080 = vld [vmem:[%s6 + $0x388] sm:$0xff]
      %v1081 = vld [vmem:[%s6 + $0x390] sm:$0xff]
      %v1082 = vld [vmem:[%s6 + $0x398] sm:$0xff]
      %v1083 = vld [vmem:[%s6 + $0x3a0] sm:$0xff]
      %v1084 = vld [vmem:[%s6 + $0x3a8] sm:$0xff]
      %v1085 = vld [vmem:[%s6 + $0x3b0] sm:$0xff]
      %v1086 = vld [vmem:[%s6 + $0x3b8] sm:$0xff]
      %v1087 = vld [vmem:[%s6 + $0x3c0] sm:$0xff]
      %v1088 = vld [vmem:[%s6 + $0x3c8] sm:$0xff]
      %v1089 = vld [vmem:[%s6 + $0x3d0] sm:$0xff]
      %v1090 = vld [vmem:[%s6 + $0x3d8] sm:$0xff]
      %v1091 = vld [vmem:[%s6 + $0x3e0] sm:$0xff]
      %v1092 = vld [vmem:[%s6 + $0x3e8] sm:$0xff]
      %v1093 = vld [vmem:[%s6 + $0x3f0] sm:$0xff]
      %v1094 = vld [vmem:[%s6 + $0x3f8] sm:$0xff]
      %v1095 = vld [vmem:[%s7] sm:$0xff]
      %v1096 = vld [vmem:[%s7 + $0x8] sm:$0xff]
      %v1097 = vld [vmem:[%s7 + $0x10] sm:$0xff]
      %v1098 = vld [vmem:[%s7 + $0x18] sm:$0xff]
      %v1099 = vld [vmem:[%s7 + $0x20] sm:$0xff]
      %v1100 = vld [vmem:[%s7 + $0x28] sm:$0xff]
      %v1101 = vld [vmem:[%s7 + $0x30] sm:$0xff]
      %v1102 = vld [vmem:[%s7 + $0x38] sm:$0xff]
      %v1103 = vld [vmem:[%s7 + $0x40] sm:$0xff]
      %v1104 = vld [vmem:[%s7 + $0x48] sm:$0xff]
      %v1105 = vld [vmem:[%s7 + $0x50] sm:$0xff]
      %v1106 = vld [vmem:[%s7 + $0x58] sm:$0xff]
      %v1107 = vld [vmem:[%s7 + $0x60] sm:$0xff]
      %v1108 = vld [vmem:[%s7 + $0x68] sm:$0xff]
      %v1109 = vld [vmem:[%s7 + $0x70] sm:$0xff]
      %v1110 = vld [vmem:[%s7 + $0x78] sm:$0xff]
      %v1111 = vld [vmem:[%s7 + $0x80] sm:$0xff]
      %v1112 = vld [vmem:[%s7 + $0x88] sm:$0xff]
      %v1113 = vld [vmem:[%s7 + $0x90] sm:$0xff]
      %v1114 = vld [vmem:[%s7 + $0x98] sm:$0xff]
      %v1115 = vld [vmem:[%s7 + $0xa0] sm:$0xff]
      %v1116 = vld [vmem:[%s7 + $0xa8] sm:$0xff]
      %v1117 = vld [vmem:[%s7 + $0xb0] sm:$0xff]
      %v1118 = vld [vmem:[%s7 + $0xb8] sm:$0xff]
      %v1119 = vld [vmem:[%s7 + $0xc0] sm:$0xff]
      %v1120 = vld [vmem:[%s7 + $0xc8] sm:$0xff]
      %v1121 = vld [vmem:[%s7 + $0xd0] sm:$0xff]
      %v1122 = vld [vmem:[%s7 + $0xd8] sm:$0xff]
      %v1123 = vld [vmem:[%s7 + $0xe0] sm:$0xff]
      %v1124 = vld [vmem:[%s7 + $0xe8] sm:$0xff]
      %v1125 = vld [vmem:[%s7 + $0xf0] sm:$0xff]
      %v1126 = vld [vmem:[%s7 + $0xf8] sm:$0xff]
      %v1127 = vld [vmem:[%s7 + $0x100] sm:$0xff]
      %v1128 = vld [vmem:[%s7 + $0x108] sm:$0xff]
      %v1129 = vld [vmem:[%s7 + $0x110] sm:$0xff]
      %v1130 = vld [vmem:[%s7 + $0x118] sm:$0xff]
      %v1131 = vld [vmem:[%s7 + $0x120] sm:$0xff]
      %v1132 = vld [vmem:[%s7 + $0x128] sm:$0xff]
      %v1133 = vld [vmem:[%s7 + $0x130] sm:$0xff]
      %v1134 = vld [vmem:[%s7 + $0x138] sm:$0xff]
      %v1135 = vld [vmem:[%s7 + $0x140] sm:$0xff]
      %v1136 = vld [vmem:[%s7 + $0x148] sm:$0xff]
      %v1137 = vld [vmem:[%s7 + $0x150] sm:$0xff]
      %v1138 = vld [vmem:[%s7 + $0x158] sm:$0xff]
      %v1139 = vld [vmem:[%s7 + $0x160] sm:$0xff]
      %v1140 = vld [vmem:[%s7 + $0x168] sm:$0xff]
      %v1141 = vld [vmem:[%s7 + $0x170] sm:$0xff]
      %v1142 = vld [vmem:[%s7 + $0x178] sm:$0xff]
      %v1143 = vld [vmem:[%s7 + $0x180] sm:$0xff]
      %v1144 = vld [vmem:[%s7 + $0x188] sm:$0xff]
      %v1145 = vld [vmem:[%s7 + $0x190] sm:$0xff]
      %v1146 = vld [vmem:[%s7 + $0x198] sm:$0xff]
      %v1147 = vld [vmem:[%s7 + $0x1a0] sm:$0xff]
      %v1148 = vld [vmem:[%s7 + $0x1a8] sm:$0xff]
      %v1149 = vld [vmem:[%s7 + $0x1b0] sm:$0xff]
      %v1150 = vld [vmem:[%s7 + $0x1b8] sm:$0xff]
      %v1151 = vld [vmem:[%s7 + $0x1c0] sm:$0xff]
      %v1152 = vld [vmem:[%s7 + $0x1c8] sm:$0xff]
      %v1153 = vld [vmem:[%s7 + $0x1d0] sm:$0xff]
      %v1154 = vld [vmem:[%s7 + $0x1d8] sm:$0xff]
      %v1155 = vld [vmem:[%s7 + $0x1e0] sm:$0xff]
      %v1156 = vld [vmem:[%s7 + $0x1e8] sm:$0xff]
      %v1157 = vld [vmem:[%s7 + $0x1f0] sm:$0xff]
      %v1158 = vld [vmem:[%s7 + $0x1f8] sm:$0xff]
      %v1159 = vld [vmem:[%s8] sm:$0xf]
      %1160 = vmatprep.subr.mxu0 %v1096
      %1161 = vmatpush1.msra.mxu0 %v1095
      %1162 = vmatprep.subr.mxu0 %v1100
      %1163 = vmatpush1.msra.mxu0 %v1099
      %1164 = vmatprep.subr.mxu0 %v1104
      %1165 = vmatpush1.msra.mxu0 %v1103
      %1166 = vmatprep.subr.mxu0 %v1108
      %1167 = vmatpush1.msra.mxu0 %v1107
      %1168 = vmatprep.subr.mxu0 %v1112
      %1169 = vmatpush1.msra.mxu0 %v1111
      %1170 = vmatprep.subr.mxu0 %v1116
      %1171 = vmatpush1.msra.mxu0 %v1115
      %1172 = vmatprep.subr.mxu0 %v1120
      %1173 = vmatpush1.msra.mxu0 %v1119
      %1174 = vmatprep.subr.mxu0 %v1124
      %1175 = vmatpush1.msra.mxu0 %v1123
      %1176 = vmatprep.subr.mxu0 %v1128
      %1177 = vmatpush1.msra.mxu0 %v1127
      %1178 = vmatprep.subr.mxu0 %v1132
      %1179 = vmatpush1.msra.mxu0 %v1131
      %1180 = vmatprep.subr.mxu0 %v1136
      %1181 = vmatpush1.msra.mxu0 %v1135
      %1182 = vmatprep.subr.mxu0 %v1140
      %1183 = vmatpush1.msra.mxu0 %v1139
      %1184 = vmatprep.subr.mxu0 %v1144
      %1185 = vmatpush1.msra.mxu0 %v1143
      %1186 = vmatprep.subr.mxu0 %v1148
      %1187 = vmatpush1.msra.mxu0 %v1147
      %1188 = vmatprep.subr.mxu0 %v1152
      %1189 = vmatpush1.msra.mxu0 %v1151
      %1190 = vmatprep.subr.mxu0 %v1156
      %1191 = vmatpush1.msra.mxu0 %v1155
      %1192 = vmatprep.subr.mxu0 0.0
      %1193 = vmatpush1.msra.mxu0 0.0
      %1194 = vmatprep.subr.mxu0 0.0
      %1195 = vmatpush1.msra.mxu0 0.0
      %1196 = vmatprep.subr.mxu0 0.0
      %1197 = vmatpush1.msra.mxu0 0.0
      %1198 = vmatprep.subr.mxu0 0.0
      %1199 = vmatpush1.msra.mxu0 0.0
      %1200 = vmatprep.subr.mxu0 0.0
      %1201 = vmatpush1.msra.mxu0 0.0
      %1202 = vmatprep.subr.mxu0 0.0
      %1203 = vmatpush1.msra.mxu0 0.0
      %1204 = vmatprep.subr.mxu0 0.0
      %1205 = vmatpush1.msra.mxu0 0.0
      %1206 = vmatprep.subr.mxu0 0.0
      %1207 = vmatpush1.msra.mxu0 0.0
      %1208 = vmatprep.subr.mxu0 0.0
      %1209 = vmatpush1.msra.mxu0 0.0
      %1210 = vmatprep.subr.mxu0 0.0
      %1211 = vmatpush1.msra.mxu0 0.0
      %1212 = vmatprep.subr.mxu0 0.0
      %1213 = vmatpush1.msra.mxu0 0.0
      %1214 = vmatprep.subr.mxu0 0.0
      %1215 = vmatpush1.msra.mxu0 0.0
      %1216 = vmatprep.subr.mxu0 0.0
      %1217 = vmatpush1.msra.mxu0 0.0
      %1218 = vmatprep.subr.mxu0 0.0
      %1219 = vmatpush1.msra.mxu0 0.0
      %1220 = vmatprep.subr.mxu0 0.0
      %1221 = vmatpush1.msra.mxu0 0.0
      %1222 = vmatprep.subr.mxu0 0.0
      %1223 = vmatpush1.msra.mxu0 0.0
      %1224 = vmatprep.mubr.f32.mxu0 0.0
      %1225 = vmatmul.mubr.f32.gmra.mrb[0].mxu0 %v965
      %v1226 = vpop.f32.mrb[0].mxu0
      %v1227 = vadd.f32 0.0, %v1226
      %v1228 = vpop.f32.mrb[0].mxu0
      %v1229 = vadd.f32 0.0, %v1228
      %1230 = vdwg.mxu0
      %1231 = vmatprep.subr.mxu0 %v1098
      %1232 = vmatpush1.msra.mxu0 %v1097
      %1233 = vmatprep.subr.mxu0 %v1102
      %1234 = vmatpush1.msra.mxu0 %v1101
      %1235 = vmatprep.subr.mxu0 %v1106
      %1236 = vmatpush1.msra.mxu0 %v1105
      %1237 = vmatprep.subr.mxu0 %v1110
      %1238 = vmatpush1.msra.mxu0 %v1109
      %1239 = vmatprep.subr.mxu0 %v1114
      %1240 = vmatpush1.msra.mxu0 %v1113
      %1241 = vmatprep.subr.mxu0 %v1118
      %1242 = vmatpush1.msra.mxu0 %v1117
      %1243 = vmatprep.subr.mxu0 %v1122
      %1244 = vmatpush1.msra.mxu0 %v1121
      %1245 = vmatprep.subr.mxu0 %v1126
      %1246 = vmatpush1.msra.mxu0 %v1125
      %1247 = vmatprep.subr.mxu0 %v1130
      %1248 = vmatpush1.msra.mxu0 %v1129
      %1249 = vmatprep.subr.mxu0 %v1134
      %1250 = vmatpush1.msra.mxu0 %v1133
      %1251 = vmatprep.subr.mxu0 %v1138
      %1252 = vmatpush1.msra.mxu0 %v1137
      %1253 = vmatprep.subr.mxu0 %v1142
      %1254 = vmatpush1.msra.mxu0 %v1141
      %1255 = vmatprep.subr.mxu0 %v1146
      %1256 = vmatpush1.msra.mxu0 %v1145
      %1257 = vmatprep.subr.mxu0 %v1150
      %1258 = vmatpush1.msra.mxu0 %v1149
      %1259 = vmatprep.subr.mxu0 %v1154
      %1260 = vmatpush1.msra.mxu0 %v1153
      %1261 = vmatprep.subr.mxu0 %v1158
      %1262 = vmatpush1.msra.mxu0 %v1157
      %1263 = vmatprep.subr.mxu0 0.0
      %1264 = vmatpush1.msra.mxu0 0.0
      %1265 = vmatprep.subr.mxu0 0.0
      %1266 = vmatpush1.msra.mxu0 0.0
      %1267 = vmatprep.subr.mxu0 0.0
      %1268 = vmatpush1.msra.mxu0 0.0
      %1269 = vmatprep.subr.mxu0 0.0
      %1270 = vmatpush1.msra.mxu0 0.0
      %1271 = vmatprep.subr.mxu0 0.0
      %1272 = vmatpush1.msra.mxu0 0.0
      %1273 = vmatprep.subr.mxu0 0.0
      %1274 = vmatpush1.msra.mxu0 0.0
      %1275 = vmatprep.subr.mxu0 0.0
      %1276 = vmatpush1.msra.mxu0 0.0
      %1277 = vmatprep.subr.mxu0 0.0
      %1278 = vmatpush1.msra.mxu0 0.0
      %1279 = vmatprep.subr.mxu0 0.0
      %1280 = vmatpush1.msra.mxu0 0.0
      %1281 = vmatprep.subr.mxu0 0.0
      %1282 = vmatpush1.msra.mxu0 0.0
      %1283 = vmatprep.subr.mxu0 0.0
      %1284 = vmatpush1.msra.mxu0 0.0
      %1285 = vmatprep.subr.mxu0 0.0
      %1286 = vmatpush1.msra.mxu0 0.0
      %1287 = vmatprep.subr.mxu0 0.0
      %1288 = vmatpush1.msra.mxu0 0.0
      %1289 = vmatprep.subr.mxu0 0.0
      %1290 = vmatpush1.msra.mxu0 0.0
      %1291 = vmatprep.subr.mxu0 0.0
      %1292 = vmatpush1.msra.mxu0 0.0
      %1293 = vmatprep.subr.mxu0 0.0
      %1294 = vmatpush1.msra.mxu0 0.0
      %1295 = vmatprep.mubr.f32.mxu0 0.0
      %1296 = vmatmul.mubr.f32.gmra.mrb[0].mxu0 %v965
      %v1297 = vpop.f32.mrb[0].mxu0
      %v1298 = vadd.f32 0.0, %v1297
      %v1299 = vpop.f32.mrb[0].mxu0
      %v1300 = vadd.f32 0.0, %v1299
      %1301 = vdwg.mxu0
      %v1304 = vunpack.c.l.s4 1983009808
      %v1305 = vunpack.c.0.s8 %v1304
      %v1306 = vlaneseq
      %v1307 = vshrl.u32 %v1306, 7
      %v1308 = vsub.s32 %v1305, %v1307
      %v1309 = vrot.slane %v964, %v1308
      %v1310 = vcombine.high %v1309, %v1309
      %1313 = vmatprep.subr.mxu0 %v968
      %1314 = vmatpush1.msra.mxu0 %v967
      %1315 = vmatprep.subr.mxu0 %v972
      %1316 = vmatpush1.msra.mxu0 %v971
      %1317 = vmatprep.subr.mxu0 %v976
      %1318 = vmatpush1.msra.mxu0 %v975
      %1319 = vmatprep.subr.mxu0 %v980
      %1320 = vmatpush1.msra.mxu0 %v979
      %1321 = vmatprep.subr.mxu0 %v984
      %1322 = vmatpush1.msra.mxu0 %v983
      %1323 = vmatprep.subr.mxu0 %v988
      %1324 = vmatpush1.msra.mxu0 %v987
      %1325 = vmatprep.subr.mxu0 %v992
      %1326 = vmatpush1.msra.mxu0 %v991
      %1327 = vmatprep.subr.mxu0 %v996
      %1328 = vmatpush1.msra.mxu0 %v995
      %1329 = vmatprep.subr.mxu0 %v1000
      %1330 = vmatpush1.msra.mxu0 %v999
      %1331 = vmatprep.subr.mxu0 %v1004
      %1332 = vmatpush1.msra.mxu0 %v1003
      %1333 = vmatprep.subr.mxu0 %v1008
      %1334 = vmatpush1.msra.mxu0 %v1007
      %1335 = vmatprep.subr.mxu0 %v1012
      %1336 = vmatpush1.msra.mxu0 %v1011
      %1337 = vmatprep.subr.mxu0 %v1016
      %1338 = vmatpush1.msra.mxu0 %v1015
      %1339 = vmatprep.subr.mxu0 %v1020
      %1340 = vmatpush1.msra.mxu0 %v1019
      %1341 = vmatprep.subr.mxu0 %v1024
      %1342 = vmatpush1.msra.mxu0 %v1023
      %1343 = vmatprep.subr.mxu0 %v1028
      %1344 = vmatpush1.msra.mxu0 %v1027
      %1345 = vmatprep.subr.mxu0 %v1032
      %1346 = vmatpush1.msra.mxu0 %v1031
      %1347 = vmatprep.subr.mxu0 %v1036
      %1348 = vmatpush1.msra.mxu0 %v1035
      %1349 = vmatprep.subr.mxu0 %v1040
      %1350 = vmatpush1.msra.mxu0 %v1039
      %1351 = vmatprep.subr.mxu0 %v1044
      %1352 = vmatpush1.msra.mxu0 %v1043
      %1353 = vmatprep.subr.mxu0 %v1048
      %1354 = vmatpush1.msra.mxu0 %v1047
      %1355 = vmatprep.subr.mxu0 %v1052
      %1356 = vmatpush1.msra.mxu0 %v1051
      %1357 = vmatprep.subr.mxu0 %v1056
      %1358 = vmatpush1.msra.mxu0 %v1055
      %1359 = vmatprep.subr.mxu0 %v1060
      %1360 = vmatpush1.msra.mxu0 %v1059
      %1361 = vmatprep.subr.mxu0 %v1064
      %1362 = vmatpush1.msra.mxu0 %v1063
      %1363 = vmatprep.subr.mxu0 %v1068
      %1364 = vmatpush1.msra.mxu0 %v1067
      %1365 = vmatprep.subr.mxu0 %v1072
      %1366 = vmatpush1.msra.mxu0 %v1071
      %1367 = vmatprep.subr.mxu0 %v1076
      %1368 = vmatpush1.msra.mxu0 %v1075
      %1369 = vmatprep.subr.mxu0 %v1080
      %1370 = vmatpush1.msra.mxu0 %v1079
      %1371 = vmatprep.subr.mxu0 %v1084
      %1372 = vmatpush1.msra.mxu0 %v1083
      %1373 = vmatprep.subr.mxu0 %v1088
      %1374 = vmatpush1.msra.mxu0 %v1087
      %1375 = vmatprep.subr.mxu0 %v1092
      %1376 = vmatpush1.msra.mxu0 %v1091
      %1377 = vmatprep.mubr.f32.mxu0 %v1310
      %1378 = vmatmul.mubr.f32.gmra.mrb[0].mxu0 %v1309
      %v1379 = vpop.f32.mrb[0].mxu0
      %v1380 = vadd.f32 %v1227, %v1379
      %v1381 = vpop.f32.mrb[0].mxu0
      %v1382 = vadd.f32 %v1229, %v1381
      %1383 = vdwg.mxu0
      %1384 = vmatprep.subr.mxu0 %v970
      %1385 = vmatpush1.msra.mxu0 %v969
      %1386 = vmatprep.subr.mxu0 %v974
      %1387 = vmatpush1.msra.mxu0 %v973
      %1388 = vmatprep.subr.mxu0 %v978
      %1389 = vmatpush1.msra.mxu0 %v977
      %1390 = vmatprep.subr.mxu0 %v982
      %1391 = vmatpush1.msra.mxu0 %v981
      %1392 = vmatprep.subr.mxu0 %v986
      %1393 = vmatpush1.msra.mxu0 %v985
      %1394 = vmatprep.subr.mxu0 %v990
      %1395 = vmatpush1.msra.mxu0 %v989
      %1396 = vmatprep.subr.mxu0 %v994
      %1397 = vmatpush1.msra.mxu0 %v993
      %1398 = vmatprep.subr.mxu0 %v998
      %1399 = vmatpush1.msra.mxu0 %v997
      %1400 = vmatprep.subr.mxu0 %v1002
      %1401 = vmatpush1.msra.mxu0 %v1001
      %1402 = vmatprep.subr.mxu0 %v1006
      %1403 = vmatpush1.msra.mxu0 %v1005
      %1404 = vmatprep.subr.mxu0 %v1010
      %1405 = vmatpush1.msra.mxu0 %v1009
      %1406 = vmatprep.subr.mxu0 %v1014
      %1407 = vmatpush1.msra.mxu0 %v1013
      %1408 = vmatprep.subr.mxu0 %v1018
      %1409 = vmatpush1.msra.mxu0 %v1017
      %1410 = vmatprep.subr.mxu0 %v1022
      %1411 = vmatpush1.msra.mxu0 %v1021
      %1412 = vmatprep.subr.mxu0 %v1026
      %1413 = vmatpush1.msra.mxu0 %v1025
      %1414 = vmatprep.subr.mxu0 %v1030
      %1415 = vmatpush1.msra.mxu0 %v1029
      %1416 = vmatprep.subr.mxu0 %v1034
      %1417 = vmatpush1.msra.mxu0 %v1033
      %1418 = vmatprep.subr.mxu0 %v1038
      %1419 = vmatpush1.msra.mxu0 %v1037
      %1420 = vmatprep.subr.mxu0 %v1042
      %1421 = vmatpush1.msra.mxu0 %v1041
      %1422 = vmatprep.subr.mxu0 %v1046
      %1423 = vmatpush1.msra.mxu0 %v1045
      %1424 = vmatprep.subr.mxu0 %v1050
      %1425 = vmatpush1.msra.mxu0 %v1049
      %1426 = vmatprep.subr.mxu0 %v1054
      %1427 = vmatpush1.msra.mxu0 %v1053
      %1428 = vmatprep.subr.mxu0 %v1058
      %1429 = vmatpush1.msra.mxu0 %v1057
      %1430 = vmatprep.subr.mxu0 %v1062
      %1431 = vmatpush1.msra.mxu0 %v1061
      %1432 = vmatprep.subr.mxu0 %v1066
      %1433 = vmatpush1.msra.mxu0 %v1065
      %1434 = vmatprep.subr.mxu0 %v1070
      %1435 = vmatpush1.msra.mxu0 %v1069
      %1436 = vmatprep.subr.mxu0 %v1074
      %1437 = vmatpush1.msra.mxu0 %v1073
      %1438 = vmatprep.subr.mxu0 %v1078
      %1439 = vmatpush1.msra.mxu0 %v1077
      %1440 = vmatprep.subr.mxu0 %v1082
      %1441 = vmatpush1.msra.mxu0 %v1081
      %1442 = vmatprep.subr.mxu0 %v1086
      %1443 = vmatpush1.msra.mxu0 %v1085
      %1444 = vmatprep.subr.mxu0 %v1090
      %1445 = vmatpush1.msra.mxu0 %v1089
      %1446 = vmatprep.subr.mxu0 %v1094
      %1447 = vmatpush1.msra.mxu0 %v1093
      %1448 = vmatprep.mubr.f32.mxu0 %v1310
      %1449 = vmatmul.mubr.f32.gmra.mrb[0].mxu0 %v1309
      %v1450 = vpop.f32.mrb[0].mxu0
      %v1451 = vadd.f32 %v1298, %v1450
      %v1452 = vpop.f32.mrb[0].mxu0
      %v1453 = vadd.f32 %v1300, %v1452
      %1454 = vdwg.mxu0
      %v1456 = vlaneseq
      %v1457 = vshrl.u32 %v1456, 7
      %v1458 = vsub.s32 0, %v1457
      %v1459 = vrot.slane %v1159, %v1458
      %v1460 = vlaneseq
      %v1461 = vshrl.u32 %v1460, 7
      %v1462 = vsub.s32 1, %v1461
      %v1463 = vrot.slane %v1159, %v1462
      %v1464 = vlaneseq
      %v1465 = vshrl.u32 %v1464, 7
      %v1466 = vsub.s32 2, %v1465
      %v1467 = vrot.slane %v1159, %v1466
      %v1468 = vlaneseq
      %v1469 = vshrl.u32 %v1468, 7
      %v1470 = vsub.s32 3, %v1469
      %v1471 = vrot.slane %v1159, %v1470
      %v1476 = vadd.f32 %v1380, %v1459
      %v1477 = vadd.f32 %v1382, %v1463
      %v1478 = vadd.f32 %v1451, %v1467
      %v1479 = vadd.f32 %v1453, %v1471
      %v1480 = vxor.u32 %v1476, 2147483648
      %v1481 = vmul.f32 %v1480, 1.442695
      %v1482 = vpow.pop %v1481
      %v1483 = vadd.f32 %v1482, 1.0
      %v1484 = vrcp.pop %v1483
      %v1485 = vmul.f32 1.0, %v1484
      %v1486 = vxor.u32 %v1477, 2147483648
      %v1487 = vmul.f32 %v1486, 1.442695
      %v1488 = vpow.pop %v1487
      %v1489 = vadd.f32 %v1488, 1.0
      %v1490 = vrcp.pop %v1489
      %v1491 = vmul.f32 1.0, %v1490
      %v1492 = vtanh.pop %v1478
      %v1493 = vxor.u32 %v1479, 2147483648
      %v1494 = vmul.f32 %v1493, 1.442695
      %v1495 = vpow.pop %v1494
      %v1496 = vadd.f32 %v1495, 1.0
      %v1497 = vrcp.pop %v1496
      %v1498 = vmul.f32 1.0, %v1497
      %v1499 = vmul.f32 %v1491, %v966
      %v1500 = vmul.f32 %v1485, %v1492
      %v1501 = vadd.f32 %v1499, %v1500
      %v1502 = vtanh.pop %v1501
      %v1503 = vmul.f32 %v1498, %v1502
      %v1504 = vstv %s963
      %vm1505 = vcmp.lt.s32.totalorder %v1504, %v409
      %v1506 = vsel %vm1505, 1, 0
      %v1507 = vcvt.s32.f32 %v1506
      %1509 = vset.pattern.permute.xlu0 0
      %1510 = vperm.xlu0 %1509, %v1507
      %v1511 = vpop.permute.xlu0 %1510
      %v1513 = vmul.f32 %v1503, %v1511
      %v1514 = vsub.f32 1.0, %v1507
      %1516 = vset.pattern.permute.xlu0 0
      %1517 = vperm.xlu0 %1516, %v1514
      %v1518 = vpop.permute.xlu0 %1517
      %v1520 = vmul.f32 %v965, %v1518
      %v1521 = vadd.f32 %v1513, %v1520
      %v1522 = vmul.f32 %v1501, %v1511
      %v1523 = vmul.f32 %v966, %v1518
      %v1524 = vadd.f32 %v1522, %v1523
      %1525 = vst [vmem:[#allocation4] sm:$0x3] %v1521
      %1526 = vst [vmem:[#allocation5] sm:$0x3] %v1524
      %v1527 = vmul.f32 %v1521, %v1511
      %1528 = vst [vmem:[%s399] sm:$0x3] %v1527
      %p1529 = scmp.lt.s32.totalorder %s22, 31
      %s1530 = scalar_select %p1529, %s22, 31
      %s1531 = smul.addr %s1530, 2
      %s1532 = scalar_lea.vmem %s9, %s1531
      %s1533 = ssub.s32 31, %s22
      %p1534 = scmp.lt.s32.totalorder %s1533, 31
      %s1535 = scalar_select %p1534, %s1533, 31
      %s1536 = smul.addr %s1535, 2
      %s1537 = scalar_lea.vmem %s10, %s1536
      // Predicated region
      $region61: #{encoder_forward.7} parent=55 // pred_check
        %p1538 = pneg %p241
      $region62: #{encoder_forward.7} parent=55 // pred_check_branch
        %1540 = sbr.rel (%p1538) target = $region64
      $region63: #{encoder_forward.7} parent=55 // pred_region
        _
      $region64: #{encoder_forward.7} parent=55 // pred_fallthru
        _
      // Predicated region
      $region65: #{encoder_forward.7} parent=55 // pred_check
        %p1541 = pneg %p269
      $region66: #{encoder_forward.7} parent=55 // pred_check_branch
        %1543 = sbr.rel (%p1541) target = $region68
      $region67: #{encoder_forward.7} parent=55 // pred_region
        %s1544 = ssub.s32 31, %s22
      $region68: #{encoder_forward.7} parent=55 // pred_fallthru
        _
    $region56: #{encoder_forward.7} parent=5 // pred_fallthru
      _
    %p1545 = scmp.le.s32.totalorder 2, %s17
    // Predicated region
    $region69: #{encoder_forward.7} parent=5 // pred_check
      %p1546 = pneg %p1545
    $region70: #{encoder_forward.7} parent=5 // pred_check_branch
      %1548 = sbr.rel (%p1546) target = $region72
    $region71: #{encoder_forward.7} parent=5 // pred_region
      %s1549 = ssub.s32 %s17, 2
      // Predicated region
      $region73: #{encoder_forward.7} parent=71 // pred_check
        %p1550 = pneg %p247
      $region74: #{encoder_forward.7} parent=71 // pred_check_branch
        %1552 = sbr.rel (%p1550) target = $region76
      $region75: #{encoder_forward.7} parent=71 // pred_region
        %p1553 = scmp.lt.s32.totalorder %s23, 31
        %s1554 = scalar_select %p1553, %s23, 31
        %s1555 = smul.addr %s1554, 2
        %s1556 = scalar_lea.vmem %s9, %s1555
      $region76: #{encoder_forward.7} parent=71 // pred_fallthru
        _
      // Predicated region
      $region77: #{encoder_forward.7} parent=71 // pred_check
        %p1557 = pneg %p275
      $region78: #{encoder_forward.7} parent=71 // pred_check_branch
        %1559 = sbr.rel (%p1557) target = $region80
      $region79: #{encoder_forward.7} parent=71 // pred_region
        %s1560 = ssub.s32 31, %s23
        %p1561 = scmp.lt.s32.totalorder %s1560, 31
        %s1562 = scalar_select %p1561, %s1560, 31
        %s1563 = smul.addr %s1562, 2
        %s1564 = scalar_lea.vmem %s10, %s1563
      $region80: #{encoder_forward.7} parent=71 // pred_fallthru
        _
    $region72: #{encoder_forward.7} parent=5 // pred_fallthru
      _
  $region6: #{encoder_forward.7} parent=0 // loop_footer
    %s21 = sadd.s32 1, %s17
  $region7: #{encoder_forward.7} parent=0 // loop_footer_branch
    %16 = sbr.rel target = $region3
  $region8: #{encoder_forward.7} parent=0 // loop_exit
    _

</llo_original>
